<compile_context>
chip_gen: v7x
topology: tpu7x:2x2x1
jax: 0.10.0
libtpu: 0.0.40
codegen_flags: <defaults>
</compile_context>

<pallas_src>
import functools

import jax
import jax.numpy as jnp
from jax.experimental import pallas as pl
from jax.experimental.pallas import tpu as pltpu


def _round_up(x, m):
    return (x + m - 1) // m * m


def _pick_tq(q, dp, ck, n):
    """Pick the lane-dense Q tile: big, VMEM-bounded, >= 2 parallel grid steps."""
    qp128 = _round_up(q, 128)
    tq = min(qp128, 512)
    # VMEM bound (v7x has 64 MiB physical): the (dp*ck, tq) bf16 x slab is
    # double-buffered -> keep each buffer under ~12 MiB.
    while tq > 128 and dp * ck * tq * 2 > (12 << 20):
        tq -= 128
    nq = _round_up(q, tq) // tq
    # Megacore (v7x: 2 TensorCores/chip): ensure >= 2 parallel grid units.
    if n * nq < 2 and q > 128:
        tq = _round_up((q + 1) // 2, 128)
        nq = _round_up(q, tq) // tq
    return tq, tq * nq, nq


def _make_kernel(k, ck, do):
    kck = k * ck

    def kernel(x_ref, w_ref, o_ref):
        # x_ref: (Dp*CK, TQ)  bf16  folded input, rows ordered (dz, kh, kw, ci)
        # w_ref: (Cout, K*CK) bf16  folded weight, cols ordered (kd, kh, kw, ci)
        # o_ref: (Do, Cout, TQ)     full-depth output tile (lane-dense stores)
        w2d = w_ref[...]                                  # stationary, ~7 vregs
        for d0 in range(do):                              # static unroll over depth
            xs = x_ref[d0 * ck:d0 * ck + kck, :]          # sublane-aligned slice
            o_ref[d0] = jnp.dot(
                w2d, xs, preferred_element_type=jnp.float32).astype(o_ref.dtype)

    return kernel


def fold_weight(weight_oidhw, kernel_size):
    """OIDHW -> (Cout, Kd*Kh*Kw*Cin) bf16, (kd, kh, kw, ci) order. Call once."""
    k = kernel_size
    cout = weight_oidhw.shape[0]
    w2d = jnp.transpose(weight_oidhw, (0, 2, 3, 4, 1)).reshape(cout, -1)
    return w2d.astype(jnp.bfloat16)


def conv3d_full_pallas(x_ncdhw, w2d, kernel_size):
    """Equivalent of F.conv3d(x, weight, stride=1, padding=kernel_size-1)."""
    k = kernel_size
    p = k - 1
    n, cin, d, h, w = x_ncdhw.shape
    cout, kck = w2d.shape
    ck = k * k * cin
    assert kck == k * ck, "weight layout does not match input channels"

    do, ho, wo = d + p, h + p, w + p                 # output spatial dims
    dp = d + 2 * p                                   # padded depth extent
    q = ho * wo                                      # flattened output plane
    assert do + k - 1 == dp

    tq, qp, nq = _pick_tq(q, dp, ck, n)

    # ---- XLA glue: pad, fold (kh, kw) taps into channels, cast to bf16 ----
    # TODO(synk): 9x activation replication; move tap gather in-kernel at scale.
    xb = x_ncdhw.astype(jnp.bfloat16)
    x_pad = jnp.pad(xb, ((0, 0), (0, 0), (p, p), (p, p), (p, p)))
    taps = [x_pad[:, :, :, kh:kh + ho, kw:kw + wo]                 # (n,cin,dp,ho,wo)
            for kh in range(k) for kw in range(k)]
    xf = jnp.stack(taps, axis=1)                                   # (n,kk,cin,dp,ho,wo)
    xf = jnp.transpose(xf, (0, 3, 1, 2, 4, 5))                     # (n,dp,kk,cin,ho,wo)
    xf = xf.reshape(n, dp, ck, q)
    xf = jnp.pad(xf, ((0, 0), (0, 0), (0, 0), (0, qp - q)))        # lane padding
    xf = xf.reshape(n, dp * ck, qp)                                # rows: (dz,kh,kw,ci)

    x_blk = dp * ck * tq * 2
    w_blk = cout * kck * 2
    o_blk = do * cout * tq * 4
    vmem_limit = min(max(2 * (x_blk + w_blk + o_blk) + (8 << 20), 32 << 20), 64 << 20)

    kernel = _make_kernel(k, ck, do)
    out = pl.pallas_call(
        kernel,
        out_shape=jax.ShapeDtypeStruct((n, do, cout, qp), x_ncdhw.dtype),
        grid_spec=pltpu.PrefetchScalarGridSpec(
            num_scalar_prefetch=0,
            grid=(n, nq),
            in_specs=[
                pl.BlockSpec((None, dp * ck, tq), lambda b, qi: (b, 0, qi)),
                pl.BlockSpec((cout, kck), lambda b, qi: (0, 0)),
            ],
            out_specs=pl.BlockSpec((None, do, cout, tq),
                                   lambda b, qi: (b, 0, 0, qi)),
        ),
        compiler_params=pltpu.CompilerParams(
            dimension_semantics=("parallel", "parallel"),
            vmem_limit_bytes=vmem_limit),
    )(xf, w2d)

    # ---- XLA glue: drop Q padding, back to NCDHW (small output transpose) ----
    out = out[:, :, :, :q].reshape(n, do, cout, ho, wo)
    return jnp.transpose(out, (0, 2, 1, 3, 4))       # (N, Cout, Do, Ho, Wo)


if __name__ == "__main__":
    # Module constants: in_channels=32, out_channels=16, kernel_size=3.
    in_channels, out_channels, ksize = 32, 16, 3
    batch, D, H, W = 2, 4, 6, 8                      # small, asymmetric spatial dims

    key = jax.random.PRNGKey(0)
    kx, kwt = jax.random.split(key)
    x = jax.random.normal(kx, (batch, in_channels, D, H, W), jnp.float32)
    # Deterministic synthetic weight in conv3d OIDHW layout (the already
    # flipped/transposed parameter the module stores).  Module has bias=False.
    weight = jax.random.normal(
        kwt, (out_channels, in_channels, ksize, ksize, ksize), jnp.float32) * 0.05

    # One-time weight relayout (hoisted out of the per-call jit).
    w2d = jax.block_until_ready(fold_weight(weight, ksize))

    conv = jax.jit(functools.partial(conv3d_full_pallas, kernel_size=ksize))
    out = jax.block_until_ready(conv(x, w2d))

    # Reference: same bf16-rounded operands, exact f32 conv (isolates kernel
    # error from the deliberate bf16 operand cast).
    xr = x.astype(jnp.bfloat16).astype(jnp.float32)
    wr = weight.astype(jnp.bfloat16).astype(jnp.float32)
    ref = jax.lax.conv_general_dilated(
        xr, wr, window_strides=(1, 1, 1),
        padding=[(ksize - 1, ksize - 1)] * 3,
        dimension_numbers=("NCDHW", "OIDHW", "NCDHW"),
        precision=jax.lax.Precision.HIGHEST)

    assert out.shape == (batch, out_channels,
                         D + ksize - 1, H + ksize - 1, W + ksize - 1)
    err = jnp.max(jnp.abs(out - ref))
    assert jnp.allclose(out, ref, atol=2e-3, rtol=2e-3), f"max err {err}"

    print("KERNEL_OK")
</pallas_src>

<mosaic_0001>
module attributes {stable_mosaic.version = 11 : i64} {
  func.func @kernel(%arg0: i32, %arg1: i32, %arg2: memref<1x2304x128xbf16, #tpu.memory_space<vmem>>, %arg3: memref<16x864xbf16, #tpu.memory_space<vmem>>, %arg4: memref<1x6x16x128xf32, #tpu.memory_space<vmem>>) attributes {dimension_semantics = [#tpu.dimension_semantics<parallel>, #tpu.dimension_semantics<parallel>], iteration_bounds = array<i64: 2, 1>, scalar_prefetch = 0 : i64, scratch_operands = 0 : i64, tpu.core_type = #tpu.core_type<tc>, window_params = [{transform_indices = @transform_0, window_bounds = array<i64: 1, 2304, 128>}, {pipeline_mode = #tpu.pipeline_mode<synchronous>, transform_indices = @transform_1, window_bounds = array<i64: 16, 864>}, {transform_indices = @transform_2, window_bounds = array<i64: 1, 6, 16, 128>}]} {
    %c0 = arith.constant 0 : index
    %c0_0 = arith.constant 0 : index
    %0 = vector.load %arg3[%c0, %c0_0] : memref<16x864xbf16, #tpu.memory_space<vmem>>, vector<16x864xbf16>
    %c0_1 = arith.constant 0 : index
    %c0_2 = arith.constant 0 : index
    %c0_3 = arith.constant 0 : index
    %1 = vector.load %arg2[%c0_1, %c0_2, %c0_3] : memref<1x2304x128xbf16, #tpu.memory_space<vmem>>, vector<1x864x128xbf16>
    %2 = vector.shape_cast %1 : vector<1x864x128xbf16> to vector<864x128xbf16>
    %cst = arith.constant dense<0.000000e+00> : vector<16x128xf32>
    %3 = tpu.matmul %0, %2, %cst {dimension_numbers = #tpu.dot_dimension_numbers<[1], [0], [0], [1], [0, 0, 1, 1], [], []>} : vector<16x864xbf16>, vector<864x128xbf16>, vector<16x128xf32> -> vector<16x128xf32>
    %c0_4 = arith.constant 0 : index
    %c0_5 = arith.constant 0 : index
    %c0_6 = arith.constant 0 : index
    %c0_7 = arith.constant 0 : index
    %4 = vector.load %arg4[%c0_4, %c0_5, %c0_6, %c0_7] : memref<1x6x16x128xf32, #tpu.memory_space<vmem>>, vector<1x1x16x128xf32>
    %5 = vector.shape_cast %4 : vector<1x1x16x128xf32> to vector<16x128xf32>
    %6 = vector.shape_cast %3 : vector<16x128xf32> to vector<1x1x16x128xf32>
    tpu.vector_store %arg4[%c0_4, %c0_5, %c0_6, %c0_7], %6 {strides = array<i32>} : memref<1x6x16x128xf32, #tpu.memory_space<vmem>>, vector<1x1x16x128xf32>,
    %c0_8 = arith.constant 0 : index
    %c288 = arith.constant 288 : index
    %c0_9 = arith.constant 0 : index
    %7 = vector.load %arg2[%c0_8, %c288, %c0_9] : memref<1x2304x128xbf16, #tpu.memory_space<vmem>>, vector<1x864x128xbf16>
    %8 = vector.shape_cast %7 : vector<1x864x128xbf16> to vector<864x128xbf16>
    %cst_10 = arith.constant dense<0.000000e+00> : vector<16x128xf32>
    %9 = tpu.matmul %0, %8, %cst_10 {dimension_numbers = #tpu.dot_dimension_numbers<[1], [0], [0], [1], [0, 0, 1, 1], [], []>} : vector<16x864xbf16>, vector<864x128xbf16>, vector<16x128xf32> -> vector<16x128xf32>
    %c0_11 = arith.constant 0 : index
    %c1 = arith.constant 1 : index
    %c0_12 = arith.constant 0 : index
    %c0_13 = arith.constant 0 : index
    %10 = vector.load %arg4[%c0_11, %c1, %c0_12, %c0_13] : memref<1x6x16x128xf32, #tpu.memory_space<vmem>>, vector<1x1x16x128xf32>
    %11 = vector.shape_cast %10 : vector<1x1x16x128xf32> to vector<16x128xf32>
    %12 = vector.shape_cast %9 : vector<16x128xf32> to vector<1x1x16x128xf32>
    tpu.vector_store %arg4[%c0_11, %c1, %c0_12, %c0_13], %12 {strides = array<i32>} : memref<1x6x16x128xf32, #tpu.memory_space<vmem>>, vector<1x1x16x128xf32>,
    %c0_14 = arith.constant 0 : index
    %c576 = arith.constant 576 : index
    %c0_15 = arith.constant 0 : index
    %13 = vector.load %arg2[%c0_14, %c576, %c0_15] : memref<1x2304x128xbf16, #tpu.memory_space<vmem>>, vector<1x864x128xbf16>
    %14 = vector.shape_cast %13 : vector<1x864x128xbf16> to vector<864x128xbf16>
    %cst_16 = arith.constant dense<0.000000e+00> : vector<16x128xf32>
    %15 = tpu.matmul %0, %14, %cst_16 {dimension_numbers = #tpu.dot_dimension_numbers<[1], [0], [0], [1], [0, 0, 1, 1], [], []>} : vector<16x864xbf16>, vector<864x128xbf16>, vector<16x128xf32> -> vector<16x128xf32>
    %c0_17 = arith.constant 0 : index
    %c2 = arith.constant 2 : index
    %c0_18 = arith.constant 0 : index
    %c0_19 = arith.constant 0 : index
    %16 = vector.load %arg4[%c0_17, %c2, %c0_18, %c0_19] : memref<1x6x16x128xf32, #tpu.memory_space<vmem>>, vector<1x1x16x128xf32>
    %17 = vector.shape_cast %16 : vector<1x1x16x128xf32> to vector<16x128xf32>
    %18 = vector.shape_cast %15 : vector<16x128xf32> to vector<1x1x16x128xf32>
    tpu.vector_store %arg4[%c0_17, %c2, %c0_18, %c0_19], %18 {strides = array<i32>} : memref<1x6x16x128xf32, #tpu.memory_space<vmem>>, vector<1x1x16x128xf32>,
    %c0_20 = arith.constant 0 : index
    %c864 = arith.constant 864 : index
    %c0_21 = arith.constant 0 : index
    %19 = vector.load %arg2[%c0_20, %c864, %c0_21] : memref<1x2304x128xbf16, #tpu.memory_space<vmem>>, vector<1x864x128xbf16>
    %20 = vector.shape_cast %19 : vector<1x864x128xbf16> to vector<864x128xbf16>
    %cst_22 = arith.constant dense<0.000000e+00> : vector<16x128xf32>
    %21 = tpu.matmul %0, %20, %cst_22 {dimension_numbers = #tpu.dot_dimension_numbers<[1], [0], [0], [1], [0, 0, 1, 1], [], []>} : vector<16x864xbf16>, vector<864x128xbf16>, vector<16x128xf32> -> vector<16x128xf32>
    %c0_23 = arith.constant 0 : index
    %c3 = arith.constant 3 : index
    %c0_24 = arith.constant 0 : index
    %c0_25 = arith.constant 0 : index
    %22 = vector.load %arg4[%c0_23, %c3, %c0_24, %c0_25] : memref<1x6x16x128xf32, #tpu.memory_space<vmem>>, vector<1x1x16x128xf32>
    %23 = vector.shape_cast %22 : vector<1x1x16x128xf32> to vector<16x128xf32>
    %24 = vector.shape_cast %21 : vector<16x128xf32> to vector<1x1x16x128xf32>
    tpu.vector_store %arg4[%c0_23, %c3, %c0_24, %c0_25], %24 {strides = array<i32>} : memref<1x6x16x128xf32, #tpu.memory_space<vmem>>, vector<1x1x16x128xf32>,
    %c0_26 = arith.constant 0 : index
    %c1152 = arith.constant 1152 : index
    %c0_27 = arith.constant 0 : index
    %25 = vector.load %arg2[%c0_26, %c1152, %c0_27] : memref<1x2304x128xbf16, #tpu.memory_space<vmem>>, vector<1x864x128xbf16>
    %26 = vector.shape_cast %25 : vector<1x864x128xbf16> to vector<864x128xbf16>
    %cst_28 = arith.constant dense<0.000000e+00> : vector<16x128xf32>
    %27 = tpu.matmul %0, %26, %cst_28 {dimension_numbers = #tpu.dot_dimension_numbers<[1], [0], [0], [1], [0, 0, 1, 1], [], []>} : vector<16x864xbf16>, vector<864x128xbf16>, vector<16x128xf32> -> vector<16x128xf32>
    %c0_29 = arith.constant 0 : index
    %c4 = arith.constant 4 : index
    %c0_30 = arith.constant 0 : index
    %c0_31 = arith.constant 0 : index
    %28 = vector.load %arg4[%c0_29, %c4, %c0_30, %c0_31] : memref<1x6x16x128xf32, #tpu.memory_space<vmem>>, vector<1x1x16x128xf32>
    %29 = vector.shape_cast %28 : vector<1x1x16x128xf32> to vector<16x128xf32>
    %30 = vector.shape_cast %27 : vector<16x128xf32> to vector<1x1x16x128xf32>
    tpu.vector_store %arg4[%c0_29, %c4, %c0_30, %c0_31], %30 {strides = array<i32>} : memref<1x6x16x128xf32, #tpu.memory_space<vmem>>, vector<1x1x16x128xf32>,
    %c0_32 = arith.constant 0 : index
    %c1440 = arith.constant 1440 : index
    %c0_33 = arith.constant 0 : index
    %31 = vector.load %arg2[%c0_32, %c1440, %c0_33] : memref<1x2304x128xbf16, #tpu.memory_space<vmem>>, vector<1x864x128xbf16>
    %32 = vector.shape_cast %31 : vector<1x864x128xbf16> to vector<864x128xbf16>
    %cst_34 = arith.constant dense<0.000000e+00> : vector<16x128xf32>
    %33 = tpu.matmul %0, %32, %cst_34 {dimension_numbers = #tpu.dot_dimension_numbers<[1], [0], [0], [1], [0, 0, 1, 1], [], []>} : vector<16x864xbf16>, vector<864x128xbf16>, vector<16x128xf32> -> vector<16x128xf32>
    %c0_35 = arith.constant 0 : index
    %c5 = arith.constant 5 : index
    %c0_36 = arith.constant 0 : index
    %c0_37 = arith.constant 0 : index
    %34 = vector.load %arg4[%c0_35, %c5, %c0_36, %c0_37] : memref<1x6x16x128xf32, #tpu.memory_space<vmem>>, vector<1x1x16x128xf32>
    %35 = vector.shape_cast %34 : vector<1x1x16x128xf32> to vector<16x128xf32>
    %36 = vector.shape_cast %33 : vector<16x128xf32> to vector<1x1x16x128xf32>
    tpu.vector_store %arg4[%c0_35, %c5, %c0_36, %c0_37], %36 {strides = array<i32>} : memref<1x6x16x128xf32, #tpu.memory_space<vmem>>, vector<1x1x16x128xf32>,
    return
  }
  func.func @transform_0(%arg0: i32, %arg1: i32) -> (i32, i32, i32) {
    %c0_i32 = arith.constant 0 : i32
    %c0_i32_0 = arith.constant 0 : i32
    return %arg0, %c0_i32, %arg1 : i32, i32, i32
  }
  func.func @transform_1(%arg0: i32, %arg1: i32) -> (i32, i32) {
    %c0_i32 = arith.constant 0 : i32
    %c0_i32_0 = arith.constant 0 : i32
    %c0_i32_1 = arith.constant 0 : i32
    return %c0_i32, %c0_i32_0 : i32, i32
  }
  func.func @transform_2(%arg0: i32, %arg1: i32) -> (i32, i32, i32, i32) {
    %c0_i32 = arith.constant 0 : i32
    %c0_i32_0 = arith.constant 0 : i32
    %c0_i32_1 = arith.constant 0 : i32
    return %arg0, %c0_i32, %c0_i32_0, %arg1 : i32, i32, i32, i32
  }
}

</mosaic_0001>

<llo_original>
// kernel: conv3d_full_pallas.1
$region0: #{conv3d_full_pallas.1}
  #allocation0 [shape = 'u32[]', space=smem, size = 0x4, offset = 0x4, fixed_abs, tag = 'smem constant byte address 0x4 - core index']
  #allocation1 [shape = 'u32[144,128]{1,0:T(1,128)}', space=vmem, size = 0x12000, scoped, tag = 'internal scratch']
  %s0 = inlined_call_operand.vmem [shape: bf16[2,2304,128], index: 0, kind: input, shape index: {}]
  %s1 = inlined_call_operand.vmem [shape: bf16[16,864], index: 1, kind: input, shape index: {}]
  %s2 = inlined_call_operand.vmem [shape: f32[2,6,16,128], index: 2, kind: output, shape index: {}]
  %s3 = sld [smem:[#allocation0]]
  $region41: #{conv3d_full_pallas.1} parent=0
    _
  %s5 = ssub.s32 1, %s3
  %s6 = scalar_select 0, %s5, %s3
  loop: start=0, step=1, limit=4
  $region2: #{conv3d_full_pallas.1} parent=0 // loop_pre_header
    _
  $region3: #{conv3d_full_pallas.1} parent=0 // loop_header
    %s8 = sphi 0, %s12
    %p9 = scmp.ge.s32.totalorder %s8, 4
    %s15 = sphi 0, %s27
    %s16 = sphi 0, %s23
    %s17 = sphi 0, %s15
    %s18 = sphi 0, %s16
    %s19 = sphi 0, %s17
    %s20 = sphi 0, %s18
    %s32 = sphi 0, %s34
    %s35 = sphi 0, %s32
    %s36 = sphi 0, %s35
    %s52 = sphi 0, %s36
    %s56 = sphi 0, %s56
    %s58 = sphi 0, %s56
    %s59 = sphi 0, %s58
    %s73 = sphi 0, %s59
    %s81 = sphi 0, %s83
    %s84 = sphi 0, %s81
    %s85 = sphi 0, %s84
    %s101 = sphi 0, %s85
  $region4: #{conv3d_full_pallas.1} parent=0 // loop_header_branch
    %11 = sbr.rel (%p9) target = $region8
  $region5: #{conv3d_full_pallas.1} parent=0 // loop_body
    %s13 = ssub.s32 %s8, 1
    %s14 = ssub.s32 %s8, 2
    %s21 = sadd.s32 1, %s16
    %p22 = scmp.ge.s32.totalorder %s21, 1
    %s23 = scalar_select %p22, 0, %s21
    %s24 = sadd.s32 1, %s15
    %s25 = scalar_select %p22, %s24, %s15
    %p26 = scmp.ge.s32.totalorder %s25, 2
    %s27 = scalar_select %p26, 0, %s25
    %s28 = ssub.s32 %s15, %s27
    %s29 = ssub.s32 %s16, %s23
    %s30 = sor.u32 %s28, %s29
    %p31 = scmp.eq.s32.totalorder %s30, 0
    %s33 = sadd.s32 %s32, 1
    %s34 = scalar_select %p31, %s32, %s33
    %p37 = pneg %p31
    %p38 = scmp.eq.s32.totalorder %s8, 1
    %p39 = por %p37, %p38
    %p40 = scmp.ne.s32.totalorder %s32, %s35
    %p41 = scmp.eq.s32.totalorder %s8, 0
    %p42 = por %p40, %p41
    %p43 = scmp.ne.s32.totalorder %s32, %s35
    %p44 = scmp.eq.s32.totalorder %s13, 1
    %p45 = por %p43, %p44
    %p46 = scmp.ne.s32.totalorder %s35, %s36
    %p47 = scmp.eq.s32.totalorder %s13, 0
    %p48 = por %p46, %p47
    %p49 = scmp.ne.s32.totalorder %s35, %s36
    %p50 = scmp.eq.s32.totalorder %s14, 1
    %p51 = por %p49, %p50
    %p53 = scmp.ne.s32.totalorder %s36, %s52
    %p54 = scmp.eq.s32.totalorder %s14, 0
    %p55 = por %p53, %p54
    %s57 = sadd.s32 %s56, 1
    %p60 = scmp.eq.s32.totalorder %s8, 1
    %p61 = scmp.ne.s32.totalorder %s56, %s58
    %p62 = scmp.eq.s32.totalorder %s8, 0
    %p63 = por %p61, %p62
    %p64 = scmp.ne.s32.totalorder %s56, %s58
    %p65 = scmp.eq.s32.totalorder %s13, 1
    %p66 = por %p64, %p65
    %p67 = scmp.ne.s32.totalorder %s58, %s59
    %p68 = scmp.eq.s32.totalorder %s13, 0
    %p69 = por %p67, %p68
    %p70 = scmp.ne.s32.totalorder %s58, %s59
    %p71 = scmp.eq.s32.totalorder %s14, 1
    %p72 = por %p70, %p71
    %p74 = scmp.ne.s32.totalorder %s59, %s73
    %p75 = scmp.eq.s32.totalorder %s14, 0
    %p76 = por %p74, %p75
    %s77 = ssub.s32 %s15, %s27
    %s78 = ssub.s32 %s16, %s23
    %s79 = sor.u32 %s77, %s78
    %p80 = scmp.eq.s32.totalorder %s79, 0
    %s82 = sadd.s32 %s81, 1
    %s83 = scalar_select %p80, %s81, %s82
    %p86 = pneg %p80
    %p87 = scmp.eq.s32.totalorder %s8, 1
    %p88 = por %p86, %p87
    %p89 = scmp.ne.s32.totalorder %s81, %s84
    %p90 = scmp.eq.s32.totalorder %s8, 0
    %p91 = por %p89, %p90
    %p92 = scmp.ne.s32.totalorder %s81, %s84
    %p93 = scmp.eq.s32.totalorder %s13, 1
    %p94 = por %p92, %p93
    %p95 = scmp.ne.s32.totalorder %s84, %s85
    %p96 = scmp.eq.s32.totalorder %s13, 0
    %p97 = por %p95, %p96
    %p98 = scmp.ne.s32.totalorder %s84, %s85
    %p99 = scmp.eq.s32.totalorder %s14, 1
    %p100 = por %p98, %p99
    %p102 = scmp.ne.s32.totalorder %s85, %s101
    %p103 = scmp.eq.s32.totalorder %s14, 0
    %p104 = por %p102, %p103
    %p105 = scmp.le.s32.totalorder 1, %s8
    %p106 = scmp.lt.s32.totalorder %s8, 3
    %p107 = pnand %p105, %p106
    %p108 = pneg %p107
    // Predicated region
    $region9: #{conv3d_full_pallas.1} parent=5 // pred_check
      _
    $region10: #{conv3d_full_pallas.1} parent=5 // pred_check_branch
      %110 = sbr.rel (%p107) target = $region12
    $region11: #{conv3d_full_pallas.1} parent=5 // pred_region
      %s111 = ssub.s32 %s8, 1
      // Predicated region
      $region13: #{conv3d_full_pallas.1} parent=11 // pred_check
        %p112 = pneg %p69
      $region14: #{conv3d_full_pallas.1} parent=11 // pred_check_branch
        %114 = sbr.rel (%p112) target = $region16
      $region15: #{conv3d_full_pallas.1} parent=11 // pred_region
        _
      $region16: #{conv3d_full_pallas.1} parent=11 // pred_fallthru
        _
    $region12: #{conv3d_full_pallas.1} parent=5 // pred_fallthru
      _
    %p115 = scmp.lt.s32.totalorder %s8, 2
    // Predicated region
    $region17: #{conv3d_full_pallas.1} parent=5 // pred_check
      %p116 = pneg %p115
    $region18: #{conv3d_full_pallas.1} parent=5 // pred_check_branch
      %118 = sbr.rel (%p116) target = $region20
    $region19: #{conv3d_full_pallas.1} parent=5 // pred_region
      // Predicated region
      $region21: #{conv3d_full_pallas.1} parent=19 // pred_check
        %p119 = pneg %p42
      $region22: #{conv3d_full_pallas.1} parent=19 // pred_check_branch
        %121 = sbr.rel (%p119) target = $region24
      $region23: #{conv3d_full_pallas.1} parent=19 // pred_region
        %p122 = scmp.lt.s32.totalorder %s15, 1
        %s123 = scalar_select %p122, %s15, 1
        %p124 = scmp.lt.s32.totalorder %s16, 0
        %s125 = scalar_select %p124, %s16, 0
        %s126 = smul.addr %s123, 288
        %s127 = sadd.s32 %s125, %s126
        %s128 = smul.addr %s127, 4
        %s129 = scalar_lea.vmem %s0, %s128
      $region24: #{conv3d_full_pallas.1} parent=19 // pred_fallthru
        _
    $region20: #{conv3d_full_pallas.1} parent=5 // pred_fallthru
      _
    %p130 = scmp.le.s32.totalorder 1, %s8
    %p131 = scmp.lt.s32.totalorder %s8, 3
    %p132 = pnand %p130, %p131
    %p133 = pneg %p132
    // Predicated region
    $region25: #{conv3d_full_pallas.1} parent=5 // pred_check
      _
    $region26: #{conv3d_full_pallas.1} parent=5 // pred_check_branch
      %135 = sbr.rel (%p132) target = $region28
    $region27: #{conv3d_full_pallas.1} parent=5 // pred_region
      %s136 = ssub.s32 %s8, 1
      %p137 = scmp.lt.s32.totalorder %s17, 1
      %s138 = scalar_select %p137, %s17, 1
      %p139 = scmp.lt.s32.totalorder %s18, 0
      %s140 = scalar_select %p139, %s18, 0
      %s141 = smul.addr %s138, 288
      %s142 = sadd.s32 %s140, %s141
      %s143 = smul.addr %s142, 4
      %s144 = scalar_lea.vmem %s0, %s143
      %p145 = pneg %p48
      %p146 = pneg %p45
      %p147 = pneg %p69
      %p148 = pneg %p66
      %p149 = pneg %p97
      %p150 = pneg %p94
      %p151 = scmp.lt.s32.totalorder %s17, 1
      %s152 = scalar_select %p151, %s17, 1
      %p153 = scmp.lt.s32.totalorder %s18, 0
      %s154 = scalar_select %p153, %s18, 0
      %s155 = smul.addr %s152, 12
      %s156 = sadd.s32 %s154, %s155
      %s157 = smul.addr %s156, 8
      %s158 = scalar_lea.vmem %s2, %s157
      %p159 = scmp.lt.s32.totalorder %s17, 1
      %s160 = scalar_select %p159, %s17, 1
      %p161 = scmp.lt.s32.totalorder %s18, 0
      %s162 = scalar_select %p161, %s18, 0
      %s163 = smul.addr %s160, 288
      %s164 = sadd.s32 %s162, %s163
      %s165 = smul.addr %s164, 4
      %s166 = scalar_lea.vmem %s0, %s165
      %p167 = scmp.lt.s32.totalorder %s17, 1
      %s168 = scalar_select %p167, %s17, 1
      %p169 = scmp.lt.s32.totalorder %s18, 0
      %s170 = scalar_select %p169, %s18, 0
      %s171 = smul.addr %s168, 12
      %s172 = sadd.s32 %s170, %s171
      %s173 = smul.addr %s172, 8
      %s174 = scalar_lea.vmem %s2, %s173
      %v176 = vld [vmem:[%s1] sm:$0xff]
      %v177 = vld [vmem:[%s1 + $0x8] sm:$0xff]
      %v178 = vld [vmem:[%s1 + $0x10] sm:$0xff]
      %v179 = vld [vmem:[%s1 + $0x18] sm:$0xf]
      %v180 = vld [vmem:[%s1 + $0x1c] sm:$0xff]
      %v181 = vld [vmem:[%s1 + $0x24] sm:$0xff]
      %v182 = vld [vmem:[%s1 + $0x2c] sm:$0xff]
      %v183 = vld [vmem:[%s1 + $0x34] sm:$0xf]
      %v184 = vld [vmem:[%s166] sm:$0xf]
      %v185 = vld [vmem:[%s166 + $0x4] sm:$0xf]
      %v186 = vld [vmem:[%s166 + $0x8] sm:$0xf]
      %v187 = vld [vmem:[%s166 + $0xc] sm:$0xf]
      %v188 = vld [vmem:[%s166 + $0x10] sm:$0xf]
      %v189 = vld [vmem:[%s166 + $0x14] sm:$0xf]
      %v190 = vld [vmem:[%s166 + $0x18] sm:$0xf]
      %v191 = vld [vmem:[%s166 + $0x1c] sm:$0xf]
      %v192 = vld [vmem:[%s166 + $0x20] sm:$0xf]
      %v193 = vld [vmem:[%s166 + $0x24] sm:$0xf]
      %v194 = vld [vmem:[%s166 + $0x28] sm:$0xf]
      %v195 = vld [vmem:[%s166 + $0x2c] sm:$0xf]
      %v196 = vld [vmem:[%s166 + $0x30] sm:$0xf]
      %v197 = vld [vmem:[%s166 + $0x34] sm:$0xf]
      %v198 = vld [vmem:[%s166 + $0x38] sm:$0xf]
      %v199 = vld [vmem:[%s166 + $0x3c] sm:$0xf]
      %v200 = vld [vmem:[%s166 + $0x40] sm:$0xf]
      %v201 = vld [vmem:[%s166 + $0x44] sm:$0xf]
      %v202 = vld [vmem:[%s166 + $0x48] sm:$0xf]
      %v203 = vld [vmem:[%s166 + $0x4c] sm:$0xf]
      %v204 = vld [vmem:[%s166 + $0x50] sm:$0xf]
      %v205 = vld [vmem:[%s166 + $0x54] sm:$0xf]
      %v206 = vld [vmem:[%s166 + $0x58] sm:$0xf]
      %v207 = vld [vmem:[%s166 + $0x5c] sm:$0xf]
      %v208 = vld [vmem:[%s166 + $0x60] sm:$0xf]
      %v209 = vld [vmem:[%s166 + $0x64] sm:$0xf]
      %v210 = vld [vmem:[%s166 + $0x68] sm:$0xf]
      %v211 = vld [vmem:[%s166 + $0x6c] sm:$0xf]
      %v212 = vld [vmem:[%s166 + $0x70] sm:$0xf]
      %v213 = vld [vmem:[%s166 + $0x74] sm:$0xf]
      %v214 = vld [vmem:[%s166 + $0x78] sm:$0xf]
      %v215 = vld [vmem:[%s166 + $0x7c] sm:$0xf]
      %v216 = vld [vmem:[%s166 + $0x80] sm:$0xf]
      %v217 = vld [vmem:[%s166 + $0x84] sm:$0xf]
      %v218 = vld [vmem:[%s166 + $0x88] sm:$0xf]
      %v219 = vld [vmem:[%s166 + $0x8c] sm:$0xf]
      %v220 = vld [vmem:[%s166 + $0x90] sm:$0xf]
      %v221 = vld [vmem:[%s166 + $0x94] sm:$0xf]
      %v222 = vld [vmem:[%s166 + $0x98] sm:$0xf]
      %v223 = vld [vmem:[%s166 + $0x9c] sm:$0xf]
      %v224 = vld [vmem:[%s166 + $0xa0] sm:$0xf]
      %v225 = vld [vmem:[%s166 + $0xa4] sm:$0xf]
      %v226 = vld [vmem:[%s166 + $0xa8] sm:$0xf]
      %v227 = vld [vmem:[%s166 + $0xac] sm:$0xf]
      %v228 = vld [vmem:[%s166 + $0xb0] sm:$0xf]
      %v229 = vld [vmem:[%s166 + $0xb4] sm:$0xf]
      %v230 = vld [vmem:[%s166 + $0xb8] sm:$0xf]
      %v231 = vld [vmem:[%s166 + $0xbc] sm:$0xf]
      %v232 = vld [vmem:[%s166 + $0xc0] sm:$0xf]
      %v233 = vld [vmem:[%s166 + $0xc4] sm:$0xf]
      %v234 = vld [vmem:[%s166 + $0xc8] sm:$0xf]
      %v235 = vld [vmem:[%s166 + $0xcc] sm:$0xf]
      %v236 = vld [vmem:[%s166 + $0xd0] sm:$0xf]
      %v237 = vld [vmem:[%s166 + $0xd4] sm:$0xf]
      %v238 = vld [vmem:[%s166 + $0xd8] sm:$0xf]
      %v239 = vld [vmem:[%s166 + $0xdc] sm:$0xf]
      %v240 = vld [vmem:[%s166 + $0xe0] sm:$0xf]
      %v241 = vld [vmem:[%s166 + $0xe4] sm:$0xf]
      %v242 = vld [vmem:[%s166 + $0xe8] sm:$0xf]
      %v243 = vld [vmem:[%s166 + $0xec] sm:$0xf]
      %v244 = vld [vmem:[%s166 + $0xf0] sm:$0xf]
      %v245 = vld [vmem:[%s166 + $0xf4] sm:$0xf]
      %v246 = vld [vmem:[%s166 + $0xf8] sm:$0xf]
      %v247 = vld [vmem:[%s166 + $0xfc] sm:$0xf]
      %v248 = vld [vmem:[%s166 + $0x100] sm:$0xf]
      %v249 = vld [vmem:[%s166 + $0x104] sm:$0xf]
      %v250 = vld [vmem:[%s166 + $0x108] sm:$0xf]
      %v251 = vld [vmem:[%s166 + $0x10c] sm:$0xf]
      %v252 = vld [vmem:[%s166 + $0x110] sm:$0xf]
      %v253 = vld [vmem:[%s166 + $0x114] sm:$0xf]
      %v254 = vld [vmem:[%s166 + $0x118] sm:$0xf]
      %v255 = vld [vmem:[%s166 + $0x11c] sm:$0xf]
      %v256 = vld [vmem:[%s166 + $0x120] sm:$0xf]
      %v257 = vld [vmem:[%s166 + $0x124] sm:$0xf]
      %v258 = vld [vmem:[%s166 + $0x128] sm:$0xf]
      %v259 = vld [vmem:[%s166 + $0x12c] sm:$0xf]
      %v260 = vld [vmem:[%s166 + $0x130] sm:$0xf]
      %v261 = vld [vmem:[%s166 + $0x134] sm:$0xf]
      %v262 = vld [vmem:[%s166 + $0x138] sm:$0xf]
      %v263 = vld [vmem:[%s166 + $0x13c] sm:$0xf]
      %v264 = vld [vmem:[%s166 + $0x140] sm:$0xf]
      %v265 = vld [vmem:[%s166 + $0x144] sm:$0xf]
      %v266 = vld [vmem:[%s166 + $0x148] sm:$0xf]
      %v267 = vld [vmem:[%s166 + $0x14c] sm:$0xf]
      %v268 = vld [vmem:[%s166 + $0x150] sm:$0xf]
      %v269 = vld [vmem:[%s166 + $0x154] sm:$0xf]
      %v270 = vld [vmem:[%s166 + $0x158] sm:$0xf]
      %v271 = vld [vmem:[%s166 + $0x15c] sm:$0xf]
      %v272 = vld [vmem:[%s166 + $0x160] sm:$0xf]
      %v273 = vld [vmem:[%s166 + $0x164] sm:$0xf]
      %v274 = vld [vmem:[%s166 + $0x168] sm:$0xf]
      %v275 = vld [vmem:[%s166 + $0x16c] sm:$0xf]
      %v276 = vld [vmem:[%s166 + $0x170] sm:$0xf]
      %v277 = vld [vmem:[%s166 + $0x174] sm:$0xf]
      %v278 = vld [vmem:[%s166 + $0x178] sm:$0xf]
      %v279 = vld [vmem:[%s166 + $0x17c] sm:$0xf]
      %v280 = vld [vmem:[%s166 + $0x180] sm:$0xf]
      %v281 = vld [vmem:[%s166 + $0x184] sm:$0xf]
      %v282 = vld [vmem:[%s166 + $0x188] sm:$0xf]
      %v283 = vld [vmem:[%s166 + $0x18c] sm:$0xf]
      %v284 = vld [vmem:[%s166 + $0x190] sm:$0xf]
      %v285 = vld [vmem:[%s166 + $0x194] sm:$0xf]
      %v286 = vld [vmem:[%s166 + $0x198] sm:$0xf]
      %v287 = vld [vmem:[%s166 + $0x19c] sm:$0xf]
      %v288 = vld [vmem:[%s166 + $0x1a0] sm:$0xf]
      %v289 = vld [vmem:[%s166 + $0x1a4] sm:$0xf]
      %v290 = vld [vmem:[%s166 + $0x1a8] sm:$0xf]
      %v291 = vld [vmem:[%s166 + $0x1ac] sm:$0xf]
      %v300 = vunpack.c.l.b16 %v176
      %v301 = vunpack.c.h.b16 %v176
      %v302 = vunpack.c.l.b16 %v177
      %v303 = vunpack.c.h.b16 %v177
      %v304 = vunpack.c.l.b16 %v178
      %v305 = vunpack.c.h.b16 %v178
      %v306 = vunpack.c.l.b16 %v179
      %v307 = vunpack.c.l.b16 %v180
      %v308 = vunpack.c.h.b16 %v180
      %v309 = vunpack.c.l.b16 %v181
      %v310 = vunpack.c.h.b16 %v181
      %v311 = vunpack.c.l.b16 %v182
      %v312 = vunpack.c.h.b16 %v182
      %v313 = vunpack.c.l.b16 %v183
      %v314 = vpack.c.b16 %v307, %v300
      %v315 = vpack.c.b16 %v308, %v301
      %v316 = vpack.c.b16 %v309, %v302
      %v317 = vpack.c.b16 %v310, %v303
      %v318 = vpack.c.b16 %v311, %v304
      %v319 = vpack.c.b16 %v312, %v305
      %v320 = vpack.c.b16 %v313, %v306
      %v435 = vunpack.c.l.b16 %v184
      %v436 = vunpack.c.l.b16 %v185
      %v437 = vunpack.c.l.b16 %v186
      %v438 = vunpack.c.l.b16 %v187
      %v439 = vunpack.c.l.b16 %v188
      %v440 = vunpack.c.l.b16 %v189
      %v441 = vunpack.c.l.b16 %v190
      %v442 = vunpack.c.l.b16 %v191
      %v443 = vunpack.c.l.b16 %v192
      %v444 = vunpack.c.l.b16 %v193
      %v445 = vunpack.c.l.b16 %v194
      %v446 = vunpack.c.l.b16 %v195
      %v447 = vunpack.c.l.b16 %v196
      %v448 = vunpack.c.l.b16 %v197
      %v449 = vunpack.c.l.b16 %v198
      %v450 = vunpack.c.l.b16 %v199
      %v451 = vunpack.c.l.b16 %v200
      %v452 = vunpack.c.l.b16 %v201
      %v453 = vunpack.c.l.b16 %v202
      %v454 = vunpack.c.l.b16 %v203
      %v455 = vunpack.c.l.b16 %v204
      %v456 = vunpack.c.l.b16 %v205
      %v457 = vunpack.c.l.b16 %v206
      %v458 = vunpack.c.l.b16 %v207
      %v459 = vunpack.c.l.b16 %v208
      %v460 = vunpack.c.l.b16 %v209
      %v461 = vunpack.c.l.b16 %v210
      %v462 = vunpack.c.l.b16 %v211
      %v463 = vunpack.c.l.b16 %v212
      %v464 = vunpack.c.l.b16 %v213
      %v465 = vunpack.c.l.b16 %v214
      %v466 = vunpack.c.l.b16 %v215
      %v467 = vunpack.c.l.b16 %v216
      %v468 = vunpack.c.l.b16 %v217
      %v469 = vunpack.c.l.b16 %v218
      %v470 = vunpack.c.l.b16 %v219
      %v471 = vunpack.c.l.b16 %v220
      %v472 = vunpack.c.l.b16 %v221
      %v473 = vunpack.c.l.b16 %v222
      %v474 = vunpack.c.l.b16 %v223
      %v475 = vunpack.c.l.b16 %v224
      %v476 = vunpack.c.l.b16 %v225
      %v477 = vunpack.c.l.b16 %v226
      %v478 = vunpack.c.l.b16 %v227
      %v479 = vunpack.c.l.b16 %v228
      %v480 = vunpack.c.l.b16 %v229
      %v481 = vunpack.c.l.b16 %v230
      %v482 = vunpack.c.l.b16 %v231
      %v483 = vunpack.c.l.b16 %v232
      %v484 = vunpack.c.l.b16 %v233
      %v485 = vunpack.c.l.b16 %v234
      %v486 = vunpack.c.l.b16 %v235
      %v487 = vunpack.c.l.b16 %v236
      %v488 = vunpack.c.l.b16 %v237
      %v489 = vunpack.c.l.b16 %v238
      %v490 = vunpack.c.l.b16 %v239
      %v491 = vunpack.c.l.b16 %v240
      %v492 = vunpack.c.l.b16 %v241
      %v493 = vunpack.c.l.b16 %v242
      %v494 = vunpack.c.l.b16 %v243
      %v495 = vunpack.c.l.b16 %v244
      %v496 = vunpack.c.l.b16 %v245
      %v497 = vunpack.c.l.b16 %v246
      %v498 = vunpack.c.l.b16 %v247
      %v499 = vunpack.c.l.b16 %v248
      %v500 = vunpack.c.l.b16 %v249
      %v501 = vunpack.c.l.b16 %v250
      %v502 = vunpack.c.l.b16 %v251
      %v503 = vunpack.c.l.b16 %v252
      %v504 = vunpack.c.l.b16 %v253
      %v505 = vunpack.c.l.b16 %v254
      %v506 = vunpack.c.l.b16 %v255
      %v507 = vunpack.c.l.b16 %v256
      %v508 = vunpack.c.l.b16 %v257
      %v509 = vunpack.c.l.b16 %v258
      %v510 = vunpack.c.l.b16 %v259
      %v511 = vunpack.c.l.b16 %v260
      %v512 = vunpack.c.l.b16 %v261
      %v513 = vunpack.c.l.b16 %v262
      %v514 = vunpack.c.l.b16 %v263
      %v515 = vunpack.c.l.b16 %v264
      %v516 = vunpack.c.l.b16 %v265
      %v517 = vunpack.c.l.b16 %v266
      %v518 = vunpack.c.l.b16 %v267
      %v519 = vunpack.c.l.b16 %v268
      %v520 = vunpack.c.l.b16 %v269
      %v521 = vunpack.c.l.b16 %v270
      %v522 = vunpack.c.l.b16 %v271
      %v523 = vunpack.c.l.b16 %v272
      %v524 = vunpack.c.l.b16 %v273
      %v525 = vunpack.c.l.b16 %v274
      %v526 = vunpack.c.l.b16 %v275
      %v527 = vunpack.c.l.b16 %v276
      %v528 = vunpack.c.l.b16 %v277
      %v529 = vunpack.c.l.b16 %v278
      %v530 = vunpack.c.l.b16 %v279
      %v531 = vunpack.c.l.b16 %v280
      %v532 = vunpack.c.l.b16 %v281
      %v533 = vunpack.c.l.b16 %v282
      %v534 = vunpack.c.l.b16 %v283
      %v535 = vunpack.c.l.b16 %v284
      %v536 = vunpack.c.l.b16 %v285
      %v537 = vunpack.c.l.b16 %v286
      %v538 = vunpack.c.l.b16 %v287
      %v539 = vunpack.c.l.b16 %v288
      %v540 = vunpack.c.l.b16 %v289
      %v541 = vunpack.c.l.b16 %v290
      %v542 = vunpack.c.l.b16 %v291
      %v543 = vpack.c.b16 %v436, %v435
      %v544 = vpack.c.b16 %v438, %v437
      %v545 = vpack.c.b16 %v440, %v439
      %v546 = vpack.c.b16 %v442, %v441
      %v547 = vpack.c.b16 %v444, %v443
      %v548 = vpack.c.b16 %v446, %v445
      %v549 = vpack.c.b16 %v448, %v447
      %v550 = vpack.c.b16 %v450, %v449
      %v551 = vpack.c.b16 %v452, %v451
      %v552 = vpack.c.b16 %v454, %v453
      %v553 = vpack.c.b16 %v456, %v455
      %v554 = vpack.c.b16 %v458, %v457
      %v555 = vpack.c.b16 %v460, %v459
      %v556 = vpack.c.b16 %v462, %v461
      %v557 = vpack.c.b16 %v464, %v463
      %v558 = vpack.c.b16 %v466, %v465
      %v559 = vpack.c.b16 %v468, %v467
      %v560 = vpack.c.b16 %v470, %v469
      %v561 = vpack.c.b16 %v472, %v471
      %v562 = vpack.c.b16 %v474, %v473
      %v563 = vpack.c.b16 %v476, %v475
      %v564 = vpack.c.b16 %v478, %v477
      %v565 = vpack.c.b16 %v480, %v479
      %v566 = vpack.c.b16 %v482, %v481
      %v567 = vpack.c.b16 %v484, %v483
      %v568 = vpack.c.b16 %v486, %v485
      %v569 = vpack.c.b16 %v488, %v487
      %v570 = vpack.c.b16 %v490, %v489
      %v571 = vpack.c.b16 %v492, %v491
      %v572 = vpack.c.b16 %v494, %v493
      %v573 = vpack.c.b16 %v496, %v495
      %v574 = vpack.c.b16 %v498, %v497
      %v575 = vpack.c.b16 %v500, %v499
      %v576 = vpack.c.b16 %v502, %v501
      %v577 = vpack.c.b16 %v504, %v503
      %v578 = vpack.c.b16 %v506, %v505
      %v579 = vpack.c.b16 %v508, %v507
      %v580 = vpack.c.b16 %v510, %v509
      %v581 = vpack.c.b16 %v512, %v511
      %v582 = vpack.c.b16 %v514, %v513
      %v583 = vpack.c.b16 %v516, %v515
      %v584 = vpack.c.b16 %v518, %v517
      %v585 = vpack.c.b16 %v520, %v519
      %v586 = vpack.c.b16 %v522, %v521
      %v587 = vpack.c.b16 %v524, %v523
      %v588 = vpack.c.b16 %v526, %v525
      %v589 = vpack.c.b16 %v528, %v527
      %v590 = vpack.c.b16 %v530, %v529
      %v591 = vpack.c.b16 %v532, %v531
      %v592 = vpack.c.b16 %v534, %v533
      %v593 = vpack.c.b16 %v536, %v535
      %v594 = vpack.c.b16 %v538, %v537
      %v595 = vpack.c.b16 %v540, %v539
      %v596 = vpack.c.b16 %v542, %v541
      %vm651 = vcmask 785408
      %v653 = vsel %vm651, %v320, 0
      %655 = vmatprep.subr.bf16.mxu0 0
      %656 = vmatpush1.bf16.msra.mxu0 %v543
      %657 = vmatprep.subr.bf16.mxu0 0
      %658 = vmatpush1.bf16.msra.mxu0 %v544
      %659 = vmatprep.subr.bf16.mxu0 0
      %660 = vmatpush1.bf16.msra.mxu0 %v545
      %661 = vmatprep.subr.bf16.mxu0 0
      %662 = vmatpush1.bf16.msra.mxu0 %v546
      %663 = vmatprep.subr.bf16.mxu0 0
      %664 = vmatpush1.bf16.msra.mxu0 %v547
      %665 = vmatprep.subr.bf16.mxu0 0
      %666 = vmatpush1.bf16.msra.mxu0 %v548
      %667 = vmatprep.subr.bf16.mxu0 0
      %668 = vmatpush1.bf16.msra.mxu0 %v549
      %669 = vmatprep.subr.bf16.mxu0 0
      %670 = vmatpush1.bf16.msra.mxu0 %v550
      %671 = vmatprep.subr.bf16.mxu0 0
      %672 = vmatpush1.bf16.msra.mxu0 %v551
      %673 = vmatprep.subr.bf16.mxu0 0
      %674 = vmatpush1.bf16.msra.mxu0 %v552
      %675 = vmatprep.subr.bf16.mxu0 0
      %676 = vmatpush1.bf16.msra.mxu0 %v553
      %677 = vmatprep.subr.bf16.mxu0 0
      %678 = vmatpush1.bf16.msra.mxu0 %v554
      %679 = vmatprep.subr.bf16.mxu0 0
      %680 = vmatpush1.bf16.msra.mxu0 %v555
      %681 = vmatprep.subr.bf16.mxu0 0
      %682 = vmatpush1.bf16.msra.mxu0 %v556
      %683 = vmatprep.subr.bf16.mxu0 0
      %684 = vmatpush1.bf16.msra.mxu0 %v557
      %685 = vmatprep.subr.bf16.mxu0 0
      %686 = vmatpush1.bf16.msra.mxu0 %v558
      %687 = vmatprep.mubr.bf16.mxu0 %v315
      %688 = vmatmul.mubr.bf16.gmra.mrb[0].mxu0 %v314
      %v689 = vpop.f32.mrb[0].mxu0
      %v690 = vadd.f32 0.0, %v689
      %v691 = vpop.f32.mrb[0].mxu0
      %v692 = vpop.f32.mrb[0].mxu0
      %v693 = vadd.f32 0.0, %v692
      %v694 = vpop.f32.mrb[0].mxu0
      %695 = vdwg.mxu0
      %696 = vmatprep.subr.bf16.mxu0 0
      %697 = vmatpush1.bf16.msra.mxu0 %v559
      %698 = vmatprep.subr.bf16.mxu0 0
      %699 = vmatpush1.bf16.msra.mxu0 %v560
      %700 = vmatprep.subr.bf16.mxu0 0
      %701 = vmatpush1.bf16.msra.mxu0 %v561
      %702 = vmatprep.subr.bf16.mxu0 0
      %703 = vmatpush1.bf16.msra.mxu0 %v562
      %704 = vmatprep.subr.bf16.mxu0 0
      %705 = vmatpush1.bf16.msra.mxu0 %v563
      %706 = vmatprep.subr.bf16.mxu0 0
      %707 = vmatpush1.bf16.msra.mxu0 %v564
      %708 = vmatprep.subr.bf16.mxu0 0
      %709 = vmatpush1.bf16.msra.mxu0 %v565
      %710 = vmatprep.subr.bf16.mxu0 0
      %711 = vmatpush1.bf16.msra.mxu0 %v566
      %712 = vmatprep.subr.bf16.mxu0 0
      %713 = vmatpush1.bf16.msra.mxu0 %v567
      %714 = vmatprep.subr.bf16.mxu0 0
      %715 = vmatpush1.bf16.msra.mxu0 %v568
      %716 = vmatprep.subr.bf16.mxu0 0
      %717 = vmatpush1.bf16.msra.mxu0 %v569
      %718 = vmatprep.subr.bf16.mxu0 0
      %719 = vmatpush1.bf16.msra.mxu0 %v570
      %720 = vmatprep.subr.bf16.mxu0 0
      %721 = vmatpush1.bf16.msra.mxu0 %v571
      %722 = vmatprep.subr.bf16.mxu0 0
      %723 = vmatpush1.bf16.msra.mxu0 %v572
      %724 = vmatprep.subr.bf16.mxu0 0
      %725 = vmatpush1.bf16.msra.mxu0 %v573
      %726 = vmatprep.subr.bf16.mxu0 0
      %727 = vmatpush1.bf16.msra.mxu0 %v574
      %728 = vmatprep.mubr.bf16.mxu0 %v317
      %729 = vmatmul.mubr.bf16.gmra.mrb[0].mxu0 %v316
      %v730 = vpop.f32.mrb[0].mxu0
      %v731 = vadd.f32 %v690, %v730
      %v732 = vpop.f32.mrb[0].mxu0
      %v733 = vpop.f32.mrb[0].mxu0
      %v734 = vadd.f32 %v693, %v733
      %v735 = vpop.f32.mrb[0].mxu0
      %736 = vdwg.mxu0
      %737 = vmatprep.subr.bf16.mxu0 0
      %738 = vmatpush1.bf16.msra.mxu0 %v575
      %739 = vmatprep.subr.bf16.mxu0 0
      %740 = vmatpush1.bf16.msra.mxu0 %v576
      %741 = vmatprep.subr.bf16.mxu0 0
      %742 = vmatpush1.bf16.msra.mxu0 %v577
      %743 = vmatprep.subr.bf16.mxu0 0
      %744 = vmatpush1.bf16.msra.mxu0 %v578
      %745 = vmatprep.subr.bf16.mxu0 0
      %746 = vmatpush1.bf16.msra.mxu0 %v579
      %747 = vmatprep.subr.bf16.mxu0 0
      %748 = vmatpush1.bf16.msra.mxu0 %v580
      %749 = vmatprep.subr.bf16.mxu0 0
      %750 = vmatpush1.bf16.msra.mxu0 %v581
      %751 = vmatprep.subr.bf16.mxu0 0
      %752 = vmatpush1.bf16.msra.mxu0 %v582
      %753 = vmatprep.subr.bf16.mxu0 0
      %754 = vmatpush1.bf16.msra.mxu0 %v583
      %755 = vmatprep.subr.bf16.mxu0 0
      %756 = vmatpush1.bf16.msra.mxu0 %v584
      %757 = vmatprep.subr.bf16.mxu0 0
      %758 = vmatpush1.bf16.msra.mxu0 %v585
      %759 = vmatprep.subr.bf16.mxu0 0
      %760 = vmatpush1.bf16.msra.mxu0 %v586
      %761 = vmatprep.subr.bf16.mxu0 0
      %762 = vmatpush1.bf16.msra.mxu0 %v587
      %763 = vmatprep.subr.bf16.mxu0 0
      %764 = vmatpush1.bf16.msra.mxu0 %v588
      %765 = vmatprep.subr.bf16.mxu0 0
      %766 = vmatpush1.bf16.msra.mxu0 %v589
      %767 = vmatprep.subr.bf16.mxu0 0
      %768 = vmatpush1.bf16.msra.mxu0 %v590
      %769 = vmatprep.mubr.bf16.mxu0 %v319
      %770 = vmatmul.mubr.bf16.gmra.mrb[0].mxu0 %v318
      %v771 = vpop.f32.mrb[0].mxu0
      %v772 = vadd.f32 %v731, %v771
      %v773 = vpop.f32.mrb[0].mxu0
      %v774 = vpop.f32.mrb[0].mxu0
      %v775 = vadd.f32 %v734, %v774
      %v776 = vpop.f32.mrb[0].mxu0
      %777 = vdwg.mxu0
      %778 = vmatprep.subr.bf16.mxu0 0
      %779 = vmatpush1.bf16.msra.mxu0 %v591
      %780 = vmatprep.subr.bf16.mxu0 0
      %781 = vmatpush1.bf16.msra.mxu0 %v592
      %782 = vmatprep.subr.bf16.mxu0 0
      %783 = vmatpush1.bf16.msra.mxu0 %v593
      %784 = vmatprep.subr.bf16.mxu0 0
      %785 = vmatpush1.bf16.msra.mxu0 %v594
      %786 = vmatprep.subr.bf16.mxu0 0
      %787 = vmatpush1.bf16.msra.mxu0 %v595
      %788 = vmatprep.subr.bf16.mxu0 0
      %789 = vmatpush1.bf16.msra.mxu0 %v596
      %790 = vmatprep.subr.bf16.mxu0 0
      %791 = vmatpush1.bf16.msra.mxu0 0
      %792 = vmatprep.subr.bf16.mxu0 0
      %793 = vmatpush1.bf16.msra.mxu0 0
      %794 = vmatprep.subr.bf16.mxu0 0
      %795 = vmatpush1.bf16.msra.mxu0 0
      %796 = vmatprep.subr.bf16.mxu0 0
      %797 = vmatpush1.bf16.msra.mxu0 0
      %798 = vmatprep.subr.bf16.mxu0 0
      %799 = vmatpush1.bf16.msra.mxu0 0
      %800 = vmatprep.subr.bf16.mxu0 0
      %801 = vmatpush1.bf16.msra.mxu0 0
      %802 = vmatprep.subr.bf16.mxu0 0
      %803 = vmatpush1.bf16.msra.mxu0 0
      %804 = vmatprep.subr.bf16.mxu0 0
      %805 = vmatpush1.bf16.msra.mxu0 0
      %806 = vmatprep.subr.bf16.mxu0 0
      %807 = vmatpush1.bf16.msra.mxu0 0
      %808 = vmatprep.subr.bf16.mxu0 0
      %809 = vmatpush1.bf16.msra.mxu0 0
      %810 = vmatprep.mubr.bf16.mxu0 0
      %811 = vmatmul.mubr.bf16.gmra.mrb[0].mxu0 %v653
      %v812 = vpop.f32.mrb[0].mxu0
      %v813 = vadd.f32 %v772, %v812
      %v814 = vpop.f32.mrb[0].mxu0
      %v815 = vpop.f32.mrb[0].mxu0
      %v816 = vadd.f32 %v775, %v815
      %v817 = vpop.f32.mrb[0].mxu0
      %818 = vdwg.mxu0
      %819 = vst [vmem:[%s174] sm:$0xff] %v813
      %820 = vst [vmem:[%s174 + $0x8] sm:$0xff] %v816
      %v821 = vld [vmem:[%s166 + $0x90] sm:$0xf]
      %v822 = vld [vmem:[%s166 + $0x94] sm:$0xf]
      %v823 = vld [vmem:[%s166 + $0x98] sm:$0xf]
      %v824 = vld [vmem:[%s166 + $0x9c] sm:$0xf]
      %v825 = vld [vmem:[%s166 + $0xa0] sm:$0xf]
      %v826 = vld [vmem:[%s166 + $0xa4] sm:$0xf]
      %v827 = vld [vmem:[%s166 + $0xa8] sm:$0xf]
      %v828 = vld [vmem:[%s166 + $0xac] sm:$0xf]
      %v829 = vld [vmem:[%s166 + $0xb0] sm:$0xf]
      %v830 = vld [vmem:[%s166 + $0xb4] sm:$0xf]
      %v831 = vld [vmem:[%s166 + $0xb8] sm:$0xf]
      %v832 = vld [vmem:[%s166 + $0xbc] sm:$0xf]
      %v833 = vld [vmem:[%s166 + $0xc0] sm:$0xf]
      %v834 = vld [vmem:[%s166 + $0xc4] sm:$0xf]
      %v835 = vld [vmem:[%s166 + $0xc8] sm:$0xf]
      %v836 = vld [vmem:[%s166 + $0xcc] sm:$0xf]
      %v837 = vld [vmem:[%s166 + $0xd0] sm:$0xf]
      %v838 = vld [vmem:[%s166 + $0xd4] sm:$0xf]
      %v839 = vld [vmem:[%s166 + $0xd8] sm:$0xf]
      %v840 = vld [vmem:[%s166 + $0xdc] sm:$0xf]
      %v841 = vld [vmem:[%s166 + $0xe0] sm:$0xf]
      %v842 = vld [vmem:[%s166 + $0xe4] sm:$0xf]
      %v843 = vld [vmem:[%s166 + $0xe8] sm:$0xf]
      %v844 = vld [vmem:[%s166 + $0xec] sm:$0xf]
      %v845 = vld [vmem:[%s166 + $0xf0] sm:$0xf]
      %v846 = vld [vmem:[%s166 + $0xf4] sm:$0xf]
      %v847 = vld [vmem:[%s166 + $0xf8] sm:$0xf]
      %v848 = vld [vmem:[%s166 + $0xfc] sm:$0xf]
      %v849 = vld [vmem:[%s166 + $0x100] sm:$0xf]
      %v850 = vld [vmem:[%s166 + $0x104] sm:$0xf]
      %v851 = vld [vmem:[%s166 + $0x108] sm:$0xf]
      %v852 = vld [vmem:[%s166 + $0x10c] sm:$0xf]
      %v853 = vld [vmem:[%s166 + $0x110] sm:$0xf]
      %v854 = vld [vmem:[%s166 + $0x114] sm:$0xf]
      %v855 = vld [vmem:[%s166 + $0x118] sm:$0xf]
      %v856 = vld [vmem:[%s166 + $0x11c] sm:$0xf]
      %v857 = vld [vmem:[%s166 + $0x120] sm:$0xf]
      %v858 = vld [vmem:[%s166 + $0x124] sm:$0xf]
      %v859 = vld [vmem:[%s166 + $0x128] sm:$0xf]
      %v860 = vld [vmem:[%s166 + $0x12c] sm:$0xf]
      %v861 = vld [vmem:[%s166 + $0x130] sm:$0xf]
      %v862 = vld [vmem:[%s166 + $0x134] sm:$0xf]
      %v863 = vld [vmem:[%s166 + $0x138] sm:$0xf]
      %v864 = vld [vmem:[%s166 + $0x13c] sm:$0xf]
      %v865 = vld [vmem:[%s166 + $0x140] sm:$0xf]
      %v866 = vld [vmem:[%s166 + $0x144] sm:$0xf]
      %v867 = vld [vmem:[%s166 + $0x148] sm:$0xf]
      %v868 = vld [vmem:[%s166 + $0x14c] sm:$0xf]
      %v869 = vld [vmem:[%s166 + $0x150] sm:$0xf]
      %v870 = vld [vmem:[%s166 + $0x154] sm:$0xf]
      %v871 = vld [vmem:[%s166 + $0x158] sm:$0xf]
      %v872 = vld [vmem:[%s166 + $0x15c] sm:$0xf]
      %v873 = vld [vmem:[%s166 + $0x160] sm:$0xf]
      %v874 = vld [vmem:[%s166 + $0x164] sm:$0xf]
      %v875 = vld [vmem:[%s166 + $0x168] sm:$0xf]
      %v876 = vld [vmem:[%s166 + $0x16c] sm:$0xf]
      %v877 = vld [vmem:[%s166 + $0x170] sm:$0xf]
      %v878 = vld [vmem:[%s166 + $0x174] sm:$0xf]
      %v879 = vld [vmem:[%s166 + $0x178] sm:$0xf]
      %v880 = vld [vmem:[%s166 + $0x17c] sm:$0xf]
      %v881 = vld [vmem:[%s166 + $0x180] sm:$0xf]
      %v882 = vld [vmem:[%s166 + $0x184] sm:$0xf]
      %v883 = vld [vmem:[%s166 + $0x188] sm:$0xf]
      %v884 = vld [vmem:[%s166 + $0x18c] sm:$0xf]
      %v885 = vld [vmem:[%s166 + $0x190] sm:$0xf]
      %v886 = vld [vmem:[%s166 + $0x194] sm:$0xf]
      %v887 = vld [vmem:[%s166 + $0x198] sm:$0xf]
      %v888 = vld [vmem:[%s166 + $0x19c] sm:$0xf]
      %v889 = vld [vmem:[%s166 + $0x1a0] sm:$0xf]
      %v890 = vld [vmem:[%s166 + $0x1a4] sm:$0xf]
      %v891 = vld [vmem:[%s166 + $0x1a8] sm:$0xf]
      %v892 = vld [vmem:[%s166 + $0x1ac] sm:$0xf]
      %v893 = vld [vmem:[%s166 + $0x1b0] sm:$0xf]
      %v894 = vld [vmem:[%s166 + $0x1b4] sm:$0xf]
      %v895 = vld [vmem:[%s166 + $0x1b8] sm:$0xf]
      %v896 = vld [vmem:[%s166 + $0x1bc] sm:$0xf]
      %v897 = vld [vmem:[%s166 + $0x1c0] sm:$0xf]
      %v898 = vld [vmem:[%s166 + $0x1c4] sm:$0xf]
      %v899 = vld [vmem:[%s166 + $0x1c8] sm:$0xf]
      %v900 = vld [vmem:[%s166 + $0x1cc] sm:$0xf]
      %v901 = vld [vmem:[%s166 + $0x1d0] sm:$0xf]
      %v902 = vld [vmem:[%s166 + $0x1d4] sm:$0xf]
      %v903 = vld [vmem:[%s166 + $0x1d8] sm:$0xf]
      %v904 = vld [vmem:[%s166 + $0x1dc] sm:$0xf]
      %v905 = vld [vmem:[%s166 + $0x1e0] sm:$0xf]
      %v906 = vld [vmem:[%s166 + $0x1e4] sm:$0xf]
      %v907 = vld [vmem:[%s166 + $0x1e8] sm:$0xf]
      %v908 = vld [vmem:[%s166 + $0x1ec] sm:$0xf]
      %v909 = vld [vmem:[%s166 + $0x1f0] sm:$0xf]
      %v910 = vld [vmem:[%s166 + $0x1f4] sm:$0xf]
      %v911 = vld [vmem:[%s166 + $0x1f8] sm:$0xf]
      %v912 = vld [vmem:[%s166 + $0x1fc] sm:$0xf]
      %v913 = vld [vmem:[%s166 + $0x200] sm:$0xf]
      %v914 = vld [vmem:[%s166 + $0x204] sm:$0xf]
      %v915 = vld [vmem:[%s166 + $0x208] sm:$0xf]
      %v916 = vld [vmem:[%s166 + $0x20c] sm:$0xf]
      %v917 = vld [vmem:[%s166 + $0x210] sm:$0xf]
      %v918 = vld [vmem:[%s166 + $0x214] sm:$0xf]
      %v919 = vld [vmem:[%s166 + $0x218] sm:$0xf]
      %v920 = vld [vmem:[%s166 + $0x21c] sm:$0xf]
      %v921 = vld [vmem:[%s166 + $0x220] sm:$0xf]
      %v922 = vld [vmem:[%s166 + $0x224] sm:$0xf]
      %v923 = vld [vmem:[%s166 + $0x228] sm:$0xf]
      %v924 = vld [vmem:[%s166 + $0x22c] sm:$0xf]
      %v925 = vld [vmem:[%s166 + $0x230] sm:$0xf]
      %v926 = vld [vmem:[%s166 + $0x234] sm:$0xf]
      %v927 = vld [vmem:[%s166 + $0x238] sm:$0xf]
      %v928 = vld [vmem:[%s166 + $0x23c] sm:$0xf]
      %v1037 = vunpack.c.l.b16 %v821
      %v1038 = vunpack.c.l.b16 %v822
      %v1039 = vunpack.c.l.b16 %v823
      %v1040 = vunpack.c.l.b16 %v824
      %v1041 = vunpack.c.l.b16 %v825
      %v1042 = vunpack.c.l.b16 %v826
      %v1043 = vunpack.c.l.b16 %v827
      %v1044 = vunpack.c.l.b16 %v828
      %v1045 = vunpack.c.l.b16 %v829
      %v1046 = vunpack.c.l.b16 %v830
      %v1047 = vunpack.c.l.b16 %v831
      %v1048 = vunpack.c.l.b16 %v832
      %v1049 = vunpack.c.l.b16 %v833
      %v1050 = vunpack.c.l.b16 %v834
      %v1051 = vunpack.c.l.b16 %v835
      %v1052 = vunpack.c.l.b16 %v836
      %v1053 = vunpack.c.l.b16 %v837
      %v1054 = vunpack.c.l.b16 %v838
      %v1055 = vunpack.c.l.b16 %v839
      %v1056 = vunpack.c.l.b16 %v840
      %v1057 = vunpack.c.l.b16 %v841
      %v1058 = vunpack.c.l.b16 %v842
      %v1059 = vunpack.c.l.b16 %v843
      %v1060 = vunpack.c.l.b16 %v844
      %v1061 = vunpack.c.l.b16 %v845
      %v1062 = vunpack.c.l.b16 %v846
      %v1063 = vunpack.c.l.b16 %v847
      %v1064 = vunpack.c.l.b16 %v848
      %v1065 = vunpack.c.l.b16 %v849
      %v1066 = vunpack.c.l.b16 %v850
      %v1067 = vunpack.c.l.b16 %v851
      %v1068 = vunpack.c.l.b16 %v852
      %v1069 = vunpack.c.l.b16 %v853
      %v1070 = vunpack.c.l.b16 %v854
      %v1071 = vunpack.c.l.b16 %v855
      %v1072 = vunpack.c.l.b16 %v856
      %v1073 = vunpack.c.l.b16 %v857
      %v1074 = vunpack.c.l.b16 %v858
      %v1075 = vunpack.c.l.b16 %v859
      %v1076 = vunpack.c.l.b16 %v860
      %v1077 = vunpack.c.l.b16 %v861
      %v1078 = vunpack.c.l.b16 %v862
      %v1079 = vunpack.c.l.b16 %v863
      %v1080 = vunpack.c.l.b16 %v864
      %v1081 = vunpack.c.l.b16 %v865
      %v1082 = vunpack.c.l.b16 %v866
      %v1083 = vunpack.c.l.b16 %v867
      %v1084 = vunpack.c.l.b16 %v868
      %v1085 = vunpack.c.l.b16 %v869
      %v1086 = vunpack.c.l.b16 %v870
      %v1087 = vunpack.c.l.b16 %v871
      %v1088 = vunpack.c.l.b16 %v872
      %v1089 = vunpack.c.l.b16 %v873
      %v1090 = vunpack.c.l.b16 %v874
      %v1091 = vunpack.c.l.b16 %v875
      %v1092 = vunpack.c.l.b16 %v876
      %v1093 = vunpack.c.l.b16 %v877
      %v1094 = vunpack.c.l.b16 %v878
      %v1095 = vunpack.c.l.b16 %v879
      %v1096 = vunpack.c.l.b16 %v880
      %v1097 = vunpack.c.l.b16 %v881
      %v1098 = vunpack.c.l.b16 %v882
      %v1099 = vunpack.c.l.b16 %v883
      %v1100 = vunpack.c.l.b16 %v884
      %v1101 = vunpack.c.l.b16 %v885
      %v1102 = vunpack.c.l.b16 %v886
      %v1103 = vunpack.c.l.b16 %v887
      %v1104 = vunpack.c.l.b16 %v888
      %v1105 = vunpack.c.l.b16 %v889
      %v1106 = vunpack.c.l.b16 %v890
      %v1107 = vunpack.c.l.b16 %v891
      %v1108 = vunpack.c.l.b16 %v892
      %v1109 = vunpack.c.l.b16 %v893
      %v1110 = vunpack.c.l.b16 %v894
      %v1111 = vunpack.c.l.b16 %v895
      %v1112 = vunpack.c.l.b16 %v896
      %v1113 = vunpack.c.l.b16 %v897
      %v1114 = vunpack.c.l.b16 %v898
      %v1115 = vunpack.c.l.b16 %v899
      %v1116 = vunpack.c.l.b16 %v900
      %v1117 = vunpack.c.l.b16 %v901
      %v1118 = vunpack.c.l.b16 %v902
      %v1119 = vunpack.c.l.b16 %v903
      %v1120 = vunpack.c.l.b16 %v904
      %v1121 = vunpack.c.l.b16 %v905
      %v1122 = vunpack.c.l.b16 %v906
      %v1123 = vunpack.c.l.b16 %v907
      %v1124 = vunpack.c.l.b16 %v908
      %v1125 = vunpack.c.l.b16 %v909
      %v1126 = vunpack.c.l.b16 %v910
      %v1127 = vunpack.c.l.b16 %v911
      %v1128 = vunpack.c.l.b16 %v912
      %v1129 = vunpack.c.l.b16 %v913
      %v1130 = vunpack.c.l.b16 %v914
      %v1131 = vunpack.c.l.b16 %v915
      %v1132 = vunpack.c.l.b16 %v916
      %v1133 = vunpack.c.l.b16 %v917
      %v1134 = vunpack.c.l.b16 %v918
      %v1135 = vunpack.c.l.b16 %v919
      %v1136 = vunpack.c.l.b16 %v920
      %v1137 = vunpack.c.l.b16 %v921
      %v1138 = vunpack.c.l.b16 %v922
      %v1139 = vunpack.c.l.b16 %v923
      %v1140 = vunpack.c.l.b16 %v924
      %v1141 = vunpack.c.l.b16 %v925
      %v1142 = vunpack.c.l.b16 %v926
      %v1143 = vunpack.c.l.b16 %v927
      %v1144 = vunpack.c.l.b16 %v928
      %v1145 = vpack.c.b16 %v1038, %v1037
      %v1146 = vpack.c.b16 %v1040, %v1039
      %v1147 = vpack.c.b16 %v1042, %v1041
      %v1148 = vpack.c.b16 %v1044, %v1043
      %v1149 = vpack.c.b16 %v1046, %v1045
      %v1150 = vpack.c.b16 %v1048, %v1047
      %v1151 = vpack.c.b16 %v1050, %v1049
      %v1152 = vpack.c.b16 %v1052, %v1051
      %v1153 = vpack.c.b16 %v1054, %v1053
      %v1154 = vpack.c.b16 %v1056, %v1055
      %v1155 = vpack.c.b16 %v1058, %v1057
      %v1156 = vpack.c.b16 %v1060, %v1059
      %v1157 = vpack.c.b16 %v1062, %v1061
      %v1158 = vpack.c.b16 %v1064, %v1063
      %v1159 = vpack.c.b16 %v1066, %v1065
      %v1160 = vpack.c.b16 %v1068, %v1067
      %v1161 = vpack.c.b16 %v1070, %v1069
      %v1162 = vpack.c.b16 %v1072, %v1071
      %v1163 = vpack.c.b16 %v1074, %v1073
      %v1164 = vpack.c.b16 %v1076, %v1075
      %v1165 = vpack.c.b16 %v1078, %v1077
      %v1166 = vpack.c.b16 %v1080, %v1079
      %v1167 = vpack.c.b16 %v1082, %v1081
      %v1168 = vpack.c.b16 %v1084, %v1083
      %v1169 = vpack.c.b16 %v1086, %v1085
      %v1170 = vpack.c.b16 %v1088, %v1087
      %v1171 = vpack.c.b16 %v1090, %v1089
      %v1172 = vpack.c.b16 %v1092, %v1091
      %v1173 = vpack.c.b16 %v1094, %v1093
      %v1174 = vpack.c.b16 %v1096, %v1095
      %v1175 = vpack.c.b16 %v1098, %v1097
      %v1176 = vpack.c.b16 %v1100, %v1099
      %v1177 = vpack.c.b16 %v1102, %v1101
      %v1178 = vpack.c.b16 %v1104, %v1103
      %v1179 = vpack.c.b16 %v1106, %v1105
      %v1180 = vpack.c.b16 %v1108, %v1107
      %v1181 = vpack.c.b16 %v1110, %v1109
      %v1182 = vpack.c.b16 %v1112, %v1111
      %v1183 = vpack.c.b16 %v1114, %v1113
      %v1184 = vpack.c.b16 %v1116, %v1115
      %v1185 = vpack.c.b16 %v1118, %v1117
      %v1186 = vpack.c.b16 %v1120, %v1119
      %v1187 = vpack.c.b16 %v1122, %v1121
      %v1188 = vpack.c.b16 %v1124, %v1123
      %v1189 = vpack.c.b16 %v1126, %v1125
      %v1190 = vpack.c.b16 %v1128, %v1127
      %v1191 = vpack.c.b16 %v1130, %v1129
      %v1192 = vpack.c.b16 %v1132, %v1131
      %v1193 = vpack.c.b16 %v1134, %v1133
      %v1194 = vpack.c.b16 %v1136, %v1135
      %v1195 = vpack.c.b16 %v1138, %v1137
      %v1196 = vpack.c.b16 %v1140, %v1139
      %v1197 = vpack.c.b16 %v1142, %v1141
      %v1198 = vpack.c.b16 %v1144, %v1143
      %1253 = vmatprep.subr.bf16.mxu0 0
      %1254 = vmatpush1.bf16.msra.mxu0 %v1145
      %1255 = vmatprep.subr.bf16.mxu0 0
      %1256 = vmatpush1.bf16.msra.mxu0 %v1146
      %1257 = vmatprep.subr.bf16.mxu0 0
      %1258 = vmatpush1.bf16.msra.mxu0 %v1147
      %1259 = vmatprep.subr.bf16.mxu0 0
      %1260 = vmatpush1.bf16.msra.mxu0 %v1148
      %1261 = vmatprep.subr.bf16.mxu0 0
      %1262 = vmatpush1.bf16.msra.mxu0 %v1149
      %1263 = vmatprep.subr.bf16.mxu0 0
      %1264 = vmatpush1.bf16.msra.mxu0 %v1150
      %1265 = vmatprep.subr.bf16.mxu0 0
      %1266 = vmatpush1.bf16.msra.mxu0 %v1151
      %1267 = vmatprep.subr.bf16.mxu0 0
      %1268 = vmatpush1.bf16.msra.mxu0 %v1152
      %1269 = vmatprep.subr.bf16.mxu0 0
      %1270 = vmatpush1.bf16.msra.mxu0 %v1153
      %1271 = vmatprep.subr.bf16.mxu0 0
      %1272 = vmatpush1.bf16.msra.mxu0 %v1154
      %1273 = vmatprep.subr.bf16.mxu0 0
      %1274 = vmatpush1.bf16.msra.mxu0 %v1155
      %1275 = vmatprep.subr.bf16.mxu0 0
      %1276 = vmatpush1.bf16.msra.mxu0 %v1156
      %1277 = vmatprep.subr.bf16.mxu0 0
      %1278 = vmatpush1.bf16.msra.mxu0 %v1157
      %1279 = vmatprep.subr.bf16.mxu0 0
      %1280 = vmatpush1.bf16.msra.mxu0 %v1158
      %1281 = vmatprep.subr.bf16.mxu0 0
      %1282 = vmatpush1.bf16.msra.mxu0 %v1159
      %1283 = vmatprep.subr.bf16.mxu0 0
      %1284 = vmatpush1.bf16.msra.mxu0 %v1160
      %1285 = vmatprep.mubr.bf16.mxu0 %v315
      %1286 = vmatmul.mubr.bf16.gmra.mrb[0].mxu0 %v314
      %v1287 = vpop.f32.mrb[0].mxu0
      %v1288 = vadd.f32 0.0, %v1287
      %v1289 = vpop.f32.mrb[0].mxu0
      %v1290 = vpop.f32.mrb[0].mxu0
      %v1291 = vadd.f32 0.0, %v1290
      %v1292 = vpop.f32.mrb[0].mxu0
      %1293 = vdwg.mxu0
      %1294 = vmatprep.subr.bf16.mxu0 0
      %1295 = vmatpush1.bf16.msra.mxu0 %v1161
      %1296 = vmatprep.subr.bf16.mxu0 0
      %1297 = vmatpush1.bf16.msra.mxu0 %v1162
      %1298 = vmatprep.subr.bf16.mxu0 0
      %1299 = vmatpush1.bf16.msra.mxu0 %v1163
      %1300 = vmatprep.subr.bf16.mxu0 0
      %1301 = vmatpush1.bf16.msra.mxu0 %v1164
      %1302 = vmatprep.subr.bf16.mxu0 0
      %1303 = vmatpush1.bf16.msra.mxu0 %v1165
      %1304 = vmatprep.subr.bf16.mxu0 0
      %1305 = vmatpush1.bf16.msra.mxu0 %v1166
      %1306 = vmatprep.subr.bf16.mxu0 0
      %1307 = vmatpush1.bf16.msra.mxu0 %v1167
      %1308 = vmatprep.subr.bf16.mxu0 0
      %1309 = vmatpush1.bf16.msra.mxu0 %v1168
      %1310 = vmatprep.subr.bf16.mxu0 0
      %1311 = vmatpush1.bf16.msra.mxu0 %v1169
      %1312 = vmatprep.subr.bf16.mxu0 0
      %1313 = vmatpush1.bf16.msra.mxu0 %v1170
      %1314 = vmatprep.subr.bf16.mxu0 0
      %1315 = vmatpush1.bf16.msra.mxu0 %v1171
      %1316 = vmatprep.subr.bf16.mxu0 0
      %1317 = vmatpush1.bf16.msra.mxu0 %v1172
      %1318 = vmatprep.subr.bf16.mxu0 0
      %1319 = vmatpush1.bf16.msra.mxu0 %v1173
      %1320 = vmatprep.subr.bf16.mxu0 0
      %1321 = vmatpush1.bf16.msra.mxu0 %v1174
      %1322 = vmatprep.subr.bf16.mxu0 0
      %1323 = vmatpush1.bf16.msra.mxu0 %v1175
      %1324 = vmatprep.subr.bf16.mxu0 0
      %1325 = vmatpush1.bf16.msra.mxu0 %v1176
      %1326 = vmatprep.mubr.bf16.mxu0 %v317
      %1327 = vmatmul.mubr.bf16.gmra.mrb[0].mxu0 %v316
      %v1328 = vpop.f32.mrb[0].mxu0
      %v1329 = vadd.f32 %v1288, %v1328
      %v1330 = vpop.f32.mrb[0].mxu0
      %v1331 = vpop.f32.mrb[0].mxu0
      %v1332 = vadd.f32 %v1291, %v1331
      %v1333 = vpop.f32.mrb[0].mxu0
      %1334 = vdwg.mxu0
      %1335 = vmatprep.subr.bf16.mxu0 0
      %1336 = vmatpush1.bf16.msra.mxu0 %v1177
      %1337 = vmatprep.subr.bf16.mxu0 0
      %1338 = vmatpush1.bf16.msra.mxu0 %v1178
      %1339 = vmatprep.subr.bf16.mxu0 0
      %1340 = vmatpush1.bf16.msra.mxu0 %v1179
      %1341 = vmatprep.subr.bf16.mxu0 0
      %1342 = vmatpush1.bf16.msra.mxu0 %v1180
      %1343 = vmatprep.subr.bf16.mxu0 0
      %1344 = vmatpush1.bf16.msra.mxu0 %v1181
      %1345 = vmatprep.subr.bf16.mxu0 0
      %1346 = vmatpush1.bf16.msra.mxu0 %v1182
      %1347 = vmatprep.subr.bf16.mxu0 0
      %1348 = vmatpush1.bf16.msra.mxu0 %v1183
      %1349 = vmatprep.subr.bf16.mxu0 0
      %1350 = vmatpush1.bf16.msra.mxu0 %v1184
      %1351 = vmatprep.subr.bf16.mxu0 0
      %1352 = vmatpush1.bf16.msra.mxu0 %v1185
      %1353 = vmatprep.subr.bf16.mxu0 0
      %1354 = vmatpush1.bf16.msra.mxu0 %v1186
      %1355 = vmatprep.subr.bf16.mxu0 0
      %1356 = vmatpush1.bf16.msra.mxu0 %v1187
      %1357 = vmatprep.subr.bf16.mxu0 0
      %1358 = vmatpush1.bf16.msra.mxu0 %v1188
      %1359 = vmatprep.subr.bf16.mxu0 0
      %1360 = vmatpush1.bf16.msra.mxu0 %v1189
      %1361 = vmatprep.subr.bf16.mxu0 0
      %1362 = vmatpush1.bf16.msra.mxu0 %v1190
      %1363 = vmatprep.subr.bf16.mxu0 0
      %1364 = vmatpush1.bf16.msra.mxu0 %v1191
      %1365 = vmatprep.subr.bf16.mxu0 0
      %1366 = vmatpush1.bf16.msra.mxu0 %v1192
      %1367 = vmatprep.mubr.bf16.mxu0 %v319
      %1368 = vmatmul.mubr.bf16.gmra.mrb[0].mxu0 %v318
      %v1369 = vpop.f32.mrb[0].mxu0
      %v1370 = vadd.f32 %v1329, %v1369
      %v1371 = vpop.f32.mrb[0].mxu0
      %v1372 = vpop.f32.mrb[0].mxu0
      %v1373 = vadd.f32 %v1332, %v1372
      %v1374 = vpop.f32.mrb[0].mxu0
      %1375 = vdwg.mxu0
      %1376 = vmatprep.subr.bf16.mxu0 0
      %1377 = vmatpush1.bf16.msra.mxu0 %v1193
      %1378 = vmatprep.subr.bf16.mxu0 0
      %1379 = vmatpush1.bf16.msra.mxu0 %v1194
      %1380 = vmatprep.subr.bf16.mxu0 0
      %1381 = vmatpush1.bf16.msra.mxu0 %v1195
      %1382 = vmatprep.subr.bf16.mxu0 0
      %1383 = vmatpush1.bf16.msra.mxu0 %v1196
      %1384 = vmatprep.subr.bf16.mxu0 0
      %1385 = vmatpush1.bf16.msra.mxu0 %v1197
      %1386 = vmatprep.subr.bf16.mxu0 0
      %1387 = vmatpush1.bf16.msra.mxu0 %v1198
      %1388 = vmatprep.subr.bf16.mxu0 0
      %1389 = vmatpush1.bf16.msra.mxu0 0
      %1390 = vmatprep.subr.bf16.mxu0 0
      %1391 = vmatpush1.bf16.msra.mxu0 0
      %1392 = vmatprep.subr.bf16.mxu0 0
      %1393 = vmatpush1.bf16.msra.mxu0 0
      %1394 = vmatprep.subr.bf16.mxu0 0
      %1395 = vmatpush1.bf16.msra.mxu0 0
      %1396 = vmatprep.subr.bf16.mxu0 0
      %1397 = vmatpush1.bf16.msra.mxu0 0
      %1398 = vmatprep.subr.bf16.mxu0 0
      %1399 = vmatpush1.bf16.msra.mxu0 0
      %1400 = vmatprep.subr.bf16.mxu0 0
      %1401 = vmatpush1.bf16.msra.mxu0 0
      %1402 = vmatprep.subr.bf16.mxu0 0
      %1403 = vmatpush1.bf16.msra.mxu0 0
      %1404 = vmatprep.subr.bf16.mxu0 0
      %1405 = vmatpush1.bf16.msra.mxu0 0
      %1406 = vmatprep.subr.bf16.mxu0 0
      %1407 = vmatpush1.bf16.msra.mxu0 0
      %1408 = vmatprep.mubr.bf16.mxu0 0
      %1409 = vmatmul.mubr.bf16.gmra.mrb[0].mxu0 %v653
      %v1410 = vpop.f32.mrb[0].mxu0
      %v1411 = vadd.f32 %v1370, %v1410
      %v1412 = vpop.f32.mrb[0].mxu0
      %v1413 = vpop.f32.mrb[0].mxu0
      %v1414 = vadd.f32 %v1373, %v1413
      %v1415 = vpop.f32.mrb[0].mxu0
      %1416 = vdwg.mxu0
      %s1417 = scalar_lea.vmem %s174, 16
      %1418 = vst [vmem:[%s1417] sm:$0xff] %v1411
      %1419 = vst [vmem:[%s1417 + $0x8] sm:$0xff] %v1414
      %v1420 = vld [vmem:[%s166 + $0x120] sm:$0xf]
      %v1421 = vld [vmem:[%s166 + $0x124] sm:$0xf]
      %v1422 = vld [vmem:[%s166 + $0x128] sm:$0xf]
      %v1423 = vld [vmem:[%s166 + $0x12c] sm:$0xf]
      %v1424 = vld [vmem:[%s166 + $0x130] sm:$0xf]
      %v1425 = vld [vmem:[%s166 + $0x134] sm:$0xf]
      %v1426 = vld [vmem:[%s166 + $0x138] sm:$0xf]
      %v1427 = vld [vmem:[%s166 + $0x13c] sm:$0xf]
      %v1428 = vld [vmem:[%s166 + $0x140] sm:$0xf]
      %v1429 = vld [vmem:[%s166 + $0x144] sm:$0xf]
      %v1430 = vld [vmem:[%s166 + $0x148] sm:$0xf]
      %v1431 = vld [vmem:[%s166 + $0x14c] sm:$0xf]
      %v1432 = vld [vmem:[%s166 + $0x150] sm:$0xf]
      %v1433 = vld [vmem:[%s166 + $0x154] sm:$0xf]
      %v1434 = vld [vmem:[%s166 + $0x158] sm:$0xf]
      %v1435 = vld [vmem:[%s166 + $0x15c] sm:$0xf]
      %v1436 = vld [vmem:[%s166 + $0x160] sm:$0xf]
      %v1437 = vld [vmem:[%s166 + $0x164] sm:$0xf]
      %v1438 = vld [vmem:[%s166 + $0x168] sm:$0xf]
      %v1439 = vld [vmem:[%s166 + $0x16c] sm:$0xf]
      %v1440 = vld [vmem:[%s166 + $0x170] sm:$0xf]
      %v1441 = vld [vmem:[%s166 + $0x174] sm:$0xf]
      %v1442 = vld [vmem:[%s166 + $0x178] sm:$0xf]
      %v1443 = vld [vmem:[%s166 + $0x17c] sm:$0xf]
      %v1444 = vld [vmem:[%s166 + $0x180] sm:$0xf]
      %v1445 = vld [vmem:[%s166 + $0x184] sm:$0xf]
      %v1446 = vld [vmem:[%s166 + $0x188] sm:$0xf]
      %v1447 = vld [vmem:[%s166 + $0x18c] sm:$0xf]
      %v1448 = vld [vmem:[%s166 + $0x190] sm:$0xf]
      %v1449 = vld [vmem:[%s166 + $0x194] sm:$0xf]
      %v1450 = vld [vmem:[%s166 + $0x198] sm:$0xf]
      %v1451 = vld [vmem:[%s166 + $0x19c] sm:$0xf]
      %v1452 = vld [vmem:[%s166 + $0x1a0] sm:$0xf]
      %v1453 = vld [vmem:[%s166 + $0x1a4] sm:$0xf]
      %v1454 = vld [vmem:[%s166 + $0x1a8] sm:$0xf]
      %v1455 = vld [vmem:[%s166 + $0x1ac] sm:$0xf]
      %v1456 = vld [vmem:[%s166 + $0x1b0] sm:$0xf]
      %v1457 = vld [vmem:[%s166 + $0x1b4] sm:$0xf]
      %v1458 = vld [vmem:[%s166 + $0x1b8] sm:$0xf]
      %v1459 = vld [vmem:[%s166 + $0x1bc] sm:$0xf]
      %v1460 = vld [vmem:[%s166 + $0x1c0] sm:$0xf]
      %v1461 = vld [vmem:[%s166 + $0x1c4] sm:$0xf]
      %v1462 = vld [vmem:[%s166 + $0x1c8] sm:$0xf]
      %v1463 = vld [vmem:[%s166 + $0x1cc] sm:$0xf]
      %v1464 = vld [vmem:[%s166 + $0x1d0] sm:$0xf]
      %v1465 = vld [vmem:[%s166 + $0x1d4] sm:$0xf]
      %v1466 = vld [vmem:[%s166 + $0x1d8] sm:$0xf]
      %v1467 = vld [vmem:[%s166 + $0x1dc] sm:$0xf]
      %v1468 = vld [vmem:[%s166 + $0x1e0] sm:$0xf]
      %v1469 = vld [vmem:[%s166 + $0x1e4] sm:$0xf]
      %v1470 = vld [vmem:[%s166 + $0x1e8] sm:$0xf]
      %v1471 = vld [vmem:[%s166 + $0x1ec] sm:$0xf]
      %v1472 = vld [vmem:[%s166 + $0x1f0] sm:$0xf]
      %v1473 = vld [vmem:[%s166 + $0x1f4] sm:$0xf]
      %v1474 = vld [vmem:[%s166 + $0x1f8] sm:$0xf]
      %v1475 = vld [vmem:[%s166 + $0x1fc] sm:$0xf]
      %v1476 = vld [vmem:[%s166 + $0x200] sm:$0xf]
      %v1477 = vld [vmem:[%s166 + $0x204] sm:$0xf]
      %v1478 = vld [vmem:[%s166 + $0x208] sm:$0xf]
      %v1479 = vld [vmem:[%s166 + $0x20c] sm:$0xf]
      %v1480 = vld [vmem:[%s166 + $0x210] sm:$0xf]
      %v1481 = vld [vmem:[%s166 + $0x214] sm:$0xf]
      %v1482 = vld [vmem:[%s166 + $0x218] sm:$0xf]
      %v1483 = vld [vmem:[%s166 + $0x21c] sm:$0xf]
      %v1484 = vld [vmem:[%s166 + $0x220] sm:$0xf]
      %v1485 = vld [vmem:[%s166 + $0x224] sm:$0xf]
      %v1486 = vld [vmem:[%s166 + $0x228] sm:$0xf]
      %v1487 = vld [vmem:[%s166 + $0x22c] sm:$0xf]
      %v1488 = vld [vmem:[%s166 + $0x230] sm:$0xf]
      %v1489 = vld [vmem:[%s166 + $0x234] sm:$0xf]
      %v1490 = vld [vmem:[%s166 + $0x238] sm:$0xf]
      %v1491 = vld [vmem:[%s166 + $0x23c] sm:$0xf]
      %v1492 = vld [vmem:[%s166 + $0x240] sm:$0xf]
      %v1493 = vld [vmem:[%s166 + $0x244] sm:$0xf]
      %v1494 = vld [vmem:[%s166 + $0x248] sm:$0xf]
      %v1495 = vld [vmem:[%s166 + $0x24c] sm:$0xf]
      %v1496 = vld [vmem:[%s166 + $0x250] sm:$0xf]
      %v1497 = vld [vmem:[%s166 + $0x254] sm:$0xf]
      %v1498 = vld [vmem:[%s166 + $0x258] sm:$0xf]
      %v1499 = vld [vmem:[%s166 + $0x25c] sm:$0xf]
      %v1500 = vld [vmem:[%s166 + $0x260] sm:$0xf]
      %v1501 = vld [vmem:[%s166 + $0x264] sm:$0xf]
      %v1502 = vld [vmem:[%s166 + $0x268] sm:$0xf]
      %v1503 = vld [vmem:[%s166 + $0x26c] sm:$0xf]
      %v1504 = vld [vmem:[%s166 + $0x270] sm:$0xf]
      %v1505 = vld [vmem:[%s166 + $0x274] sm:$0xf]
      %v1506 = vld [vmem:[%s166 + $0x278] sm:$0xf]
      %v1507 = vld [vmem:[%s166 + $0x27c] sm:$0xf]
      %v1508 = vld [vmem:[%s166 + $0x280] sm:$0xf]
      %v1509 = vld [vmem:[%s166 + $0x284] sm:$0xf]
      %v1510 = vld [vmem:[%s166 + $0x288] sm:$0xf]
      %v1511 = vld [vmem:[%s166 + $0x28c] sm:$0xf]
      %v1512 = vld [vmem:[%s166 + $0x290] sm:$0xf]
      %v1513 = vld [vmem:[%s166 + $0x294] sm:$0xf]
      %v1514 = vld [vmem:[%s166 + $0x298] sm:$0xf]
      %v1515 = vld [vmem:[%s166 + $0x29c] sm:$0xf]
      %v1516 = vld [vmem:[%s166 + $0x2a0] sm:$0xf]
      %v1517 = vld [vmem:[%s166 + $0x2a4] sm:$0xf]
      %v1518 = vld [vmem:[%s166 + $0x2a8] sm:$0xf]
      %v1519 = vld [vmem:[%s166 + $0x2ac] sm:$0xf]
      %v1520 = vld [vmem:[%s166 + $0x2b0] sm:$0xf]
      %v1521 = vld [vmem:[%s166 + $0x2b4] sm:$0xf]
      %v1522 = vld [vmem:[%s166 + $0x2b8] sm:$0xf]
      %v1523 = vld [vmem:[%s166 + $0x2bc] sm:$0xf]
      %v1524 = vld [vmem:[%s166 + $0x2c0] sm:$0xf]
      %v1525 = vld [vmem:[%s166 + $0x2c4] sm:$0xf]
      %v1526 = vld [vmem:[%s166 + $0x2c8] sm:$0xf]
      %v1527 = vld [vmem:[%s166 + $0x2cc] sm:$0xf]
      %v1636 = vunpack.c.l.b16 %v1420
      %v1637 = vunpack.c.l.b16 %v1421
      %v1638 = vunpack.c.l.b16 %v1422
      %v1639 = vunpack.c.l.b16 %v1423
      %v1640 = vunpack.c.l.b16 %v1424
      %v1641 = vunpack.c.l.b16 %v1425
      %v1642 = vunpack.c.l.b16 %v1426
      %v1643 = vunpack.c.l.b16 %v1427
      %v1644 = vunpack.c.l.b16 %v1428
      %v1645 = vunpack.c.l.b16 %v1429
      %v1646 = vunpack.c.l.b16 %v1430
      %v1647 = vunpack.c.l.b16 %v1431
      %v1648 = vunpack.c.l.b16 %v1432
      %v1649 = vunpack.c.l.b16 %v1433
      %v1650 = vunpack.c.l.b16 %v1434
      %v1651 = vunpack.c.l.b16 %v1435
      %v1652 = vunpack.c.l.b16 %v1436
      %v1653 = vunpack.c.l.b16 %v1437
      %v1654 = vunpack.c.l.b16 %v1438
      %v1655 = vunpack.c.l.b16 %v1439
      %v1656 = vunpack.c.l.b16 %v1440
      %v1657 = vunpack.c.l.b16 %v1441
      %v1658 = vunpack.c.l.b16 %v1442
      %v1659 = vunpack.c.l.b16 %v1443
      %v1660 = vunpack.c.l.b16 %v1444
      %v1661 = vunpack.c.l.b16 %v1445
      %v1662 = vunpack.c.l.b16 %v1446
      %v1663 = vunpack.c.l.b16 %v1447
      %v1664 = vunpack.c.l.b16 %v1448
      %v1665 = vunpack.c.l.b16 %v1449
      %v1666 = vunpack.c.l.b16 %v1450
      %v1667 = vunpack.c.l.b16 %v1451
      %v1668 = vunpack.c.l.b16 %v1452
      %v1669 = vunpack.c.l.b16 %v1453
      %v1670 = vunpack.c.l.b16 %v1454
      %v1671 = vunpack.c.l.b16 %v1455
      %v1672 = vunpack.c.l.b16 %v1456
      %v1673 = vunpack.c.l.b16 %v1457
      %v1674 = vunpack.c.l.b16 %v1458
      %v1675 = vunpack.c.l.b16 %v1459
      %v1676 = vunpack.c.l.b16 %v1460
      %v1677 = vunpack.c.l.b16 %v1461
      %v1678 = vunpack.c.l.b16 %v1462
      %v1679 = vunpack.c.l.b16 %v1463
      %v1680 = vunpack.c.l.b16 %v1464
      %v1681 = vunpack.c.l.b16 %v1465
      %v1682 = vunpack.c.l.b16 %v1466
      %v1683 = vunpack.c.l.b16 %v1467
      %v1684 = vunpack.c.l.b16 %v1468
      %v1685 = vunpack.c.l.b16 %v1469
      %v1686 = vunpack.c.l.b16 %v1470
      %v1687 = vunpack.c.l.b16 %v1471
      %v1688 = vunpack.c.l.b16 %v1472
      %v1689 = vunpack.c.l.b16 %v1473
      %v1690 = vunpack.c.l.b16 %v1474
      %v1691 = vunpack.c.l.b16 %v1475
      %v1692 = vunpack.c.l.b16 %v1476
      %v1693 = vunpack.c.l.b16 %v1477
      %v1694 = vunpack.c.l.b16 %v1478
      %v1695 = vunpack.c.l.b16 %v1479
      %v1696 = vunpack.c.l.b16 %v1480
      %v1697 = vunpack.c.l.b16 %v1481
      %v1698 = vunpack.c.l.b16 %v1482
      %v1699 = vunpack.c.l.b16 %v1483
      %v1700 = vunpack.c.l.b16 %v1484
      %v1701 = vunpack.c.l.b16 %v1485
      %v1702 = vunpack.c.l.b16 %v1486
      %v1703 = vunpack.c.l.b16 %v1487
      %v1704 = vunpack.c.l.b16 %v1488
      %v1705 = vunpack.c.l.b16 %v1489
      %v1706 = vunpack.c.l.b16 %v1490
      %v1707 = vunpack.c.l.b16 %v1491
      %v1708 = vunpack.c.l.b16 %v1492
      %v1709 = vunpack.c.l.b16 %v1493
      %v1710 = vunpack.c.l.b16 %v1494
      %v1711 = vunpack.c.l.b16 %v1495
      %v1712 = vunpack.c.l.b16 %v1496
      %v1713 = vunpack.c.l.b16 %v1497
      %v1714 = vunpack.c.l.b16 %v1498
      %v1715 = vunpack.c.l.b16 %v1499
      %v1716 = vunpack.c.l.b16 %v1500
      %v1717 = vunpack.c.l.b16 %v1501
      %v1718 = vunpack.c.l.b16 %v1502
      %v1719 = vunpack.c.l.b16 %v1503
      %v1720 = vunpack.c.l.b16 %v1504
      %v1721 = vunpack.c.l.b16 %v1505
      %v1722 = vunpack.c.l.b16 %v1506
      %v1723 = vunpack.c.l.b16 %v1507
      %v1724 = vunpack.c.l.b16 %v1508
      %v1725 = vunpack.c.l.b16 %v1509
      %v1726 = vunpack.c.l.b16 %v1510
      %v1727 = vunpack.c.l.b16 %v1511
      %v1728 = vunpack.c.l.b16 %v1512
      %v1729 = vunpack.c.l.b16 %v1513
      %v1730 = vunpack.c.l.b16 %v1514
      %v1731 = vunpack.c.l.b16 %v1515
      %v1732 = vunpack.c.l.b16 %v1516
      %v1733 = vunpack.c.l.b16 %v1517
      %v1734 = vunpack.c.l.b16 %v1518
      %v1735 = vunpack.c.l.b16 %v1519
      %v1736 = vunpack.c.l.b16 %v1520
      %v1737 = vunpack.c.l.b16 %v1521
      %v1738 = vunpack.c.l.b16 %v1522
      %v1739 = vunpack.c.l.b16 %v1523
      %v1740 = vunpack.c.l.b16 %v1524
      %v1741 = vunpack.c.l.b16 %v1525
      %v1742 = vunpack.c.l.b16 %v1526
      %v1743 = vunpack.c.l.b16 %v1527
      %v1744 = vpack.c.b16 %v1637, %v1636
      %v1745 = vpack.c.b16 %v1639, %v1638
      %v1746 = vpack.c.b16 %v1641, %v1640
      %v1747 = vpack.c.b16 %v1643, %v1642
      %v1748 = vpack.c.b16 %v1645, %v1644
      %v1749 = vpack.c.b16 %v1647, %v1646
      %v1750 = vpack.c.b16 %v1649, %v1648
      %v1751 = vpack.c.b16 %v1651, %v1650
      %v1752 = vpack.c.b16 %v1653, %v1652
      %v1753 = vpack.c.b16 %v1655, %v1654
      %v1754 = vpack.c.b16 %v1657, %v1656
      %v1755 = vpack.c.b16 %v1659, %v1658
      %v1756 = vpack.c.b16 %v1661, %v1660
      %v1757 = vpack.c.b16 %v1663, %v1662
      %v1758 = vpack.c.b16 %v1665, %v1664
      %v1759 = vpack.c.b16 %v1667, %v1666
      %v1760 = vpack.c.b16 %v1669, %v1668
      %v1761 = vpack.c.b16 %v1671, %v1670
      %v1762 = vpack.c.b16 %v1673, %v1672
      %v1763 = vpack.c.b16 %v1675, %v1674
      %v1764 = vpack.c.b16 %v1677, %v1676
      %v1765 = vpack.c.b16 %v1679, %v1678
      %v1766 = vpack.c.b16 %v1681, %v1680
      %v1767 = vpack.c.b16 %v1683, %v1682
      %v1768 = vpack.c.b16 %v1685, %v1684
      %v1769 = vpack.c.b16 %v1687, %v1686
      %v1770 = vpack.c.b16 %v1689, %v1688
      %v1771 = vpack.c.b16 %v1691, %v1690
      %v1772 = vpack.c.b16 %v1693, %v1692
      %v1773 = vpack.c.b16 %v1695, %v1694
      %v1774 = vpack.c.b16 %v1697, %v1696
      %v1775 = vpack.c.b16 %v1699, %v1698
      %v1776 = vpack.c.b16 %v1701, %v1700
      %v1777 = vpack.c.b16 %v1703, %v1702
      %v1778 = vpack.c.b16 %v1705, %v1704
      %v1779 = vpack.c.b16 %v1707, %v1706
      %v1780 = vpack.c.b16 %v1709, %v1708
      %v1781 = vpack.c.b16 %v1711, %v1710
      %v1782 = vpack.c.b16 %v1713, %v1712
      %v1783 = vpack.c.b16 %v1715, %v1714
      %v1784 = vpack.c.b16 %v1717, %v1716
      %v1785 = vpack.c.b16 %v1719, %v1718
      %v1786 = vpack.c.b16 %v1721, %v1720
      %v1787 = vpack.c.b16 %v1723, %v1722
      %v1788 = vpack.c.b16 %v1725, %v1724
      %v1789 = vpack.c.b16 %v1727, %v1726
      %v1790 = vpack.c.b16 %v1729, %v1728
      %v1791 = vpack.c.b16 %v1731, %v1730
      %v1792 = vpack.c.b16 %v1733, %v1732
      %v1793 = vpack.c.b16 %v1735, %v1734
      %v1794 = vpack.c.b16 %v1737, %v1736
      %v1795 = vpack.c.b16 %v1739, %v1738
      %v1796 = vpack.c.b16 %v1741, %v1740
      %v1797 = vpack.c.b16 %v1743, %v1742
      %1852 = vmatprep.subr.bf16.mxu0 0
      %1853 = vmatpush1.bf16.msra.mxu0 %v1744
      %1854 = vmatprep.subr.bf16.mxu0 0
      %1855 = vmatpush1.bf16.msra.mxu0 %v1745
      %1856 = vmatprep.subr.bf16.mxu0 0
      %1857 = vmatpush1.bf16.msra.mxu0 %v1746
      %1858 = vmatprep.subr.bf16.mxu0 0
      %1859 = vmatpush1.bf16.msra.mxu0 %v1747
      %1860 = vmatprep.subr.bf16.mxu0 0
      %1861 = vmatpush1.bf16.msra.mxu0 %v1748
      %1862 = vmatprep.subr.bf16.mxu0 0
      %1863 = vmatpush1.bf16.msra.mxu0 %v1749
      %1864 = vmatprep.subr.bf16.mxu0 0
      %1865 = vmatpush1.bf16.msra.mxu0 %v1750
      %1866 = vmatprep.subr.bf16.mxu0 0
      %1867 = vmatpush1.bf16.msra.mxu0 %v1751
      %1868 = vmatprep.subr.bf16.mxu0 0
      %1869 = vmatpush1.bf16.msra.mxu0 %v1752
      %1870 = vmatprep.subr.bf16.mxu0 0
      %1871 = vmatpush1.bf16.msra.mxu0 %v1753
      %1872 = vmatprep.subr.bf16.mxu0 0
      %1873 = vmatpush1.bf16.msra.mxu0 %v1754
      %1874 = vmatprep.subr.bf16.mxu0 0
      %1875 = vmatpush1.bf16.msra.mxu0 %v1755
      %1876 = vmatprep.subr.bf16.mxu0 0
      %1877 = vmatpush1.bf16.msra.mxu0 %v1756
      %1878 = vmatprep.subr.bf16.mxu0 0
      %1879 = vmatpush1.bf16.msra.mxu0 %v1757
      %1880 = vmatprep.subr.bf16.mxu0 0
      %1881 = vmatpush1.bf16.msra.mxu0 %v1758
      %1882 = vmatprep.subr.bf16.mxu0 0
      %1883 = vmatpush1.bf16.msra.mxu0 %v1759
      %1884 = vmatprep.mubr.bf16.mxu0 %v315
      %1885 = vmatmul.mubr.bf16.gmra.mrb[0].mxu0 %v314
      %v1886 = vpop.f32.mrb[0].mxu0
      %v1887 = vadd.f32 0.0, %v1886
      %v1888 = vpop.f32.mrb[0].mxu0
      %v1889 = vpop.f32.mrb[0].mxu0
      %v1890 = vadd.f32 0.0, %v1889
      %v1891 = vpop.f32.mrb[0].mxu0
      %1892 = vdwg.mxu0
      %1893 = vmatprep.subr.bf16.mxu0 0
      %1894 = vmatpush1.bf16.msra.mxu0 %v1760
      %1895 = vmatprep.subr.bf16.mxu0 0
      %1896 = vmatpush1.bf16.msra.mxu0 %v1761
      %1897 = vmatprep.subr.bf16.mxu0 0
      %1898 = vmatpush1.bf16.msra.mxu0 %v1762
      %1899 = vmatprep.subr.bf16.mxu0 0
      %1900 = vmatpush1.bf16.msra.mxu0 %v1763
      %1901 = vmatprep.subr.bf16.mxu0 0
      %1902 = vmatpush1.bf16.msra.mxu0 %v1764
      %1903 = vmatprep.subr.bf16.mxu0 0
      %1904 = vmatpush1.bf16.msra.mxu0 %v1765
      %1905 = vmatprep.subr.bf16.mxu0 0
      %1906 = vmatpush1.bf16.msra.mxu0 %v1766
      %1907 = vmatprep.subr.bf16.mxu0 0
      %1908 = vmatpush1.bf16.msra.mxu0 %v1767
      %1909 = vmatprep.subr.bf16.mxu0 0
      %1910 = vmatpush1.bf16.msra.mxu0 %v1768
      %1911 = vmatprep.subr.bf16.mxu0 0
      %1912 = vmatpush1.bf16.msra.mxu0 %v1769
      %1913 = vmatprep.subr.bf16.mxu0 0
      %1914 = vmatpush1.bf16.msra.mxu0 %v1770
      %1915 = vmatprep.subr.bf16.mxu0 0
      %1916 = vmatpush1.bf16.msra.mxu0 %v1771
      %1917 = vmatprep.subr.bf16.mxu0 0
      %1918 = vmatpush1.bf16.msra.mxu0 %v1772
      %1919 = vmatprep.subr.bf16.mxu0 0
      %1920 = vmatpush1.bf16.msra.mxu0 %v1773
      %1921 = vmatprep.subr.bf16.mxu0 0
      %1922 = vmatpush1.bf16.msra.mxu0 %v1774
      %1923 = vmatprep.subr.bf16.mxu0 0
      %1924 = vmatpush1.bf16.msra.mxu0 %v1775
      %1925 = vmatprep.mubr.bf16.mxu0 %v317
      %1926 = vmatmul.mubr.bf16.gmra.mrb[0].mxu0 %v316
      %v1927 = vpop.f32.mrb[0].mxu0
      %v1928 = vadd.f32 %v1887, %v1927
      %v1929 = vpop.f32.mrb[0].mxu0
      %v1930 = vpop.f32.mrb[0].mxu0
      %v1931 = vadd.f32 %v1890, %v1930
      %v1932 = vpop.f32.mrb[0].mxu0
      %1933 = vdwg.mxu0
      %1934 = vmatprep.subr.bf16.mxu0 0
      %1935 = vmatpush1.bf16.msra.mxu0 %v1776
      %1936 = vmatprep.subr.bf16.mxu0 0
      %1937 = vmatpush1.bf16.msra.mxu0 %v1777
      %1938 = vmatprep.subr.bf16.mxu0 0
      %1939 = vmatpush1.bf16.msra.mxu0 %v1778
      %1940 = vmatprep.subr.bf16.mxu0 0
      %1941 = vmatpush1.bf16.msra.mxu0 %v1779
      %1942 = vmatprep.subr.bf16.mxu0 0
      %1943 = vmatpush1.bf16.msra.mxu0 %v1780
      %1944 = vmatprep.subr.bf16.mxu0 0
      %1945 = vmatpush1.bf16.msra.mxu0 %v1781
      %1946 = vmatprep.subr.bf16.mxu0 0
      %1947 = vmatpush1.bf16.msra.mxu0 %v1782
      %1948 = vmatprep.subr.bf16.mxu0 0
      %1949 = vmatpush1.bf16.msra.mxu0 %v1783
      %1950 = vmatprep.subr.bf16.mxu0 0
      %1951 = vmatpush1.bf16.msra.mxu0 %v1784
      %1952 = vmatprep.subr.bf16.mxu0 0
      %1953 = vmatpush1.bf16.msra.mxu0 %v1785
      %1954 = vmatprep.subr.bf16.mxu0 0
      %1955 = vmatpush1.bf16.msra.mxu0 %v1786
      %1956 = vmatprep.subr.bf16.mxu0 0
      %1957 = vmatpush1.bf16.msra.mxu0 %v1787
      %1958 = vmatprep.subr.bf16.mxu0 0
      %1959 = vmatpush1.bf16.msra.mxu0 %v1788
      %1960 = vmatprep.subr.bf16.mxu0 0
      %1961 = vmatpush1.bf16.msra.mxu0 %v1789
      %1962 = vmatprep.subr.bf16.mxu0 0
      %1963 = vmatpush1.bf16.msra.mxu0 %v1790
      %1964 = vmatprep.subr.bf16.mxu0 0
      %1965 = vmatpush1.bf16.msra.mxu0 %v1791
      %1966 = vmatprep.mubr.bf16.mxu0 %v319
      %1967 = vmatmul.mubr.bf16.gmra.mrb[0].mxu0 %v318
      %v1968 = vpop.f32.mrb[0].mxu0
      %v1969 = vadd.f32 %v1928, %v1968
      %v1970 = vpop.f32.mrb[0].mxu0
      %v1971 = vpop.f32.mrb[0].mxu0
      %v1972 = vadd.f32 %v1931, %v1971
      %v1973 = vpop.f32.mrb[0].mxu0
      %1974 = vdwg.mxu0
      %1975 = vmatprep.subr.bf16.mxu0 0
      %1976 = vmatpush1.bf16.msra.mxu0 %v1792
      %1977 = vmatprep.subr.bf16.mxu0 0
      %1978 = vmatpush1.bf16.msra.mxu0 %v1793
      %1979 = vmatprep.subr.bf16.mxu0 0
      %1980 = vmatpush1.bf16.msra.mxu0 %v1794
      %1981 = vmatprep.subr.bf16.mxu0 0
      %1982 = vmatpush1.bf16.msra.mxu0 %v1795
      %1983 = vmatprep.subr.bf16.mxu0 0
      %1984 = vmatpush1.bf16.msra.mxu0 %v1796
      %1985 = vmatprep.subr.bf16.mxu0 0
      %1986 = vmatpush1.bf16.msra.mxu0 %v1797
      %1987 = vmatprep.subr.bf16.mxu0 0
      %1988 = vmatpush1.bf16.msra.mxu0 0
      %1989 = vmatprep.subr.bf16.mxu0 0
      %1990 = vmatpush1.bf16.msra.mxu0 0
      %1991 = vmatprep.subr.bf16.mxu0 0
      %1992 = vmatpush1.bf16.msra.mxu0 0
      %1993 = vmatprep.subr.bf16.mxu0 0
      %1994 = vmatpush1.bf16.msra.mxu0 0
      %1995 = vmatprep.subr.bf16.mxu0 0
      %1996 = vmatpush1.bf16.msra.mxu0 0
      %1997 = vmatprep.subr.bf16.mxu0 0
      %1998 = vmatpush1.bf16.msra.mxu0 0
      %1999 = vmatprep.subr.bf16.mxu0 0
      %2000 = vmatpush1.bf16.msra.mxu0 0
      %2001 = vmatprep.subr.bf16.mxu0 0
      %2002 = vmatpush1.bf16.msra.mxu0 0
      %2003 = vmatprep.subr.bf16.mxu0 0
      %2004 = vmatpush1.bf16.msra.mxu0 0
      %2005 = vmatprep.subr.bf16.mxu0 0
      %2006 = vmatpush1.bf16.msra.mxu0 0
      %2007 = vmatprep.mubr.bf16.mxu0 0
      %2008 = vmatmul.mubr.bf16.gmra.mrb[0].mxu0 %v653
      %v2009 = vpop.f32.mrb[0].mxu0
      %v2010 = vadd.f32 %v1969, %v2009
      %v2011 = vpop.f32.mrb[0].mxu0
      %v2012 = vpop.f32.mrb[0].mxu0
      %v2013 = vadd.f32 %v1972, %v2012
      %v2014 = vpop.f32.mrb[0].mxu0
      %2015 = vdwg.mxu0
      %s2016 = scalar_lea.vmem %s174, 32
      %2017 = vst [vmem:[%s2016] sm:$0xff] %v2010
      %2018 = vst [vmem:[%s2016 + $0x8] sm:$0xff] %v2013
      %v2019 = vld [vmem:[%s166 + $0x1b0] sm:$0xf]
      %v2020 = vld [vmem:[%s166 + $0x1b4] sm:$0xf]
      %v2021 = vld [vmem:[%s166 + $0x1b8] sm:$0xf]
      %v2022 = vld [vmem:[%s166 + $0x1bc] sm:$0xf]
      %v2023 = vld [vmem:[%s166 + $0x1c0] sm:$0xf]
      %v2024 = vld [vmem:[%s166 + $0x1c4] sm:$0xf]
      %v2025 = vld [vmem:[%s166 + $0x1c8] sm:$0xf]
      %v2026 = vld [vmem:[%s166 + $0x1cc] sm:$0xf]
      %v2027 = vld [vmem:[%s166 + $0x1d0] sm:$0xf]
      %v2028 = vld [vmem:[%s166 + $0x1d4] sm:$0xf]
      %v2029 = vld [vmem:[%s166 + $0x1d8] sm:$0xf]
      %v2030 = vld [vmem:[%s166 + $0x1dc] sm:$0xf]
      %v2031 = vld [vmem:[%s166 + $0x1e0] sm:$0xf]
      %v2032 = vld [vmem:[%s166 + $0x1e4] sm:$0xf]
      %v2033 = vld [vmem:[%s166 + $0x1e8] sm:$0xf]
      %v2034 = vld [vmem:[%s166 + $0x1ec] sm:$0xf]
      %v2035 = vld [vmem:[%s166 + $0x1f0] sm:$0xf]
      %v2036 = vld [vmem:[%s166 + $0x1f4] sm:$0xf]
      %v2037 = vld [vmem:[%s166 + $0x1f8] sm:$0xf]
      %v2038 = vld [vmem:[%s166 + $0x1fc] sm:$0xf]
      %v2039 = vld [vmem:[%s166 + $0x200] sm:$0xf]
      %v2040 = vld [vmem:[%s166 + $0x204] sm:$0xf]
      %v2041 = vld [vmem:[%s166 + $0x208] sm:$0xf]
      %v2042 = vld [vmem:[%s166 + $0x20c] sm:$0xf]
      %v2043 = vld [vmem:[%s166 + $0x210] sm:$0xf]
      %v2044 = vld [vmem:[%s166 + $0x214] sm:$0xf]
      %v2045 = vld [vmem:[%s166 + $0x218] sm:$0xf]
      %v2046 = vld [vmem:[%s166 + $0x21c] sm:$0xf]
      %v2047 = vld [vmem:[%s166 + $0x220] sm:$0xf]
      %v2048 = vld [vmem:[%s166 + $0x224] sm:$0xf]
      %v2049 = vld [vmem:[%s166 + $0x228] sm:$0xf]
      %v2050 = vld [vmem:[%s166 + $0x22c] sm:$0xf]
      %v2051 = vld [vmem:[%s166 + $0x230] sm:$0xf]
      %v2052 = vld [vmem:[%s166 + $0x234] sm:$0xf]
      %v2053 = vld [vmem:[%s166 + $0x238] sm:$0xf]
      %v2054 = vld [vmem:[%s166 + $0x23c] sm:$0xf]
      %v2055 = vld [vmem:[%s166 + $0x240] sm:$0xf]
      %v2056 = vld [vmem:[%s166 + $0x244] sm:$0xf]
      %v2057 = vld [vmem:[%s166 + $0x248] sm:$0xf]
      %v2058 = vld [vmem:[%s166 + $0x24c] sm:$0xf]
      %v2059 = vld [vmem:[%s166 + $0x250] sm:$0xf]
      %v2060 = vld [vmem:[%s166 + $0x254] sm:$0xf]
      %v2061 = vld [vmem:[%s166 + $0x258] sm:$0xf]
      %v2062 = vld [vmem:[%s166 + $0x25c] sm:$0xf]
      %v2063 = vld [vmem:[%s166 + $0x260] sm:$0xf]
      %v2064 = vld [vmem:[%s166 + $0x264] sm:$0xf]
      %v2065 = vld [vmem:[%s166 + $0x268] sm:$0xf]
      %v2066 = vld [vmem:[%s166 + $0x26c] sm:$0xf]
      %v2067 = vld [vmem:[%s166 + $0x270] sm:$0xf]
      %v2068 = vld [vmem:[%s166 + $0x274] sm:$0xf]
      %v2069 = vld [vmem:[%s166 + $0x278] sm:$0xf]
      %v2070 = vld [vmem:[%s166 + $0x27c] sm:$0xf]
      %v2071 = vld [vmem:[%s166 + $0x280] sm:$0xf]
      %v2072 = vld [vmem:[%s166 + $0x284] sm:$0xf]
      %v2073 = vld [vmem:[%s166 + $0x288] sm:$0xf]
      %v2074 = vld [vmem:[%s166 + $0x28c] sm:$0xf]
      %v2075 = vld [vmem:[%s166 + $0x290] sm:$0xf]
      %v2076 = vld [vmem:[%s166 + $0x294] sm:$0xf]
      %v2077 = vld [vmem:[%s166 + $0x298] sm:$0xf]
      %v2078 = vld [vmem:[%s166 + $0x29c] sm:$0xf]
      %v2079 = vld [vmem:[%s166 + $0x2a0] sm:$0xf]
      %v2080 = vld [vmem:[%s166 + $0x2a4] sm:$0xf]
      %v2081 = vld [vmem:[%s166 + $0x2a8] sm:$0xf]
      %v2082 = vld [vmem:[%s166 + $0x2ac] sm:$0xf]
      %v2083 = vld [vmem:[%s166 + $0x2b0] sm:$0xf]
      %v2084 = vld [vmem:[%s166 + $0x2b4] sm:$0xf]
      %v2085 = vld [vmem:[%s166 + $0x2b8] sm:$0xf]
      %v2086 = vld [vmem:[%s166 + $0x2bc] sm:$0xf]
      %v2087 = vld [vmem:[%s166 + $0x2c0] sm:$0xf]
      %v2088 = vld [vmem:[%s166 + $0x2c4] sm:$0xf]
      %v2089 = vld [vmem:[%s166 + $0x2c8] sm:$0xf]
      %v2090 = vld [vmem:[%s166 + $0x2cc] sm:$0xf]
      %v2091 = vld [vmem:[%s166 + $0x2d0] sm:$0xf]
      %v2092 = vld [vmem:[%s166 + $0x2d4] sm:$0xf]
      %v2093 = vld [vmem:[%s166 + $0x2d8] sm:$0xf]
      %v2094 = vld [vmem:[%s166 + $0x2dc] sm:$0xf]
      %v2095 = vld [vmem:[%s166 + $0x2e0] sm:$0xf]
      %v2096 = vld [vmem:[%s166 + $0x2e4] sm:$0xf]
      %v2097 = vld [vmem:[%s166 + $0x2e8] sm:$0xf]
      %v2098 = vld [vmem:[%s166 + $0x2ec] sm:$0xf]
      %v2099 = vld [vmem:[%s166 + $0x2f0] sm:$0xf]
      %v2100 = vld [vmem:[%s166 + $0x2f4] sm:$0xf]
      %v2101 = vld [vmem:[%s166 + $0x2f8] sm:$0xf]
      %v2102 = vld [vmem:[%s166 + $0x2fc] sm:$0xf]
      %v2103 = vld [vmem:[%s166 + $0x300] sm:$0xf]
      %v2104 = vld [vmem:[%s166 + $0x304] sm:$0xf]
      %v2105 = vld [vmem:[%s166 + $0x308] sm:$0xf]
      %v2106 = vld [vmem:[%s166 + $0x30c] sm:$0xf]
      %v2107 = vld [vmem:[%s166 + $0x310] sm:$0xf]
      %v2108 = vld [vmem:[%s166 + $0x314] sm:$0xf]
      %v2109 = vld [vmem:[%s166 + $0x318] sm:$0xf]
      %v2110 = vld [vmem:[%s166 + $0x31c] sm:$0xf]
      %v2111 = vld [vmem:[%s166 + $0x320] sm:$0xf]
      %v2112 = vld [vmem:[%s166 + $0x324] sm:$0xf]
      %v2113 = vld [vmem:[%s166 + $0x328] sm:$0xf]
      %v2114 = vld [vmem:[%s166 + $0x32c] sm:$0xf]
      %v2115 = vld [vmem:[%s166 + $0x330] sm:$0xf]
      %v2116 = vld [vmem:[%s166 + $0x334] sm:$0xf]
      %v2117 = vld [vmem:[%s166 + $0x338] sm:$0xf]
      %v2118 = vld [vmem:[%s166 + $0x33c] sm:$0xf]
      %v2119 = vld [vmem:[%s166 + $0x340] sm:$0xf]
      %v2120 = vld [vmem:[%s166 + $0x344] sm:$0xf]
      %v2121 = vld [vmem:[%s166 + $0x348] sm:$0xf]
      %v2122 = vld [vmem:[%s166 + $0x34c] sm:$0xf]
      %v2123 = vld [vmem:[%s166 + $0x350] sm:$0xf]
      %v2124 = vld [vmem:[%s166 + $0x354] sm:$0xf]
      %v2125 = vld [vmem:[%s166 + $0x358] sm:$0xf]
      %v2126 = vld [vmem:[%s166 + $0x35c] sm:$0xf]
      %v2235 = vunpack.c.l.b16 %v2019
      %v2236 = vunpack.c.l.b16 %v2020
      %v2237 = vunpack.c.l.b16 %v2021
      %v2238 = vunpack.c.l.b16 %v2022
      %v2239 = vunpack.c.l.b16 %v2023
      %v2240 = vunpack.c.l.b16 %v2024
      %v2241 = vunpack.c.l.b16 %v2025
      %v2242 = vunpack.c.l.b16 %v2026
      %v2243 = vunpack.c.l.b16 %v2027
      %v2244 = vunpack.c.l.b16 %v2028
      %v2245 = vunpack.c.l.b16 %v2029
      %v2246 = vunpack.c.l.b16 %v2030
      %v2247 = vunpack.c.l.b16 %v2031
      %v2248 = vunpack.c.l.b16 %v2032
      %v2249 = vunpack.c.l.b16 %v2033
      %v2250 = vunpack.c.l.b16 %v2034
      %v2251 = vunpack.c.l.b16 %v2035
      %v2252 = vunpack.c.l.b16 %v2036
      %v2253 = vunpack.c.l.b16 %v2037
      %v2254 = vunpack.c.l.b16 %v2038
      %v2255 = vunpack.c.l.b16 %v2039
      %v2256 = vunpack.c.l.b16 %v2040
      %v2257 = vunpack.c.l.b16 %v2041
      %v2258 = vunpack.c.l.b16 %v2042
      %v2259 = vunpack.c.l.b16 %v2043
      %v2260 = vunpack.c.l.b16 %v2044
      %v2261 = vunpack.c.l.b16 %v2045
      %v2262 = vunpack.c.l.b16 %v2046
      %v2263 = vunpack.c.l.b16 %v2047
      %v2264 = vunpack.c.l.b16 %v2048
      %v2265 = vunpack.c.l.b16 %v2049
      %v2266 = vunpack.c.l.b16 %v2050
      %v2267 = vunpack.c.l.b16 %v2051
      %v2268 = vunpack.c.l.b16 %v2052
      %v2269 = vunpack.c.l.b16 %v2053
      %v2270 = vunpack.c.l.b16 %v2054
      %v2271 = vunpack.c.l.b16 %v2055
      %v2272 = vunpack.c.l.b16 %v2056
      %v2273 = vunpack.c.l.b16 %v2057
      %v2274 = vunpack.c.l.b16 %v2058
      %v2275 = vunpack.c.l.b16 %v2059
      %v2276 = vunpack.c.l.b16 %v2060
      %v2277 = vunpack.c.l.b16 %v2061
      %v2278 = vunpack.c.l.b16 %v2062
      %v2279 = vunpack.c.l.b16 %v2063
      %v2280 = vunpack.c.l.b16 %v2064
      %v2281 = vunpack.c.l.b16 %v2065
      %v2282 = vunpack.c.l.b16 %v2066
      %v2283 = vunpack.c.l.b16 %v2067
      %v2284 = vunpack.c.l.b16 %v2068
      %v2285 = vunpack.c.l.b16 %v2069
      %v2286 = vunpack.c.l.b16 %v2070
      %v2287 = vunpack.c.l.b16 %v2071
      %v2288 = vunpack.c.l.b16 %v2072
      %v2289 = vunpack.c.l.b16 %v2073
      %v2290 = vunpack.c.l.b16 %v2074
      %v2291 = vunpack.c.l.b16 %v2075
      %v2292 = vunpack.c.l.b16 %v2076
      %v2293 = vunpack.c.l.b16 %v2077
      %v2294 = vunpack.c.l.b16 %v2078
      %v2295 = vunpack.c.l.b16 %v2079
      %v2296 = vunpack.c.l.b16 %v2080
      %v2297 = vunpack.c.l.b16 %v2081
      %v2298 = vunpack.c.l.b16 %v2082
      %v2299 = vunpack.c.l.b16 %v2083
      %v2300 = vunpack.c.l.b16 %v2084
      %v2301 = vunpack.c.l.b16 %v2085
      %v2302 = vunpack.c.l.b16 %v2086
      %v2303 = vunpack.c.l.b16 %v2087
      %v2304 = vunpack.c.l.b16 %v2088
      %v2305 = vunpack.c.l.b16 %v2089
      %v2306 = vunpack.c.l.b16 %v2090
      %v2307 = vunpack.c.l.b16 %v2091
      %v2308 = vunpack.c.l.b16 %v2092
      %v2309 = vunpack.c.l.b16 %v2093
      %v2310 = vunpack.c.l.b16 %v2094
      %v2311 = vunpack.c.l.b16 %v2095
      %v2312 = vunpack.c.l.b16 %v2096
      %v2313 = vunpack.c.l.b16 %v2097
      %v2314 = vunpack.c.l.b16 %v2098
      %v2315 = vunpack.c.l.b16 %v2099
      %v2316 = vunpack.c.l.b16 %v2100
      %v2317 = vunpack.c.l.b16 %v2101
      %v2318 = vunpack.c.l.b16 %v2102
      %v2319 = vunpack.c.l.b16 %v2103
      %v2320 = vunpack.c.l.b16 %v2104
      %v2321 = vunpack.c.l.b16 %v2105
      %v2322 = vunpack.c.l.b16 %v2106
      %v2323 = vunpack.c.l.b16 %v2107
      %v2324 = vunpack.c.l.b16 %v2108
      %v2325 = vunpack.c.l.b16 %v2109
      %v2326 = vunpack.c.l.b16 %v2110
      %v2327 = vunpack.c.l.b16 %v2111
      %v2328 = vunpack.c.l.b16 %v2112
      %v2329 = vunpack.c.l.b16 %v2113
      %v2330 = vunpack.c.l.b16 %v2114
      %v2331 = vunpack.c.l.b16 %v2115
      %v2332 = vunpack.c.l.b16 %v2116
      %v2333 = vunpack.c.l.b16 %v2117
      %v2334 = vunpack.c.l.b16 %v2118
      %v2335 = vunpack.c.l.b16 %v2119
      %v2336 = vunpack.c.l.b16 %v2120
      %v2337 = vunpack.c.l.b16 %v2121
      %v2338 = vunpack.c.l.b16 %v2122
      %v2339 = vunpack.c.l.b16 %v2123
      %v2340 = vunpack.c.l.b16 %v2124
      %v2341 = vunpack.c.l.b16 %v2125
      %v2342 = vunpack.c.l.b16 %v2126
      %v2343 = vpack.c.b16 %v2236, %v2235
      %v2344 = vpack.c.b16 %v2238, %v2237
      %v2345 = vpack.c.b16 %v2240, %v2239
      %v2346 = vpack.c.b16 %v2242, %v2241
      %v2347 = vpack.c.b16 %v2244, %v2243
      %v2348 = vpack.c.b16 %v2246, %v2245
      %v2349 = vpack.c.b16 %v2248, %v2247
      %v2350 = vpack.c.b16 %v2250, %v2249
      %v2351 = vpack.c.b16 %v2252, %v2251
      %v2352 = vpack.c.b16 %v2254, %v2253
      %v2353 = vpack.c.b16 %v2256, %v2255
      %v2354 = vpack.c.b16 %v2258, %v2257
      %v2355 = vpack.c.b16 %v2260, %v2259
      %v2356 = vpack.c.b16 %v2262, %v2261
      %v2357 = vpack.c.b16 %v2264, %v2263
      %v2358 = vpack.c.b16 %v2266, %v2265
      %v2359 = vpack.c.b16 %v2268, %v2267
      %v2360 = vpack.c.b16 %v2270, %v2269
      %v2361 = vpack.c.b16 %v2272, %v2271
      %v2362 = vpack.c.b16 %v2274, %v2273
      %v2363 = vpack.c.b16 %v2276, %v2275
      %v2364 = vpack.c.b16 %v2278, %v2277
      %v2365 = vpack.c.b16 %v2280, %v2279
      %v2366 = vpack.c.b16 %v2282, %v2281
      %v2367 = vpack.c.b16 %v2284, %v2283
      %v2368 = vpack.c.b16 %v2286, %v2285
      %v2369 = vpack.c.b16 %v2288, %v2287
      %v2370 = vpack.c.b16 %v2290, %v2289
      %v2371 = vpack.c.b16 %v2292, %v2291
      %v2372 = vpack.c.b16 %v2294, %v2293
      %v2373 = vpack.c.b16 %v2296, %v2295
      %v2374 = vpack.c.b16 %v2298, %v2297
      %v2375 = vpack.c.b16 %v2300, %v2299
      %v2376 = vpack.c.b16 %v2302, %v2301
      %v2377 = vpack.c.b16 %v2304, %v2303
      %v2378 = vpack.c.b16 %v2306, %v2305
      %v2379 = vpack.c.b16 %v2308, %v2307
      %v2380 = vpack.c.b16 %v2310, %v2309
      %v2381 = vpack.c.b16 %v2312, %v2311
      %v2382 = vpack.c.b16 %v2314, %v2313
      %v2383 = vpack.c.b16 %v2316, %v2315
      %v2384 = vpack.c.b16 %v2318, %v2317
      %v2385 = vpack.c.b16 %v2320, %v2319
      %v2386 = vpack.c.b16 %v2322, %v2321
      %v2387 = vpack.c.b16 %v2324, %v2323
      %v2388 = vpack.c.b16 %v2326, %v2325
      %v2389 = vpack.c.b16 %v2328, %v2327
      %v2390 = vpack.c.b16 %v2330, %v2329
      %v2391 = vpack.c.b16 %v2332, %v2331
      %v2392 = vpack.c.b16 %v2334, %v2333
      %v2393 = vpack.c.b16 %v2336, %v2335
      %v2394 = vpack.c.b16 %v2338, %v2337
      %v2395 = vpack.c.b16 %v2340, %v2339
      %v2396 = vpack.c.b16 %v2342, %v2341
      %2451 = vmatprep.subr.bf16.mxu0 0
      %2452 = vmatpush1.bf16.msra.mxu0 %v2343
      %2453 = vmatprep.subr.bf16.mxu0 0
      %2454 = vmatpush1.bf16.msra.mxu0 %v2344
      %2455 = vmatprep.subr.bf16.mxu0 0
      %2456 = vmatpush1.bf16.msra.mxu0 %v2345
      %2457 = vmatprep.subr.bf16.mxu0 0
      %2458 = vmatpush1.bf16.msra.mxu0 %v2346
      %2459 = vmatprep.subr.bf16.mxu0 0
      %2460 = vmatpush1.bf16.msra.mxu0 %v2347
      %2461 = vmatprep.subr.bf16.mxu0 0
      %2462 = vmatpush1.bf16.msra.mxu0 %v2348
      %2463 = vmatprep.subr.bf16.mxu0 0
      %2464 = vmatpush1.bf16.msra.mxu0 %v2349
      %2465 = vmatprep.subr.bf16.mxu0 0
      %2466 = vmatpush1.bf16.msra.mxu0 %v2350
      %2467 = vmatprep.subr.bf16.mxu0 0
      %2468 = vmatpush1.bf16.msra.mxu0 %v2351
      %2469 = vmatprep.subr.bf16.mxu0 0
      %2470 = vmatpush1.bf16.msra.mxu0 %v2352
      %2471 = vmatprep.subr.bf16.mxu0 0
      %2472 = vmatpush1.bf16.msra.mxu0 %v2353
      %2473 = vmatprep.subr.bf16.mxu0 0
      %2474 = vmatpush1.bf16.msra.mxu0 %v2354
      %2475 = vmatprep.subr.bf16.mxu0 0
      %2476 = vmatpush1.bf16.msra.mxu0 %v2355
      %2477 = vmatprep.subr.bf16.mxu0 0
      %2478 = vmatpush1.bf16.msra.mxu0 %v2356
      %2479 = vmatprep.subr.bf16.mxu0 0
      %2480 = vmatpush1.bf16.msra.mxu0 %v2357
      %2481 = vmatprep.subr.bf16.mxu0 0
      %2482 = vmatpush1.bf16.msra.mxu0 %v2358
      %2483 = vmatprep.mubr.bf16.mxu0 %v315
      %2484 = vmatmul.mubr.bf16.gmra.mrb[0].mxu0 %v314
      %v2485 = vpop.f32.mrb[0].mxu0
      %v2486 = vadd.f32 0.0, %v2485
      %v2487 = vpop.f32.mrb[0].mxu0
      %v2488 = vpop.f32.mrb[0].mxu0
      %v2489 = vadd.f32 0.0, %v2488
      %v2490 = vpop.f32.mrb[0].mxu0
      %2491 = vdwg.mxu0
      %2492 = vmatprep.subr.bf16.mxu0 0
      %2493 = vmatpush1.bf16.msra.mxu0 %v2359
      %2494 = vmatprep.subr.bf16.mxu0 0
      %2495 = vmatpush1.bf16.msra.mxu0 %v2360
      %2496 = vmatprep.subr.bf16.mxu0 0
      %2497 = vmatpush1.bf16.msra.mxu0 %v2361
      %2498 = vmatprep.subr.bf16.mxu0 0
      %2499 = vmatpush1.bf16.msra.mxu0 %v2362
      %2500 = vmatprep.subr.bf16.mxu0 0
      %2501 = vmatpush1.bf16.msra.mxu0 %v2363
      %2502 = vmatprep.subr.bf16.mxu0 0
      %2503 = vmatpush1.bf16.msra.mxu0 %v2364
      %2504 = vmatprep.subr.bf16.mxu0 0
      %2505 = vmatpush1.bf16.msra.mxu0 %v2365
      %2506 = vmatprep.subr.bf16.mxu0 0
      %2507 = vmatpush1.bf16.msra.mxu0 %v2366
      %2508 = vmatprep.subr.bf16.mxu0 0
      %2509 = vmatpush1.bf16.msra.mxu0 %v2367
      %2510 = vmatprep.subr.bf16.mxu0 0
      %2511 = vmatpush1.bf16.msra.mxu0 %v2368
      %2512 = vmatprep.subr.bf16.mxu0 0
      %2513 = vmatpush1.bf16.msra.mxu0 %v2369
      %2514 = vmatprep.subr.bf16.mxu0 0
      %2515 = vmatpush1.bf16.msra.mxu0 %v2370
      %2516 = vmatprep.subr.bf16.mxu0 0
      %2517 = vmatpush1.bf16.msra.mxu0 %v2371
      %2518 = vmatprep.subr.bf16.mxu0 0
      %2519 = vmatpush1.bf16.msra.mxu0 %v2372
      %2520 = vmatprep.subr.bf16.mxu0 0
      %2521 = vmatpush1.bf16.msra.mxu0 %v2373
      %2522 = vmatprep.subr.bf16.mxu0 0
      %2523 = vmatpush1.bf16.msra.mxu0 %v2374
      %2524 = vmatprep.mubr.bf16.mxu0 %v317
      %2525 = vmatmul.mubr.bf16.gmra.mrb[0].mxu0 %v316
      %v2526 = vpop.f32.mrb[0].mxu0
      %v2527 = vadd.f32 %v2486, %v2526
      %v2528 = vpop.f32.mrb[0].mxu0
      %v2529 = vpop.f32.mrb[0].mxu0
      %v2530 = vadd.f32 %v2489, %v2529
      %v2531 = vpop.f32.mrb[0].mxu0
      %2532 = vdwg.mxu0
      %2533 = vmatprep.subr.bf16.mxu0 0
      %2534 = vmatpush1.bf16.msra.mxu0 %v2375
      %2535 = vmatprep.subr.bf16.mxu0 0
      %2536 = vmatpush1.bf16.msra.mxu0 %v2376
      %2537 = vmatprep.subr.bf16.mxu0 0
      %2538 = vmatpush1.bf16.msra.mxu0 %v2377
      %2539 = vmatprep.subr.bf16.mxu0 0
      %2540 = vmatpush1.bf16.msra.mxu0 %v2378
      %2541 = vmatprep.subr.bf16.mxu0 0
      %2542 = vmatpush1.bf16.msra.mxu0 %v2379
      %2543 = vmatprep.subr.bf16.mxu0 0
      %2544 = vmatpush1.bf16.msra.mxu0 %v2380
      %2545 = vmatprep.subr.bf16.mxu0 0
      %2546 = vmatpush1.bf16.msra.mxu0 %v2381
      %2547 = vmatprep.subr.bf16.mxu0 0
      %2548 = vmatpush1.bf16.msra.mxu0 %v2382
      %2549 = vmatprep.subr.bf16.mxu0 0
      %2550 = vmatpush1.bf16.msra.mxu0 %v2383
      %2551 = vmatprep.subr.bf16.mxu0 0
      %2552 = vmatpush1.bf16.msra.mxu0 %v2384
      %2553 = vmatprep.subr.bf16.mxu0 0
      %2554 = vmatpush1.bf16.msra.mxu0 %v2385
      %2555 = vmatprep.subr.bf16.mxu0 0
      %2556 = vmatpush1.bf16.msra.mxu0 %v2386
      %2557 = vmatprep.subr.bf16.mxu0 0
      %2558 = vmatpush1.bf16.msra.mxu0 %v2387
      %2559 = vmatprep.subr.bf16.mxu0 0
      %2560 = vmatpush1.bf16.msra.mxu0 %v2388
      %2561 = vmatprep.subr.bf16.mxu0 0
      %2562 = vmatpush1.bf16.msra.mxu0 %v2389
      %2563 = vmatprep.subr.bf16.mxu0 0
      %2564 = vmatpush1.bf16.msra.mxu0 %v2390
      %2565 = vmatprep.mubr.bf16.mxu0 %v319
      %2566 = vmatmul.mubr.bf16.gmra.mrb[0].mxu0 %v318
      %v2567 = vpop.f32.mrb[0].mxu0
      %v2568 = vadd.f32 %v2527, %v2567
      %v2569 = vpop.f32.mrb[0].mxu0
      %v2570 = vpop.f32.mrb[0].mxu0
      %v2571 = vadd.f32 %v2530, %v2570
      %v2572 = vpop.f32.mrb[0].mxu0
      %2573 = vdwg.mxu0
      %2574 = vmatprep.subr.bf16.mxu0 0
      %2575 = vmatpush1.bf16.msra.mxu0 %v2391
      %2576 = vmatprep.subr.bf16.mxu0 0
      %2577 = vmatpush1.bf16.msra.mxu0 %v2392
      %2578 = vmatprep.subr.bf16.mxu0 0
      %2579 = vmatpush1.bf16.msra.mxu0 %v2393
      %2580 = vmatprep.subr.bf16.mxu0 0
      %2581 = vmatpush1.bf16.msra.mxu0 %v2394
      %2582 = vmatprep.subr.bf16.mxu0 0
      %2583 = vmatpush1.bf16.msra.mxu0 %v2395
      %2584 = vmatprep.subr.bf16.mxu0 0
      %2585 = vmatpush1.bf16.msra.mxu0 %v2396
      %2586 = vmatprep.subr.bf16.mxu0 0
      %2587 = vmatpush1.bf16.msra.mxu0 0
      %2588 = vmatprep.subr.bf16.mxu0 0
      %2589 = vmatpush1.bf16.msra.mxu0 0
      %2590 = vmatprep.subr.bf16.mxu0 0
      %2591 = vmatpush1.bf16.msra.mxu0 0
      %2592 = vmatprep.subr.bf16.mxu0 0
      %2593 = vmatpush1.bf16.msra.mxu0 0
      %2594 = vmatprep.subr.bf16.mxu0 0
      %2595 = vmatpush1.bf16.msra.mxu0 0
      %2596 = vmatprep.subr.bf16.mxu0 0
      %2597 = vmatpush1.bf16.msra.mxu0 0
      %2598 = vmatprep.subr.bf16.mxu0 0
      %2599 = vmatpush1.bf16.msra.mxu0 0
      %2600 = vmatprep.subr.bf16.mxu0 0
      %2601 = vmatpush1.bf16.msra.mxu0 0
      %2602 = vmatprep.subr.bf16.mxu0 0
      %2603 = vmatpush1.bf16.msra.mxu0 0
      %2604 = vmatprep.subr.bf16.mxu0 0
      %2605 = vmatpush1.bf16.msra.mxu0 0
      %2606 = vmatprep.mubr.bf16.mxu0 0
      %2607 = vmatmul.mubr.bf16.gmra.mrb[0].mxu0 %v653
      %v2608 = vpop.f32.mrb[0].mxu0
      %v2609 = vadd.f32 %v2568, %v2608
      %v2610 = vpop.f32.mrb[0].mxu0
      %v2611 = vpop.f32.mrb[0].mxu0
      %v2612 = vadd.f32 %v2571, %v2611
      %v2613 = vpop.f32.mrb[0].mxu0
      %2614 = vdwg.mxu0
      %s2615 = scalar_lea.vmem %s174, 48
      %2616 = vst [vmem:[%s2615] sm:$0xff] %v2609
      %2617 = vst [vmem:[%s2615 + $0x8] sm:$0xff] %v2612
      %v2618 = vld [vmem:[%s166 + $0x240] sm:$0xf]
      %v2619 = vld [vmem:[%s166 + $0x244] sm:$0xf]
      %v2620 = vld [vmem:[%s166 + $0x248] sm:$0xf]
      %v2621 = vld [vmem:[%s166 + $0x24c] sm:$0xf]
      %v2622 = vld [vmem:[%s166 + $0x250] sm:$0xf]
      %v2623 = vld [vmem:[%s166 + $0x254] sm:$0xf]
      %v2624 = vld [vmem:[%s166 + $0x258] sm:$0xf]
      %v2625 = vld [vmem:[%s166 + $0x25c] sm:$0xf]
      %v2626 = vld [vmem:[%s166 + $0x260] sm:$0xf]
      %v2627 = vld [vmem:[%s166 + $0x264] sm:$0xf]
      %v2628 = vld [vmem:[%s166 + $0x268] sm:$0xf]
      %v2629 = vld [vmem:[%s166 + $0x26c] sm:$0xf]
      %v2630 = vld [vmem:[%s166 + $0x270] sm:$0xf]
      %v2631 = vld [vmem:[%s166 + $0x274] sm:$0xf]
      %v2632 = vld [vmem:[%s166 + $0x278] sm:$0xf]
      %v2633 = vld [vmem:[%s166 + $0x27c] sm:$0xf]
      %v2634 = vld [vmem:[%s166 + $0x280] sm:$0xf]
      %v2635 = vld [vmem:[%s166 + $0x284] sm:$0xf]
      %v2636 = vld [vmem:[%s166 + $0x288] sm:$0xf]
      %v2637 = vld [vmem:[%s166 + $0x28c] sm:$0xf]
      %v2638 = vld [vmem:[%s166 + $0x290] sm:$0xf]
      %v2639 = vld [vmem:[%s166 + $0x294] sm:$0xf]
      %v2640 = vld [vmem:[%s166 + $0x298] sm:$0xf]
      %v2641 = vld [vmem:[%s166 + $0x29c] sm:$0xf]
      %v2642 = vld [vmem:[%s166 + $0x2a0] sm:$0xf]
      %v2643 = vld [vmem:[%s166 + $0x2a4] sm:$0xf]
      %v2644 = vld [vmem:[%s166 + $0x2a8] sm:$0xf]
      %v2645 = vld [vmem:[%s166 + $0x2ac] sm:$0xf]
      %v2646 = vld [vmem:[%s166 + $0x2b0] sm:$0xf]
      %v2647 = vld [vmem:[%s166 + $0x2b4] sm:$0xf]
      %v2648 = vld [vmem:[%s166 + $0x2b8] sm:$0xf]
      %v2649 = vld [vmem:[%s166 + $0x2bc] sm:$0xf]
      %v2650 = vld [vmem:[%s166 + $0x2c0] sm:$0xf]
      %v2651 = vld [vmem:[%s166 + $0x2c4] sm:$0xf]
      %v2652 = vld [vmem:[%s166 + $0x2c8] sm:$0xf]
      %v2653 = vld [vmem:[%s166 + $0x2cc] sm:$0xf]
      %v2654 = vld [vmem:[%s166 + $0x2d0] sm:$0xf]
      %v2655 = vld [vmem:[%s166 + $0x2d4] sm:$0xf]
      %v2656 = vld [vmem:[%s166 + $0x2d8] sm:$0xf]
      %v2657 = vld [vmem:[%s166 + $0x2dc] sm:$0xf]
      %v2658 = vld [vmem:[%s166 + $0x2e0] sm:$0xf]
      %v2659 = vld [vmem:[%s166 + $0x2e4] sm:$0xf]
      %v2660 = vld [vmem:[%s166 + $0x2e8] sm:$0xf]
      %v2661 = vld [vmem:[%s166 + $0x2ec] sm:$0xf]
      %v2662 = vld [vmem:[%s166 + $0x2f0] sm:$0xf]
      %v2663 = vld [vmem:[%s166 + $0x2f4] sm:$0xf]
      %v2664 = vld [vmem:[%s166 + $0x2f8] sm:$0xf]
      %v2665 = vld [vmem:[%s166 + $0x2fc] sm:$0xf]
      %v2666 = vld [vmem:[%s166 + $0x300] sm:$0xf]
      %v2667 = vld [vmem:[%s166 + $0x304] sm:$0xf]
      %v2668 = vld [vmem:[%s166 + $0x308] sm:$0xf]
      %v2669 = vld [vmem:[%s166 + $0x30c] sm:$0xf]
      %v2670 = vld [vmem:[%s166 + $0x310] sm:$0xf]
      %v2671 = vld [vmem:[%s166 + $0x314] sm:$0xf]
      %v2672 = vld [vmem:[%s166 + $0x318] sm:$0xf]
      %v2673 = vld [vmem:[%s166 + $0x31c] sm:$0xf]
      %v2674 = vld [vmem:[%s166 + $0x320] sm:$0xf]
      %v2675 = vld [vmem:[%s166 + $0x324] sm:$0xf]
      %v2676 = vld [vmem:[%s166 + $0x328] sm:$0xf]
      %v2677 = vld [vmem:[%s166 + $0x32c] sm:$0xf]
      %v2678 = vld [vmem:[%s166 + $0x330] sm:$0xf]
      %v2679 = vld [vmem:[%s166 + $0x334] sm:$0xf]
      %v2680 = vld [vmem:[%s166 + $0x338] sm:$0xf]
      %v2681 = vld [vmem:[%s166 + $0x33c] sm:$0xf]
      %v2682 = vld [vmem:[%s166 + $0x340] sm:$0xf]
      %v2683 = vld [vmem:[%s166 + $0x344] sm:$0xf]
      %v2684 = vld [vmem:[%s166 + $0x348] sm:$0xf]
      %v2685 = vld [vmem:[%s166 + $0x34c] sm:$0xf]
      %v2686 = vld [vmem:[%s166 + $0x350] sm:$0xf]
      %v2687 = vld [vmem:[%s166 + $0x354] sm:$0xf]
      %v2688 = vld [vmem:[%s166 + $0x358] sm:$0xf]
      %v2689 = vld [vmem:[%s166 + $0x35c] sm:$0xf]
      %v2690 = vld [vmem:[%s166 + $0x360] sm:$0xf]
      %v2691 = vld [vmem:[%s166 + $0x364] sm:$0xf]
      %v2692 = vld [vmem:[%s166 + $0x368] sm:$0xf]
      %v2693 = vld [vmem:[%s166 + $0x36c] sm:$0xf]
      %v2694 = vld [vmem:[%s166 + $0x370] sm:$0xf]
      %v2695 = vld [vmem:[%s166 + $0x374] sm:$0xf]
      %v2696 = vld [vmem:[%s166 + $0x378] sm:$0xf]
      %v2697 = vld [vmem:[%s166 + $0x37c] sm:$0xf]
      %v2698 = vld [vmem:[%s166 + $0x380] sm:$0xf]
      %v2699 = vld [vmem:[%s166 + $0x384] sm:$0xf]
      %v2700 = vld [vmem:[%s166 + $0x388] sm:$0xf]
      %v2701 = vld [vmem:[%s166 + $0x38c] sm:$0xf]
      %v2702 = vld [vmem:[%s166 + $0x390] sm:$0xf]
      %v2703 = vld [vmem:[%s166 + $0x394] sm:$0xf]
      %v2704 = vld [vmem:[%s166 + $0x398] sm:$0xf]
      %v2705 = vld [vmem:[%s166 + $0x39c] sm:$0xf]
      %v2706 = vld [vmem:[%s166 + $0x3a0] sm:$0xf]
      %v2707 = vld [vmem:[%s166 + $0x3a4] sm:$0xf]
      %v2708 = vld [vmem:[%s166 + $0x3a8] sm:$0xf]
      %v2709 = vld [vmem:[%s166 + $0x3ac] sm:$0xf]
      %v2710 = vld [vmem:[%s166 + $0x3b0] sm:$0xf]
      %v2711 = vld [vmem:[%s166 + $0x3b4] sm:$0xf]
      %v2712 = vld [vmem:[%s166 + $0x3b8] sm:$0xf]
      %v2713 = vld [vmem:[%s166 + $0x3bc] sm:$0xf]
      %v2714 = vld [vmem:[%s166 + $0x3c0] sm:$0xf]
      %v2715 = vld [vmem:[%s166 + $0x3c4] sm:$0xf]
      %v2716 = vld [vmem:[%s166 + $0x3c8] sm:$0xf]
      %v2717 = vld [vmem:[%s166 + $0x3cc] sm:$0xf]
      %v2718 = vld [vmem:[%s166 + $0x3d0] sm:$0xf]
      %v2719 = vld [vmem:[%s166 + $0x3d4] sm:$0xf]
      %v2720 = vld [vmem:[%s166 + $0x3d8] sm:$0xf]
      %v2721 = vld [vmem:[%s166 + $0x3dc] sm:$0xf]
      %v2722 = vld [vmem:[%s166 + $0x3e0] sm:$0xf]
      %v2723 = vld [vmem:[%s166 + $0x3e4] sm:$0xf]
      %v2724 = vld [vmem:[%s166 + $0x3e8] sm:$0xf]
      %v2725 = vld [vmem:[%s166 + $0x3ec] sm:$0xf]
      %v2834 = vunpack.c.l.b16 %v2618
      %v2835 = vunpack.c.l.b16 %v2619
      %v2836 = vunpack.c.l.b16 %v2620
      %v2837 = vunpack.c.l.b16 %v2621
      %v2838 = vunpack.c.l.b16 %v2622
      %v2839 = vunpack.c.l.b16 %v2623
      %v2840 = vunpack.c.l.b16 %v2624
      %v2841 = vunpack.c.l.b16 %v2625
      %v2842 = vunpack.c.l.b16 %v2626
      %v2843 = vunpack.c.l.b16 %v2627
      %v2844 = vunpack.c.l.b16 %v2628
      %v2845 = vunpack.c.l.b16 %v2629
      %v2846 = vunpack.c.l.b16 %v2630
      %v2847 = vunpack.c.l.b16 %v2631
      %v2848 = vunpack.c.l.b16 %v2632
      %v2849 = vunpack.c.l.b16 %v2633
      %v2850 = vunpack.c.l.b16 %v2634
      %v2851 = vunpack.c.l.b16 %v2635
      %v2852 = vunpack.c.l.b16 %v2636
      %v2853 = vunpack.c.l.b16 %v2637
      %v2854 = vunpack.c.l.b16 %v2638
      %v2855 = vunpack.c.l.b16 %v2639
      %v2856 = vunpack.c.l.b16 %v2640
      %v2857 = vunpack.c.l.b16 %v2641
      %v2858 = vunpack.c.l.b16 %v2642
      %v2859 = vunpack.c.l.b16 %v2643
      %v2860 = vunpack.c.l.b16 %v2644
      %v2861 = vunpack.c.l.b16 %v2645
      %v2862 = vunpack.c.l.b16 %v2646
      %v2863 = vunpack.c.l.b16 %v2647
      %v2864 = vunpack.c.l.b16 %v2648
      %v2865 = vunpack.c.l.b16 %v2649
      %v2866 = vunpack.c.l.b16 %v2650
      %v2867 = vunpack.c.l.b16 %v2651
      %v2868 = vunpack.c.l.b16 %v2652
      %v2869 = vunpack.c.l.b16 %v2653
      %v2870 = vunpack.c.l.b16 %v2654
      %v2871 = vunpack.c.l.b16 %v2655
      %v2872 = vunpack.c.l.b16 %v2656
      %v2873 = vunpack.c.l.b16 %v2657
      %v2874 = vunpack.c.l.b16 %v2658
      %v2875 = vunpack.c.l.b16 %v2659
      %v2876 = vunpack.c.l.b16 %v2660
      %v2877 = vunpack.c.l.b16 %v2661
      %v2878 = vunpack.c.l.b16 %v2662
      %v2879 = vunpack.c.l.b16 %v2663
      %v2880 = vunpack.c.l.b16 %v2664
      %v2881 = vunpack.c.l.b16 %v2665
      %v2882 = vunpack.c.l.b16 %v2666
      %v2883 = vunpack.c.l.b16 %v2667
      %v2884 = vunpack.c.l.b16 %v2668
      %v2885 = vunpack.c.l.b16 %v2669
      %v2886 = vunpack.c.l.b16 %v2670
      %v2887 = vunpack.c.l.b16 %v2671
      %v2888 = vunpack.c.l.b16 %v2672
      %v2889 = vunpack.c.l.b16 %v2673
      %v2890 = vunpack.c.l.b16 %v2674
      %v2891 = vunpack.c.l.b16 %v2675
      %v2892 = vunpack.c.l.b16 %v2676
      %v2893 = vunpack.c.l.b16 %v2677
      %v2894 = vunpack.c.l.b16 %v2678
      %v2895 = vunpack.c.l.b16 %v2679
      %v2896 = vunpack.c.l.b16 %v2680
      %v2897 = vunpack.c.l.b16 %v2681
      %v2898 = vunpack.c.l.b16 %v2682
      %v2899 = vunpack.c.l.b16 %v2683
      %v2900 = vunpack.c.l.b16 %v2684
      %v2901 = vunpack.c.l.b16 %v2685
      %v2902 = vunpack.c.l.b16 %v2686
      %v2903 = vunpack.c.l.b16 %v2687
      %v2904 = vunpack.c.l.b16 %v2688
      %v2905 = vunpack.c.l.b16 %v2689
      %v2906 = vunpack.c.l.b16 %v2690
      %v2907 = vunpack.c.l.b16 %v2691
      %v2908 = vunpack.c.l.b16 %v2692
      %v2909 = vunpack.c.l.b16 %v2693
      %v2910 = vunpack.c.l.b16 %v2694
      %v2911 = vunpack.c.l.b16 %v2695
      %v2912 = vunpack.c.l.b16 %v2696
      %v2913 = vunpack.c.l.b16 %v2697
      %v2914 = vunpack.c.l.b16 %v2698
      %v2915 = vunpack.c.l.b16 %v2699
      %v2916 = vunpack.c.l.b16 %v2700
      %v2917 = vunpack.c.l.b16 %v2701
      %v2918 = vunpack.c.l.b16 %v2702
      %v2919 = vunpack.c.l.b16 %v2703
      %v2920 = vunpack.c.l.b16 %v2704
      %v2921 = vunpack.c.l.b16 %v2705
      %v2922 = vunpack.c.l.b16 %v2706
      %v2923 = vunpack.c.l.b16 %v2707
      %v2924 = vunpack.c.l.b16 %v2708
      %v2925 = vunpack.c.l.b16 %v2709
      %v2926 = vunpack.c.l.b16 %v2710
      %v2927 = vunpack.c.l.b16 %v2711
      %v2928 = vunpack.c.l.b16 %v2712
      %v2929 = vunpack.c.l.b16 %v2713
      %v2930 = vunpack.c.l.b16 %v2714
      %v2931 = vunpack.c.l.b16 %v2715
      %v2932 = vunpack.c.l.b16 %v2716
      %v2933 = vunpack.c.l.b16 %v2717
      %v2934 = vunpack.c.l.b16 %v2718
      %v2935 = vunpack.c.l.b16 %v2719
      %v2936 = vunpack.c.l.b16 %v2720
      %v2937 = vunpack.c.l.b16 %v2721
      %v2938 = vunpack.c.l.b16 %v2722
      %v2939 = vunpack.c.l.b16 %v2723
      %v2940 = vunpack.c.l.b16 %v2724
      %v2941 = vunpack.c.l.b16 %v2725
      %v2942 = vpack.c.b16 %v2835, %v2834
      %v2943 = vpack.c.b16 %v2837, %v2836
      %v2944 = vpack.c.b16 %v2839, %v2838
      %v2945 = vpack.c.b16 %v2841, %v2840
      %v2946 = vpack.c.b16 %v2843, %v2842
      %v2947 = vpack.c.b16 %v2845, %v2844
      %v2948 = vpack.c.b16 %v2847, %v2846
      %v2949 = vpack.c.b16 %v2849, %v2848
      %v2950 = vpack.c.b16 %v2851, %v2850
      %v2951 = vpack.c.b16 %v2853, %v2852
      %v2952 = vpack.c.b16 %v2855, %v2854
      %v2953 = vpack.c.b16 %v2857, %v2856
      %v2954 = vpack.c.b16 %v2859, %v2858
      %v2955 = vpack.c.b16 %v2861, %v2860
      %v2956 = vpack.c.b16 %v2863, %v2862
      %v2957 = vpack.c.b16 %v2865, %v2864
      %v2958 = vpack.c.b16 %v2867, %v2866
      %v2959 = vpack.c.b16 %v2869, %v2868
      %v2960 = vpack.c.b16 %v2871, %v2870
      %v2961 = vpack.c.b16 %v2873, %v2872
      %v2962 = vpack.c.b16 %v2875, %v2874
      %v2963 = vpack.c.b16 %v2877, %v2876
      %v2964 = vpack.c.b16 %v2879, %v2878
      %v2965 = vpack.c.b16 %v2881, %v2880
      %v2966 = vpack.c.b16 %v2883, %v2882
      %v2967 = vpack.c.b16 %v2885, %v2884
      %v2968 = vpack.c.b16 %v2887, %v2886
      %v2969 = vpack.c.b16 %v2889, %v2888
      %v2970 = vpack.c.b16 %v2891, %v2890
      %v2971 = vpack.c.b16 %v2893, %v2892
      %v2972 = vpack.c.b16 %v2895, %v2894
      %v2973 = vpack.c.b16 %v2897, %v2896
      %v2974 = vpack.c.b16 %v2899, %v2898
      %v2975 = vpack.c.b16 %v2901, %v2900
      %v2976 = vpack.c.b16 %v2903, %v2902
      %v2977 = vpack.c.b16 %v2905, %v2904
      %v2978 = vpack.c.b16 %v2907, %v2906
      %v2979 = vpack.c.b16 %v2909, %v2908
      %v2980 = vpack.c.b16 %v2911, %v2910
      %v2981 = vpack.c.b16 %v2913, %v2912
      %v2982 = vpack.c.b16 %v2915, %v2914
      %v2983 = vpack.c.b16 %v2917, %v2916
      %v2984 = vpack.c.b16 %v2919, %v2918
      %v2985 = vpack.c.b16 %v2921, %v2920
      %v2986 = vpack.c.b16 %v2923, %v2922
      %v2987 = vpack.c.b16 %v2925, %v2924
      %v2988 = vpack.c.b16 %v2927, %v2926
      %v2989 = vpack.c.b16 %v2929, %v2928
      %v2990 = vpack.c.b16 %v2931, %v2930
      %v2991 = vpack.c.b16 %v2933, %v2932
      %v2992 = vpack.c.b16 %v2935, %v2934
      %v2993 = vpack.c.b16 %v2937, %v2936
      %v2994 = vpack.c.b16 %v2939, %v2938
      %v2995 = vpack.c.b16 %v2941, %v2940
      %3050 = vmatprep.subr.bf16.mxu0 0
      %3051 = vmatpush1.bf16.msra.mxu0 %v2942
      %3052 = vmatprep.subr.bf16.mxu0 0
      %3053 = vmatpush1.bf16.msra.mxu0 %v2943
      %3054 = vmatprep.subr.bf16.mxu0 0
      %3055 = vmatpush1.bf16.msra.mxu0 %v2944
      %3056 = vmatprep.subr.bf16.mxu0 0
      %3057 = vmatpush1.bf16.msra.mxu0 %v2945
      %3058 = vmatprep.subr.bf16.mxu0 0
      %3059 = vmatpush1.bf16.msra.mxu0 %v2946
      %3060 = vmatprep.subr.bf16.mxu0 0
      %3061 = vmatpush1.bf16.msra.mxu0 %v2947
      %3062 = vmatprep.subr.bf16.mxu0 0
      %3063 = vmatpush1.bf16.msra.mxu0 %v2948
      %3064 = vmatprep.subr.bf16.mxu0 0
      %3065 = vmatpush1.bf16.msra.mxu0 %v2949
      %3066 = vmatprep.subr.bf16.mxu0 0
      %3067 = vmatpush1.bf16.msra.mxu0 %v2950
      %3068 = vmatprep.subr.bf16.mxu0 0
      %3069 = vmatpush1.bf16.msra.mxu0 %v2951
      %3070 = vmatprep.subr.bf16.mxu0 0
      %3071 = vmatpush1.bf16.msra.mxu0 %v2952
      %3072 = vmatprep.subr.bf16.mxu0 0
      %3073 = vmatpush1.bf16.msra.mxu0 %v2953
      %3074 = vmatprep.subr.bf16.mxu0 0
      %3075 = vmatpush1.bf16.msra.mxu0 %v2954
      %3076 = vmatprep.subr.bf16.mxu0 0
      %3077 = vmatpush1.bf16.msra.mxu0 %v2955
      %3078 = vmatprep.subr.bf16.mxu0 0
      %3079 = vmatpush1.bf16.msra.mxu0 %v2956
      %3080 = vmatprep.subr.bf16.mxu0 0
      %3081 = vmatpush1.bf16.msra.mxu0 %v2957
      %3082 = vmatprep.mubr.bf16.mxu0 %v315
      %3083 = vmatmul.mubr.bf16.gmra.mrb[0].mxu0 %v314
      %v3084 = vpop.f32.mrb[0].mxu0
      %v3085 = vadd.f32 0.0, %v3084
      %v3086 = vpop.f32.mrb[0].mxu0
      %v3087 = vpop.f32.mrb[0].mxu0
      %v3088 = vadd.f32 0.0, %v3087
      %v3089 = vpop.f32.mrb[0].mxu0
      %3090 = vdwg.mxu0
      %3091 = vmatprep.subr.bf16.mxu0 0
      %3092 = vmatpush1.bf16.msra.mxu0 %v2958
      %3093 = vmatprep.subr.bf16.mxu0 0
      %3094 = vmatpush1.bf16.msra.mxu0 %v2959
      %3095 = vmatprep.subr.bf16.mxu0 0
      %3096 = vmatpush1.bf16.msra.mxu0 %v2960
      %3097 = vmatprep.subr.bf16.mxu0 0
      %3098 = vmatpush1.bf16.msra.mxu0 %v2961
      %3099 = vmatprep.subr.bf16.mxu0 0
      %3100 = vmatpush1.bf16.msra.mxu0 %v2962
      %3101 = vmatprep.subr.bf16.mxu0 0
      %3102 = vmatpush1.bf16.msra.mxu0 %v2963
      %3103 = vmatprep.subr.bf16.mxu0 0
      %3104 = vmatpush1.bf16.msra.mxu0 %v2964
      %3105 = vmatprep.subr.bf16.mxu0 0
      %3106 = vmatpush1.bf16.msra.mxu0 %v2965
      %3107 = vmatprep.subr.bf16.mxu0 0
      %3108 = vmatpush1.bf16.msra.mxu0 %v2966
      %3109 = vmatprep.subr.bf16.mxu0 0
      %3110 = vmatpush1.bf16.msra.mxu0 %v2967
      %3111 = vmatprep.subr.bf16.mxu0 0
      %3112 = vmatpush1.bf16.msra.mxu0 %v2968
      %3113 = vmatprep.subr.bf16.mxu0 0
      %3114 = vmatpush1.bf16.msra.mxu0 %v2969
      %3115 = vmatprep.subr.bf16.mxu0 0
      %3116 = vmatpush1.bf16.msra.mxu0 %v2970
      %3117 = vmatprep.subr.bf16.mxu0 0
      %3118 = vmatpush1.bf16.msra.mxu0 %v2971
      %3119 = vmatprep.subr.bf16.mxu0 0
      %3120 = vmatpush1.bf16.msra.mxu0 %v2972
      %3121 = vmatprep.subr.bf16.mxu0 0
      %3122 = vmatpush1.bf16.msra.mxu0 %v2973
      %3123 = vmatprep.mubr.bf16.mxu0 %v317
      %3124 = vmatmul.mubr.bf16.gmra.mrb[0].mxu0 %v316
      %v3125 = vpop.f32.mrb[0].mxu0
      %v3126 = vadd.f32 %v3085, %v3125
      %v3127 = vpop.f32.mrb[0].mxu0
      %v3128 = vpop.f32.mrb[0].mxu0
      %v3129 = vadd.f32 %v3088, %v3128
      %v3130 = vpop.f32.mrb[0].mxu0
      %3131 = vdwg.mxu0
      %3132 = vmatprep.subr.bf16.mxu0 0
      %3133 = vmatpush1.bf16.msra.mxu0 %v2974
      %3134 = vmatprep.subr.bf16.mxu0 0
      %3135 = vmatpush1.bf16.msra.mxu0 %v2975
      %3136 = vmatprep.subr.bf16.mxu0 0
      %3137 = vmatpush1.bf16.msra.mxu0 %v2976
      %3138 = vmatprep.subr.bf16.mxu0 0
      %3139 = vmatpush1.bf16.msra.mxu0 %v2977
      %3140 = vmatprep.subr.bf16.mxu0 0
      %3141 = vmatpush1.bf16.msra.mxu0 %v2978
      %3142 = vmatprep.subr.bf16.mxu0 0
      %3143 = vmatpush1.bf16.msra.mxu0 %v2979
      %3144 = vmatprep.subr.bf16.mxu0 0
      %3145 = vmatpush1.bf16.msra.mxu0 %v2980
      %3146 = vmatprep.subr.bf16.mxu0 0
      %3147 = vmatpush1.bf16.msra.mxu0 %v2981
      %3148 = vmatprep.subr.bf16.mxu0 0
      %3149 = vmatpush1.bf16.msra.mxu0 %v2982
      %3150 = vmatprep.subr.bf16.mxu0 0
      %3151 = vmatpush1.bf16.msra.mxu0 %v2983
      %3152 = vmatprep.subr.bf16.mxu0 0
      %3153 = vmatpush1.bf16.msra.mxu0 %v2984
      %3154 = vmatprep.subr.bf16.mxu0 0
      %3155 = vmatpush1.bf16.msra.mxu0 %v2985
      %3156 = vmatprep.subr.bf16.mxu0 0
      %3157 = vmatpush1.bf16.msra.mxu0 %v2986
      %3158 = vmatprep.subr.bf16.mxu0 0
      %3159 = vmatpush1.bf16.msra.mxu0 %v2987
      %3160 = vmatprep.subr.bf16.mxu0 0
      %3161 = vmatpush1.bf16.msra.mxu0 %v2988
      %3162 = vmatprep.subr.bf16.mxu0 0
      %3163 = vmatpush1.bf16.msra.mxu0 %v2989
      %3164 = vmatprep.mubr.bf16.mxu0 %v319
      %3165 = vmatmul.mubr.bf16.gmra.mrb[0].mxu0 %v318
      %v3166 = vpop.f32.mrb[0].mxu0
      %v3167 = vadd.f32 %v3126, %v3166
      %v3168 = vpop.f32.mrb[0].mxu0
      %v3169 = vpop.f32.mrb[0].mxu0
      %v3170 = vadd.f32 %v3129, %v3169
      %v3171 = vpop.f32.mrb[0].mxu0
      %3172 = vdwg.mxu0
      %3173 = vmatprep.subr.bf16.mxu0 0
      %3174 = vmatpush1.bf16.msra.mxu0 %v2990
      %3175 = vmatprep.subr.bf16.mxu0 0
      %3176 = vmatpush1.bf16.msra.mxu0 %v2991
      %3177 = vmatprep.subr.bf16.mxu0 0
      %3178 = vmatpush1.bf16.msra.mxu0 %v2992
      %3179 = vmatprep.subr.bf16.mxu0 0
      %3180 = vmatpush1.bf16.msra.mxu0 %v2993
      %3181 = vmatprep.subr.bf16.mxu0 0
      %3182 = vmatpush1.bf16.msra.mxu0 %v2994
      %3183 = vmatprep.subr.bf16.mxu0 0
      %3184 = vmatpush1.bf16.msra.mxu0 %v2995
      %3185 = vmatprep.subr.bf16.mxu0 0
      %3186 = vmatpush1.bf16.msra.mxu0 0
      %3187 = vmatprep.subr.bf16.mxu0 0
      %3188 = vmatpush1.bf16.msra.mxu0 0
      %3189 = vmatprep.subr.bf16.mxu0 0
      %3190 = vmatpush1.bf16.msra.mxu0 0
      %3191 = vmatprep.subr.bf16.mxu0 0
      %3192 = vmatpush1.bf16.msra.mxu0 0
      %3193 = vmatprep.subr.bf16.mxu0 0
      %3194 = vmatpush1.bf16.msra.mxu0 0
      %3195 = vmatprep.subr.bf16.mxu0 0
      %3196 = vmatpush1.bf16.msra.mxu0 0
      %3197 = vmatprep.subr.bf16.mxu0 0
      %3198 = vmatpush1.bf16.msra.mxu0 0
      %3199 = vmatprep.subr.bf16.mxu0 0
      %3200 = vmatpush1.bf16.msra.mxu0 0
      %3201 = vmatprep.subr.bf16.mxu0 0
      %3202 = vmatpush1.bf16.msra.mxu0 0
      %3203 = vmatprep.subr.bf16.mxu0 0
      %3204 = vmatpush1.bf16.msra.mxu0 0
      %3205 = vmatprep.mubr.bf16.mxu0 0
      %3206 = vmatmul.mubr.bf16.gmra.mrb[0].mxu0 %v653
      %v3207 = vpop.f32.mrb[0].mxu0
      %v3208 = vadd.f32 %v3167, %v3207
      %v3209 = vpop.f32.mrb[0].mxu0
      %v3210 = vpop.f32.mrb[0].mxu0
      %v3211 = vadd.f32 %v3170, %v3210
      %v3212 = vpop.f32.mrb[0].mxu0
      %3213 = vdwg.mxu0
      %s3214 = scalar_lea.vmem %s174, 64
      %3215 = vst [vmem:[%s3214] sm:$0xff] %v3208
      %3216 = vst [vmem:[%s3214 + $0x8] sm:$0xff] %v3211
      %v3217 = vld [vmem:[%s166 + $0x2d0] sm:$0xf]
      %v3218 = vld [vmem:[%s166 + $0x2d4] sm:$0xf]
      %v3219 = vld [vmem:[%s166 + $0x2d8] sm:$0xf]
      %v3220 = vld [vmem:[%s166 + $0x2dc] sm:$0xf]
      %v3221 = vld [vmem:[%s166 + $0x2e0] sm:$0xf]
      %v3222 = vld [vmem:[%s166 + $0x2e4] sm:$0xf]
      %v3223 = vld [vmem:[%s166 + $0x2e8] sm:$0xf]
      %v3224 = vld [vmem:[%s166 + $0x2ec] sm:$0xf]
      %v3225 = vld [vmem:[%s166 + $0x2f0] sm:$0xf]
      %v3226 = vld [vmem:[%s166 + $0x2f4] sm:$0xf]
      %v3227 = vld [vmem:[%s166 + $0x2f8] sm:$0xf]
      %v3228 = vld [vmem:[%s166 + $0x2fc] sm:$0xf]
      %v3229 = vld [vmem:[%s166 + $0x300] sm:$0xf]
      %v3230 = vld [vmem:[%s166 + $0x304] sm:$0xf]
      %v3231 = vld [vmem:[%s166 + $0x308] sm:$0xf]
      %v3232 = vld [vmem:[%s166 + $0x30c] sm:$0xf]
      %v3233 = vld [vmem:[%s166 + $0x310] sm:$0xf]
      %v3234 = vld [vmem:[%s166 + $0x314] sm:$0xf]
      %v3235 = vld [vmem:[%s166 + $0x318] sm:$0xf]
      %v3236 = vld [vmem:[%s166 + $0x31c] sm:$0xf]
      %v3237 = vld [vmem:[%s166 + $0x320] sm:$0xf]
      %v3238 = vld [vmem:[%s166 + $0x324] sm:$0xf]
      %v3239 = vld [vmem:[%s166 + $0x328] sm:$0xf]
      %v3240 = vld [vmem:[%s166 + $0x32c] sm:$0xf]
      %v3241 = vld [vmem:[%s166 + $0x330] sm:$0xf]
      %v3242 = vld [vmem:[%s166 + $0x334] sm:$0xf]
      %v3243 = vld [vmem:[%s166 + $0x338] sm:$0xf]
      %v3244 = vld [vmem:[%s166 + $0x33c] sm:$0xf]
      %v3245 = vld [vmem:[%s166 + $0x340] sm:$0xf]
      %v3246 = vld [vmem:[%s166 + $0x344] sm:$0xf]
      %v3247 = vld [vmem:[%s166 + $0x348] sm:$0xf]
      %v3248 = vld [vmem:[%s166 + $0x34c] sm:$0xf]
      %v3249 = vld [vmem:[%s166 + $0x350] sm:$0xf]
      %v3250 = vld [vmem:[%s166 + $0x354] sm:$0xf]
      %v3251 = vld [vmem:[%s166 + $0x358] sm:$0xf]
      %v3252 = vld [vmem:[%s166 + $0x35c] sm:$0xf]
      %v3253 = vld [vmem:[%s166 + $0x360] sm:$0xf]
      %v3254 = vld [vmem:[%s166 + $0x364] sm:$0xf]
      %v3255 = vld [vmem:[%s166 + $0x368] sm:$0xf]
      %v3256 = vld [vmem:[%s166 + $0x36c] sm:$0xf]
      %v3257 = vld [vmem:[%s166 + $0x370] sm:$0xf]
      %v3258 = vld [vmem:[%s166 + $0x374] sm:$0xf]
      %v3259 = vld [vmem:[%s166 + $0x378] sm:$0xf]
      %v3260 = vld [vmem:[%s166 + $0x37c] sm:$0xf]
      %v3261 = vld [vmem:[%s166 + $0x380] sm:$0xf]
      %v3262 = vld [vmem:[%s166 + $0x384] sm:$0xf]
      %v3263 = vld [vmem:[%s166 + $0x388] sm:$0xf]
      %v3264 = vld [vmem:[%s166 + $0x38c] sm:$0xf]
      %v3265 = vld [vmem:[%s166 + $0x390] sm:$0xf]
      %v3266 = vld [vmem:[%s166 + $0x394] sm:$0xf]
      %v3267 = vld [vmem:[%s166 + $0x398] sm:$0xf]
      %v3268 = vld [vmem:[%s166 + $0x39c] sm:$0xf]
      %v3269 = vld [vmem:[%s166 + $0x3a0] sm:$0xf]
      %v3270 = vld [vmem:[%s166 + $0x3a4] sm:$0xf]
      %v3271 = vld [vmem:[%s166 + $0x3a8] sm:$0xf]
      %v3272 = vld [vmem:[%s166 + $0x3ac] sm:$0xf]
      %v3273 = vld [vmem:[%s166 + $0x3b0] sm:$0xf]
      %v3274 = vld [vmem:[%s166 + $0x3b4] sm:$0xf]
      %v3275 = vld [vmem:[%s166 + $0x3b8] sm:$0xf]
      %v3276 = vld [vmem:[%s166 + $0x3bc] sm:$0xf]
      %v3277 = vld [vmem:[%s166 + $0x3c0] sm:$0xf]
      %v3278 = vld [vmem:[%s166 + $0x3c4] sm:$0xf]
      %v3279 = vld [vmem:[%s166 + $0x3c8] sm:$0xf]
      %v3280 = vld [vmem:[%s166 + $0x3cc] sm:$0xf]
      %v3281 = vld [vmem:[%s166 + $0x3d0] sm:$0xf]
      %v3282 = vld [vmem:[%s166 + $0x3d4] sm:$0xf]
      %v3283 = vld [vmem:[%s166 + $0x3d8] sm:$0xf]
      %v3284 = vld [vmem:[%s166 + $0x3dc] sm:$0xf]
      %v3285 = vld [vmem:[%s166 + $0x3e0] sm:$0xf]
      %v3286 = vld [vmem:[%s166 + $0x3e4] sm:$0xf]
      %v3287 = vld [vmem:[%s166 + $0x3e8] sm:$0xf]
      %v3288 = vld [vmem:[%s166 + $0x3ec] sm:$0xf]
      %v3289 = vld [vmem:[%s166 + $0x3f0] sm:$0xf]
      %v3290 = vld [vmem:[%s166 + $0x3f4] sm:$0xf]
      %v3291 = vld [vmem:[%s166 + $0x3f8] sm:$0xf]
      %v3292 = vld [vmem:[%s166 + $0x3fc] sm:$0xf]
      %v3293 = vld [vmem:[%s166 + $0x400] sm:$0xf]
      %v3294 = vld [vmem:[%s166 + $0x404] sm:$0xf]
      %v3295 = vld [vmem:[%s166 + $0x408] sm:$0xf]
      %v3296 = vld [vmem:[%s166 + $0x40c] sm:$0xf]
      %v3297 = vld [vmem:[%s166 + $0x410] sm:$0xf]
      %v3298 = vld [vmem:[%s166 + $0x414] sm:$0xf]
      %v3299 = vld [vmem:[%s166 + $0x418] sm:$0xf]
      %v3300 = vld [vmem:[%s166 + $0x41c] sm:$0xf]
      %v3301 = vld [vmem:[%s166 + $0x420] sm:$0xf]
      %v3302 = vld [vmem:[%s166 + $0x424] sm:$0xf]
      %v3303 = vld [vmem:[%s166 + $0x428] sm:$0xf]
      %v3304 = vld [vmem:[%s166 + $0x42c] sm:$0xf]
      %v3305 = vld [vmem:[%s166 + $0x430] sm:$0xf]
      %v3306 = vld [vmem:[%s166 + $0x434] sm:$0xf]
      %v3307 = vld [vmem:[%s166 + $0x438] sm:$0xf]
      %v3308 = vld [vmem:[%s166 + $0x43c] sm:$0xf]
      %v3309 = vld [vmem:[%s166 + $0x440] sm:$0xf]
      %v3310 = vld [vmem:[%s166 + $0x444] sm:$0xf]
      %v3311 = vld [vmem:[%s166 + $0x448] sm:$0xf]
      %v3312 = vld [vmem:[%s166 + $0x44c] sm:$0xf]
      %v3313 = vld [vmem:[%s166 + $0x450] sm:$0xf]
      %v3314 = vld [vmem:[%s166 + $0x454] sm:$0xf]
      %v3315 = vld [vmem:[%s166 + $0x458] sm:$0xf]
      %v3316 = vld [vmem:[%s166 + $0x45c] sm:$0xf]
      %v3317 = vld [vmem:[%s166 + $0x460] sm:$0xf]
      %v3318 = vld [vmem:[%s166 + $0x464] sm:$0xf]
      %v3319 = vld [vmem:[%s166 + $0x468] sm:$0xf]
      %v3320 = vld [vmem:[%s166 + $0x46c] sm:$0xf]
      %v3321 = vld [vmem:[%s166 + $0x470] sm:$0xf]
      %v3322 = vld [vmem:[%s166 + $0x474] sm:$0xf]
      %v3323 = vld [vmem:[%s166 + $0x478] sm:$0xf]
      %v3324 = vld [vmem:[%s166 + $0x47c] sm:$0xf]
      %v3433 = vunpack.c.l.b16 %v3217
      %v3434 = vunpack.c.l.b16 %v3218
      %v3435 = vunpack.c.l.b16 %v3219
      %v3436 = vunpack.c.l.b16 %v3220
      %v3437 = vunpack.c.l.b16 %v3221
      %v3438 = vunpack.c.l.b16 %v3222
      %v3439 = vunpack.c.l.b16 %v3223
      %v3440 = vunpack.c.l.b16 %v3224
      %v3441 = vunpack.c.l.b16 %v3225
      %v3442 = vunpack.c.l.b16 %v3226
      %v3443 = vunpack.c.l.b16 %v3227
      %v3444 = vunpack.c.l.b16 %v3228
      %v3445 = vunpack.c.l.b16 %v3229
      %v3446 = vunpack.c.l.b16 %v3230
      %v3447 = vunpack.c.l.b16 %v3231
      %v3448 = vunpack.c.l.b16 %v3232
      %v3449 = vunpack.c.l.b16 %v3233
      %v3450 = vunpack.c.l.b16 %v3234
      %v3451 = vunpack.c.l.b16 %v3235
      %v3452 = vunpack.c.l.b16 %v3236
      %v3453 = vunpack.c.l.b16 %v3237
      %v3454 = vunpack.c.l.b16 %v3238
      %v3455 = vunpack.c.l.b16 %v3239
      %v3456 = vunpack.c.l.b16 %v3240
      %v3457 = vunpack.c.l.b16 %v3241
      %v3458 = vunpack.c.l.b16 %v3242
      %v3459 = vunpack.c.l.b16 %v3243
      %v3460 = vunpack.c.l.b16 %v3244
      %v3461 = vunpack.c.l.b16 %v3245
      %v3462 = vunpack.c.l.b16 %v3246
      %v3463 = vunpack.c.l.b16 %v3247
      %v3464 = vunpack.c.l.b16 %v3248
      %v3465 = vunpack.c.l.b16 %v3249
      %v3466 = vunpack.c.l.b16 %v3250
      %v3467 = vunpack.c.l.b16 %v3251
      %v3468 = vunpack.c.l.b16 %v3252
      %v3469 = vunpack.c.l.b16 %v3253
      %v3470 = vunpack.c.l.b16 %v3254
      %v3471 = vunpack.c.l.b16 %v3255
      %v3472 = vunpack.c.l.b16 %v3256
      %v3473 = vunpack.c.l.b16 %v3257
      %v3474 = vunpack.c.l.b16 %v3258
      %v3475 = vunpack.c.l.b16 %v3259
      %v3476 = vunpack.c.l.b16 %v3260
      %v3477 = vunpack.c.l.b16 %v3261
      %v3478 = vunpack.c.l.b16 %v3262
      %v3479 = vunpack.c.l.b16 %v3263
      %v3480 = vunpack.c.l.b16 %v3264
      %v3481 = vunpack.c.l.b16 %v3265
      %v3482 = vunpack.c.l.b16 %v3266
      %v3483 = vunpack.c.l.b16 %v3267
      %v3484 = vunpack.c.l.b16 %v3268
      %v3485 = vunpack.c.l.b16 %v3269
      %v3486 = vunpack.c.l.b16 %v3270
      %v3487 = vunpack.c.l.b16 %v3271
      %v3488 = vunpack.c.l.b16 %v3272
      %v3489 = vunpack.c.l.b16 %v3273
      %v3490 = vunpack.c.l.b16 %v3274
      %v3491 = vunpack.c.l.b16 %v3275
      %v3492 = vunpack.c.l.b16 %v3276
      %v3493 = vunpack.c.l.b16 %v3277
      %v3494 = vunpack.c.l.b16 %v3278
      %v3495 = vunpack.c.l.b16 %v3279
      %v3496 = vunpack.c.l.b16 %v3280
      %v3497 = vunpack.c.l.b16 %v3281
      %v3498 = vunpack.c.l.b16 %v3282
      %v3499 = vunpack.c.l.b16 %v3283
      %v3500 = vunpack.c.l.b16 %v3284
      %v3501 = vunpack.c.l.b16 %v3285
      %v3502 = vunpack.c.l.b16 %v3286
      %v3503 = vunpack.c.l.b16 %v3287
      %v3504 = vunpack.c.l.b16 %v3288
      %v3505 = vunpack.c.l.b16 %v3289
      %v3506 = vunpack.c.l.b16 %v3290
      %v3507 = vunpack.c.l.b16 %v3291
      %v3508 = vunpack.c.l.b16 %v3292
      %v3509 = vunpack.c.l.b16 %v3293
      %v3510 = vunpack.c.l.b16 %v3294
      %v3511 = vunpack.c.l.b16 %v3295
      %v3512 = vunpack.c.l.b16 %v3296
      %v3513 = vunpack.c.l.b16 %v3297
      %v3514 = vunpack.c.l.b16 %v3298
      %v3515 = vunpack.c.l.b16 %v3299
      %v3516 = vunpack.c.l.b16 %v3300
      %v3517 = vunpack.c.l.b16 %v3301
      %v3518 = vunpack.c.l.b16 %v3302
      %v3519 = vunpack.c.l.b16 %v3303
      %v3520 = vunpack.c.l.b16 %v3304
      %v3521 = vunpack.c.l.b16 %v3305
      %v3522 = vunpack.c.l.b16 %v3306
      %v3523 = vunpack.c.l.b16 %v3307
      %v3524 = vunpack.c.l.b16 %v3308
      %v3525 = vunpack.c.l.b16 %v3309
      %v3526 = vunpack.c.l.b16 %v3310
      %v3527 = vunpack.c.l.b16 %v3311
      %v3528 = vunpack.c.l.b16 %v3312
      %v3529 = vunpack.c.l.b16 %v3313
      %v3530 = vunpack.c.l.b16 %v3314
      %v3531 = vunpack.c.l.b16 %v3315
      %v3532 = vunpack.c.l.b16 %v3316
      %v3533 = vunpack.c.l.b16 %v3317
      %v3534 = vunpack.c.l.b16 %v3318
      %v3535 = vunpack.c.l.b16 %v3319
      %v3536 = vunpack.c.l.b16 %v3320
      %v3537 = vunpack.c.l.b16 %v3321
      %v3538 = vunpack.c.l.b16 %v3322
      %v3539 = vunpack.c.l.b16 %v3323
      %v3540 = vunpack.c.l.b16 %v3324
      %v3541 = vpack.c.b16 %v3434, %v3433
      %v3542 = vpack.c.b16 %v3436, %v3435
      %v3543 = vpack.c.b16 %v3438, %v3437
      %v3544 = vpack.c.b16 %v3440, %v3439
      %v3545 = vpack.c.b16 %v3442, %v3441
      %v3546 = vpack.c.b16 %v3444, %v3443
      %v3547 = vpack.c.b16 %v3446, %v3445
      %v3548 = vpack.c.b16 %v3448, %v3447
      %v3549 = vpack.c.b16 %v3450, %v3449
      %v3550 = vpack.c.b16 %v3452, %v3451
      %v3551 = vpack.c.b16 %v3454, %v3453
      %v3552 = vpack.c.b16 %v3456, %v3455
      %v3553 = vpack.c.b16 %v3458, %v3457
      %v3554 = vpack.c.b16 %v3460, %v3459
      %v3555 = vpack.c.b16 %v3462, %v3461
      %v3556 = vpack.c.b16 %v3464, %v3463
      %v3557 = vpack.c.b16 %v3466, %v3465
      %v3558 = vpack.c.b16 %v3468, %v3467
      %v3559 = vpack.c.b16 %v3470, %v3469
      %v3560 = vpack.c.b16 %v3472, %v3471
      %v3561 = vpack.c.b16 %v3474, %v3473
      %v3562 = vpack.c.b16 %v3476, %v3475
      %v3563 = vpack.c.b16 %v3478, %v3477
      %v3564 = vpack.c.b16 %v3480, %v3479
      %v3565 = vpack.c.b16 %v3482, %v3481
      %v3566 = vpack.c.b16 %v3484, %v3483
      %v3567 = vpack.c.b16 %v3486, %v3485
      %v3568 = vpack.c.b16 %v3488, %v3487
      %v3569 = vpack.c.b16 %v3490, %v3489
      %v3570 = vpack.c.b16 %v3492, %v3491
      %v3571 = vpack.c.b16 %v3494, %v3493
      %v3572 = vpack.c.b16 %v3496, %v3495
      %v3573 = vpack.c.b16 %v3498, %v3497
      %v3574 = vpack.c.b16 %v3500, %v3499
      %v3575 = vpack.c.b16 %v3502, %v3501
      %v3576 = vpack.c.b16 %v3504, %v3503
      %v3577 = vpack.c.b16 %v3506, %v3505
      %v3578 = vpack.c.b16 %v3508, %v3507
      %v3579 = vpack.c.b16 %v3510, %v3509
      %v3580 = vpack.c.b16 %v3512, %v3511
      %v3581 = vpack.c.b16 %v3514, %v3513
      %v3582 = vpack.c.b16 %v3516, %v3515
      %v3583 = vpack.c.b16 %v3518, %v3517
      %v3584 = vpack.c.b16 %v3520, %v3519
      %v3585 = vpack.c.b16 %v3522, %v3521
      %v3586 = vpack.c.b16 %v3524, %v3523
      %v3587 = vpack.c.b16 %v3526, %v3525
      %v3588 = vpack.c.b16 %v3528, %v3527
      %v3589 = vpack.c.b16 %v3530, %v3529
      %v3590 = vpack.c.b16 %v3532, %v3531
      %v3591 = vpack.c.b16 %v3534, %v3533
      %v3592 = vpack.c.b16 %v3536, %v3535
      %v3593 = vpack.c.b16 %v3538, %v3537
      %v3594 = vpack.c.b16 %v3540, %v3539
      %3649 = vmatprep.subr.bf16.mxu0 0
      %3650 = vmatpush1.bf16.msra.mxu0 %v3541
      %3651 = vmatprep.subr.bf16.mxu0 0
      %3652 = vmatpush1.bf16.msra.mxu0 %v3542
      %3653 = vmatprep.subr.bf16.mxu0 0
      %3654 = vmatpush1.bf16.msra.mxu0 %v3543
      %3655 = vmatprep.subr.bf16.mxu0 0
      %3656 = vmatpush1.bf16.msra.mxu0 %v3544
      %3657 = vmatprep.subr.bf16.mxu0 0
      %3658 = vmatpush1.bf16.msra.mxu0 %v3545
      %3659 = vmatprep.subr.bf16.mxu0 0
      %3660 = vmatpush1.bf16.msra.mxu0 %v3546
      %3661 = vmatprep.subr.bf16.mxu0 0
      %3662 = vmatpush1.bf16.msra.mxu0 %v3547
      %3663 = vmatprep.subr.bf16.mxu0 0
      %3664 = vmatpush1.bf16.msra.mxu0 %v3548
      %3665 = vmatprep.subr.bf16.mxu0 0
      %3666 = vmatpush1.bf16.msra.mxu0 %v3549
      %3667 = vmatprep.subr.bf16.mxu0 0
      %3668 = vmatpush1.bf16.msra.mxu0 %v3550
      %3669 = vmatprep.subr.bf16.mxu0 0
      %3670 = vmatpush1.bf16.msra.mxu0 %v3551
      %3671 = vmatprep.subr.bf16.mxu0 0
      %3672 = vmatpush1.bf16.msra.mxu0 %v3552
      %3673 = vmatprep.subr.bf16.mxu0 0
      %3674 = vmatpush1.bf16.msra.mxu0 %v3553
      %3675 = vmatprep.subr.bf16.mxu0 0
      %3676 = vmatpush1.bf16.msra.mxu0 %v3554
      %3677 = vmatprep.subr.bf16.mxu0 0
      %3678 = vmatpush1.bf16.msra.mxu0 %v3555
      %3679 = vmatprep.subr.bf16.mxu0 0
      %3680 = vmatpush1.bf16.msra.mxu0 %v3556
      %3681 = vmatprep.mubr.bf16.mxu0 %v315
      %3682 = vmatmul.mubr.bf16.gmra.mrb[0].mxu0 %v314
      %v3683 = vpop.f32.mrb[0].mxu0
      %v3684 = vadd.f32 0.0, %v3683
      %v3685 = vpop.f32.mrb[0].mxu0
      %v3686 = vpop.f32.mrb[0].mxu0
      %v3687 = vadd.f32 0.0, %v3686
      %v3688 = vpop.f32.mrb[0].mxu0
      %3689 = vdwg.mxu0
      %3690 = vmatprep.subr.bf16.mxu0 0
      %3691 = vmatpush1.bf16.msra.mxu0 %v3557
      %3692 = vmatprep.subr.bf16.mxu0 0
      %3693 = vmatpush1.bf16.msra.mxu0 %v3558
      %3694 = vmatprep.subr.bf16.mxu0 0
      %3695 = vmatpush1.bf16.msra.mxu0 %v3559
      %3696 = vmatprep.subr.bf16.mxu0 0
      %3697 = vmatpush1.bf16.msra.mxu0 %v3560
      %3698 = vmatprep.subr.bf16.mxu0 0
      %3699 = vmatpush1.bf16.msra.mxu0 %v3561
      %3700 = vmatprep.subr.bf16.mxu0 0
      %3701 = vmatpush1.bf16.msra.mxu0 %v3562
      %3702 = vmatprep.subr.bf16.mxu0 0
      %3703 = vmatpush1.bf16.msra.mxu0 %v3563
      %3704 = vmatprep.subr.bf16.mxu0 0
      %3705 = vmatpush1.bf16.msra.mxu0 %v3564
      %3706 = vmatprep.subr.bf16.mxu0 0
      %3707 = vmatpush1.bf16.msra.mxu0 %v3565
      %3708 = vmatprep.subr.bf16.mxu0 0
      %3709 = vmatpush1.bf16.msra.mxu0 %v3566
      %3710 = vmatprep.subr.bf16.mxu0 0
      %3711 = vmatpush1.bf16.msra.mxu0 %v3567
      %3712 = vmatprep.subr.bf16.mxu0 0
      %3713 = vmatpush1.bf16.msra.mxu0 %v3568
      %3714 = vmatprep.subr.bf16.mxu0 0
      %3715 = vmatpush1.bf16.msra.mxu0 %v3569
      %3716 = vmatprep.subr.bf16.mxu0 0
      %3717 = vmatpush1.bf16.msra.mxu0 %v3570
      %3718 = vmatprep.subr.bf16.mxu0 0
      %3719 = vmatpush1.bf16.msra.mxu0 %v3571
      %3720 = vmatprep.subr.bf16.mxu0 0
      %3721 = vmatpush1.bf16.msra.mxu0 %v3572
      %3722 = vmatprep.mubr.bf16.mxu0 %v317
      %3723 = vmatmul.mubr.bf16.gmra.mrb[0].mxu0 %v316
      %v3724 = vpop.f32.mrb[0].mxu0
      %v3725 = vadd.f32 %v3684, %v3724
      %v3726 = vpop.f32.mrb[0].mxu0
      %v3727 = vpop.f32.mrb[0].mxu0
      %v3728 = vadd.f32 %v3687, %v3727
      %v3729 = vpop.f32.mrb[0].mxu0
      %3730 = vdwg.mxu0
      %3731 = vmatprep.subr.bf16.mxu0 0
      %3732 = vmatpush1.bf16.msra.mxu0 %v3573
      %3733 = vmatprep.subr.bf16.mxu0 0
      %3734 = vmatpush1.bf16.msra.mxu0 %v3574
      %3735 = vmatprep.subr.bf16.mxu0 0
      %3736 = vmatpush1.bf16.msra.mxu0 %v3575
      %3737 = vmatprep.subr.bf16.mxu0 0
      %3738 = vmatpush1.bf16.msra.mxu0 %v3576
      %3739 = vmatprep.subr.bf16.mxu0 0
      %3740 = vmatpush1.bf16.msra.mxu0 %v3577
      %3741 = vmatprep.subr.bf16.mxu0 0
      %3742 = vmatpush1.bf16.msra.mxu0 %v3578
      %3743 = vmatprep.subr.bf16.mxu0 0
      %3744 = vmatpush1.bf16.msra.mxu0 %v3579
      %3745 = vmatprep.subr.bf16.mxu0 0
      %3746 = vmatpush1.bf16.msra.mxu0 %v3580
      %3747 = vmatprep.subr.bf16.mxu0 0
      %3748 = vmatpush1.bf16.msra.mxu0 %v3581
      %3749 = vmatprep.subr.bf16.mxu0 0
      %3750 = vmatpush1.bf16.msra.mxu0 %v3582
      %3751 = vmatprep.subr.bf16.mxu0 0
      %3752 = vmatpush1.bf16.msra.mxu0 %v3583
      %3753 = vmatprep.subr.bf16.mxu0 0
      %3754 = vmatpush1.bf16.msra.mxu0 %v3584
      %3755 = vmatprep.subr.bf16.mxu0 0
      %3756 = vmatpush1.bf16.msra.mxu0 %v3585
      %3757 = vmatprep.subr.bf16.mxu0 0
      %3758 = vmatpush1.bf16.msra.mxu0 %v3586
      %3759 = vmatprep.subr.bf16.mxu0 0
      %3760 = vmatpush1.bf16.msra.mxu0 %v3587
      %3761 = vmatprep.subr.bf16.mxu0 0
      %3762 = vmatpush1.bf16.msra.mxu0 %v3588
      %3763 = vmatprep.mubr.bf16.mxu0 %v319
      %3764 = vmatmul.mubr.bf16.gmra.mrb[0].mxu0 %v318
      %v3765 = vpop.f32.mrb[0].mxu0
      %v3766 = vadd.f32 %v3725, %v3765
      %v3767 = vpop.f32.mrb[0].mxu0
      %v3768 = vpop.f32.mrb[0].mxu0
      %v3769 = vadd.f32 %v3728, %v3768
      %v3770 = vpop.f32.mrb[0].mxu0
      %3771 = vdwg.mxu0
      %3772 = vmatprep.subr.bf16.mxu0 0
      %3773 = vmatpush1.bf16.msra.mxu0 %v3589
      %3774 = vmatprep.subr.bf16.mxu0 0
      %3775 = vmatpush1.bf16.msra.mxu0 %v3590
      %3776 = vmatprep.subr.bf16.mxu0 0
      %3777 = vmatpush1.bf16.msra.mxu0 %v3591
      %3778 = vmatprep.subr.bf16.mxu0 0
      %3779 = vmatpush1.bf16.msra.mxu0 %v3592
      %3780 = vmatprep.subr.bf16.mxu0 0
      %3781 = vmatpush1.bf16.msra.mxu0 %v3593
      %3782 = vmatprep.subr.bf16.mxu0 0
      %3783 = vmatpush1.bf16.msra.mxu0 %v3594
      %3784 = vmatprep.subr.bf16.mxu0 0
      %3785 = vmatpush1.bf16.msra.mxu0 0
      %3786 = vmatprep.subr.bf16.mxu0 0
      %3787 = vmatpush1.bf16.msra.mxu0 0
      %3788 = vmatprep.subr.bf16.mxu0 0
      %3789 = vmatpush1.bf16.msra.mxu0 0
      %3790 = vmatprep.subr.bf16.mxu0 0
      %3791 = vmatpush1.bf16.msra.mxu0 0
      %3792 = vmatprep.subr.bf16.mxu0 0
      %3793 = vmatpush1.bf16.msra.mxu0 0
      %3794 = vmatprep.subr.bf16.mxu0 0
      %3795 = vmatpush1.bf16.msra.mxu0 0
      %3796 = vmatprep.subr.bf16.mxu0 0
      %3797 = vmatpush1.bf16.msra.mxu0 0
      %3798 = vmatprep.subr.bf16.mxu0 0
      %3799 = vmatpush1.bf16.msra.mxu0 0
      %3800 = vmatprep.subr.bf16.mxu0 0
      %3801 = vmatpush1.bf16.msra.mxu0 0
      %3802 = vmatprep.subr.bf16.mxu0 0
      %3803 = vmatpush1.bf16.msra.mxu0 0
      %3804 = vmatprep.mubr.bf16.mxu0 0
      %3805 = vmatmul.mubr.bf16.gmra.mrb[0].mxu0 %v653
      %v3806 = vpop.f32.mrb[0].mxu0
      %v3807 = vadd.f32 %v3766, %v3806
      %v3808 = vpop.f32.mrb[0].mxu0
      %v3809 = vpop.f32.mrb[0].mxu0
      %v3810 = vadd.f32 %v3769, %v3809
      %v3811 = vpop.f32.mrb[0].mxu0
      %3812 = vdwg.mxu0
      %s3813 = scalar_lea.vmem %s174, 80
      %3814 = vst [vmem:[%s3813] sm:$0xff] %v3807
      %3815 = vst [vmem:[%s3813 + $0x8] sm:$0xff] %v3810
      %p3816 = scmp.lt.s32.totalorder %s17, 1
      %s3817 = scalar_select %p3816, %s17, 1
      %p3818 = scmp.lt.s32.totalorder %s18, 0
      %s3819 = scalar_select %p3818, %s18, 0
      %s3820 = smul.addr %s3817, 12
      %s3821 = sadd.s32 %s3819, %s3820
      %s3822 = smul.addr %s3821, 8
      %s3823 = scalar_lea.vmem %s2, %s3822
      // Predicated region
      $region29: #{conv3d_full_pallas.1} parent=27 // pred_check
        %p3824 = pneg %p94
      $region30: #{conv3d_full_pallas.1} parent=27 // pred_check_branch
        %3826 = sbr.rel (%p3824) target = $region32
      $region31: #{conv3d_full_pallas.1} parent=27 // pred_region
        _
      $region32: #{conv3d_full_pallas.1} parent=27 // pred_fallthru
        _
    $region28: #{conv3d_full_pallas.1} parent=5 // pred_fallthru
      _
    %p3827 = scmp.le.s32.totalorder 2, %s8
    // Predicated region
    $region33: #{conv3d_full_pallas.1} parent=5 // pred_check
      %p3828 = pneg %p3827
    $region34: #{conv3d_full_pallas.1} parent=5 // pred_check_branch
      %3830 = sbr.rel (%p3828) target = $region36
    $region35: #{conv3d_full_pallas.1} parent=5 // pred_region
      %s3831 = ssub.s32 %s8, 2
      // Predicated region
      $region37: #{conv3d_full_pallas.1} parent=35 // pred_check
        %p3832 = pneg %p100
      $region38: #{conv3d_full_pallas.1} parent=35 // pred_check_branch
        %3834 = sbr.rel (%p3832) target = $region40
      $region39: #{conv3d_full_pallas.1} parent=35 // pred_region
        %p3835 = scmp.lt.s32.totalorder %s19, 1
        %s3836 = scalar_select %p3835, %s19, 1
        %p3837 = scmp.lt.s32.totalorder %s20, 0
        %s3838 = scalar_select %p3837, %s20, 0
        %s3839 = smul.addr %s3836, 12
        %s3840 = sadd.s32 %s3838, %s3839
        %s3841 = smul.addr %s3840, 8
        %s3842 = scalar_lea.vmem %s2, %s3841
      $region40: #{conv3d_full_pallas.1} parent=35 // pred_fallthru
        _
    $region36: #{conv3d_full_pallas.1} parent=5 // pred_fallthru
      _
  $region6: #{conv3d_full_pallas.1} parent=0 // loop_footer
    %s12 = sadd.s32 1, %s8
  $region7: #{conv3d_full_pallas.1} parent=0 // loop_footer_branch
    %7 = sbr.rel target = $region3
  $region8: #{conv3d_full_pallas.1} parent=0 // loop_exit
    _

</llo_original>
